<compile_context>
chip_gen: v5e
topology: v5e:2x2
jax: 0.10.0
libtpu: 0.0.40
codegen_flags: <defaults>
</compile_context>

<pallas_src>
import jax
import jax.numpy as jnp
from jax.experimental import pallas as pl
from jax.experimental.pallas import tpu as pltpu


_LAYER_DIMS = [(400, 1000)] + [(1000, 1000)] * 4 + [(1000, 4)]

_P = 1024       # padded hidden feature width (1000 -> 1024)
_K0P = 512      # padded input feature width (400 -> 512)
_NOUT_P = 128   # padded output feature width (4 -> 128, one full lane width)


def _round_up(x, m):
    return ((x + m - 1) // m) * m


def _fused_mlp_kernel(x_ref, w0_ref, b0_ref, wh_ref, bh_ref, wl_ref, bl_ref,
                      o_ref, h_ref):
    """One grid step per 1000x1000 hidden layer.

    Resident inputs (constant index_map, fetched once): x, first-layer weight/bias,
    last-layer weight/bias, all hidden biases.  Streamed per step: one 2 MiB bf16
    hidden-layer weight block (auto double-buffered so layer l+1 prefetches while
    layer l computes).  h_ref (VMEM scratch, f32) carries the activation across steps.
    """
    layer = pl.program_id(0)
    last = pl.num_programs(0) - 1

    # Grid step 0 also applies the (resident) input layer: h = relu(x @ W0 + b0).
    @pl.when(layer == 0)
    def _():
        y0 = jnp.dot(x_ref[...], w0_ref[...],
                     preferred_element_type=jnp.float32) + b0_ref[...]
        h_ref[...] = jnp.maximum(y0, 0.0)

    # Hidden layer `layer`: bf16 x bf16 MXU matmul, f32 accumulate, f32 bias, ReLU.
    y = jnp.dot(h_ref[...].astype(jnp.bfloat16), wh_ref[0],
                preferred_element_type=jnp.float32) + bh_ref[layer]
    h_ref[...] = jnp.maximum(y, 0.0)

    # Last grid step also applies the (resident) output layer: no ReLU.
    @pl.when(layer == last)
    def _():
        o = jnp.dot(h_ref[...].astype(jnp.bfloat16), wl_ref[...],
                    preferred_element_type=jnp.float32) + bl_ref[...]
        o_ref[...] = o.astype(o_ref.dtype)


def init_inverse_params(key):
    """Deterministic synthetic init (uniform, like torch.nn.Linear default).

    Weights are (in_features, out_features) so the forward computes x @ W + b.
    """
    params = []
    for (fan_in, fan_out) in _LAYER_DIMS:
        key, kw, kb = jax.random.split(key, 3)
        bound = 1.0 / jnp.sqrt(fan_in)
        w = jax.random.uniform(kw, (fan_in, fan_out), jnp.float32, -bound, bound)
        b = jax.random.uniform(kb, (fan_out,), jnp.float32, -bound, bound)
        params.append((w, b))
    return params


def pack_inverse_params(params):
    """Pad / stack / quantize the layer params ONCE into the kernel's layout.

    Zero padding is exact (also in bf16): padded input features hit zero weight rows,
    padded output columns get 0 + 0 bias, ReLU(0) == 0, and those zeros feed the zero
    rows of the next layer.  The final padded output columns are sliced off after the
    kernel.  Weights are bf16 (halves HBM traffic); biases stay f32.
    """
    (w0, b0), hidden, (wl, bl) = params[0], params[1:-1], params[-1]

    k0, n0 = w0.shape
    w0p = jnp.pad(w0, ((0, _K0P - k0), (0, _P - n0))).astype(jnp.bfloat16)
    b0p = jnp.pad(b0, (0, _P - n0)).reshape(1, _P)

    whs, bhs = [], []
    for (w, b) in hidden:
        k, n = w.shape
        whs.append(jnp.pad(w, ((0, _P - k), (0, _P - n))).astype(jnp.bfloat16))
        bhs.append(jnp.pad(b, (0, _P - n)).reshape(1, _P))
    whp = jnp.stack(whs)   # (4, P, P) bf16, streamed one layer per grid step
    bhp = jnp.stack(bhs)   # (4, 1, P) f32, fully resident

    kl, nl = wl.shape
    wlp = jnp.pad(wl, ((0, _P - kl), (0, _NOUT_P - nl))).astype(jnp.bfloat16)
    blp = jnp.pad(bl, (0, _NOUT_P - nl)).reshape(1, _NOUT_P)

    return dict(w0=w0p, b0=b0p, wh=whp, bh=bhp, wl=wlp, bl=blp)


def inverse_forward(packed, x, d_out):
    """Fused Pallas forward. x: (batch, 400) f32; returns (batch, d_out) f32."""
    M, K = x.shape
    assert K <= _K0P
    Mp = _round_up(M, 8)                       # sublane alignment for the activation
    xp = jnp.pad(x, ((0, Mp - M), (0, _K0P - K))).astype(jnp.bfloat16)

    n_hidden = packed["wh"].shape[0]

    out = pl.pallas_call(
        _fused_mlp_kernel,
        out_shape=jax.ShapeDtypeStruct((Mp, _NOUT_P), jnp.float32),
        grid_spec=pltpu.PrefetchScalarGridSpec(
            num_scalar_prefetch=0,
            grid=(n_hidden,),
            in_specs=[
                pl.BlockSpec((Mp, _K0P), lambda l: (0, 0)),       # x          (resident)
                pl.BlockSpec((_K0P, _P), lambda l: (0, 0)),       # W0         (resident, 1 MiB)
                pl.BlockSpec((1, _P), lambda l: (0, 0)),          # b0         (resident)
                pl.BlockSpec((1, _P, _P), lambda l: (l, 0, 0)),   # hidden W   (streamed, 2 MiB/step)
                pl.BlockSpec((n_hidden, 1, _P), lambda l: (0, 0, 0)),  # hidden b (resident)
                pl.BlockSpec((_P, _NOUT_P), lambda l: (0, 0)),    # W_last     (resident, 256 KiB)
                pl.BlockSpec((1, _NOUT_P), lambda l: (0, 0)),     # b_last     (resident)
            ],
            out_specs=pl.BlockSpec((Mp, _NOUT_P), lambda l: (0, 0)),  # resident, flushed once
            scratch_shapes=[pltpu.VMEM((Mp, _P), jnp.float32)],       # activation carry
        ),
        compiler_params=pltpu.CompilerParams(
            # The layer axis carries the activation -> strictly sequential.
            dimension_semantics=("arbitrary",),
            # ~5.5 MiB live (2 MiB streamed-weight double buffer + ~1.3 MiB resident
            # edge-layer weights + small activation/bias buffers).
            vmem_limit_bytes=32 << 20,
        ),
    )(xp, packed["w0"], packed["b0"], packed["wh"], packed["bh"],
      packed["wl"], packed["bl"])

    return out[:M, :d_out]


def inverse_forward_ref(params, x):
    """Pure-JAX f32 reference (module semantics)."""
    h = x
    n_layers = len(params)
    for idx, (w, b) in enumerate(params):
        h = h @ w + b
        if idx < n_layers - 1:
            h = jnp.maximum(h, 0.0)
    return h


def inverse_forward_quantized_ref(params, x):
    """Reference that mirrors the kernel's numerics (bf16 operands, f32 accumulate)."""
    h = x.astype(jnp.float32)
    n_layers = len(params)
    for idx, (w, b) in enumerate(params):
        y = jnp.dot(h.astype(jnp.bfloat16), w.astype(jnp.bfloat16),
                    preferred_element_type=jnp.float32) + b
        h = jnp.maximum(y, 0.0) if idx < n_layers - 1 else y
    return h


if __name__ == "__main__":
    key = jax.random.PRNGKey(0)
    key, kx = jax.random.split(key)

    batch = 8
    x = jax.random.normal(kx, (batch, 400), jnp.float32)

    params = init_inverse_params(key)
    packed = pack_inverse_params(params)
    d_out = _LAYER_DIMS[-1][1]

    out = jax.block_until_ready(inverse_forward(packed, x, d_out))
    assert out.shape == (batch, d_out), out.shape

    # Tight check against a reference with the kernel's bf16-weight numerics.
    ref_q = jax.block_until_ready(inverse_forward_quantized_ref(params, x))
    err_q = float(jnp.max(jnp.abs(out - ref_q)))
    assert jnp.allclose(out, ref_q, atol=1e-3, rtol=1e-3), err_q

    # Loose check against the full-f32 module semantics (bf16 weight quantization error).
    ref_f32 = jax.block_until_ready(inverse_forward_ref(params, x))
    err_f32 = float(jnp.max(jnp.abs(out - ref_f32)))
    assert jnp.allclose(out, ref_f32, atol=2e-2, rtol=2e-2), err_f32

    print("KERNEL_OK")
</pallas_src>

<mosaic_0001>
module attributes {stable_mosaic.version = 11 : i64} {
  func.func @_fused_mlp_kernel(%arg0: i32, %arg1: memref<8x512xbf16, #tpu.memory_space<vmem>>, %arg2: memref<512x1024xbf16, #tpu.memory_space<vmem>>, %arg3: memref<1x1024xf32, #tpu.memory_space<vmem>>, %arg4: memref<1x1024x1024xbf16, #tpu.memory_space<vmem>>, %arg5: memref<4x1x1024xf32, #tpu.memory_space<vmem>>, %arg6: memref<1024x128xbf16, #tpu.memory_space<vmem>>, %arg7: memref<1x128xf32, #tpu.memory_space<vmem>>, %arg8: memref<8x128xf32, #tpu.memory_space<vmem>>, %arg9: memref<8x1024xf32, #tpu.memory_space<vmem>>) attributes {dimension_semantics = [#tpu.dimension_semantics<arbitrary>], iteration_bounds = array<i64: 4>, scalar_prefetch = 0 : i64, scratch_operands = 1 : i64, tpu.core_type = #tpu.core_type<tc>, window_params = [{pipeline_mode = #tpu.pipeline_mode<synchronous>, transform_indices = @transform_0, window_bounds = array<i64: 8, 512>}, {pipeline_mode = #tpu.pipeline_mode<synchronous>, transform_indices = @transform_1, window_bounds = array<i64: 512, 1024>}, {pipeline_mode = #tpu.pipeline_mode<synchronous>, transform_indices = @transform_2, window_bounds = array<i64: 1, 1024>}, {transform_indices = @transform_3, window_bounds = array<i64: 1, 1024, 1024>}, {pipeline_mode = #tpu.pipeline_mode<synchronous>, transform_indices = @transform_4, window_bounds = array<i64: 4, 1, 1024>}, {pipeline_mode = #tpu.pipeline_mode<synchronous>, transform_indices = @transform_5, window_bounds = array<i64: 1024, 128>}, {pipeline_mode = #tpu.pipeline_mode<synchronous>, transform_indices = @transform_6, window_bounds = array<i64: 1, 128>}, {pipeline_mode = #tpu.pipeline_mode<synchronous>, transform_indices = @transform_7, window_bounds = array<i64: 8, 128>}]} {
    %c0_i32 = arith.constant 0 : i32
    %0 = arith.cmpi eq, %arg0, %c0_i32 : i32
    %1 = arith.extui %0 : i1 to i32
    %c0_i32_0 = arith.constant 0 : i32
    %2 = arith.cmpi ne, %1, %c0_i32_0 : i32
    scf.if %2 {
      %c0_11 = arith.constant 0 : index
      %c0_12 = arith.constant 0 : index
      %19 = vector.load %arg1[%c0_11, %c0_12] : memref<8x512xbf16, #tpu.memory_space<vmem>>, vector<8x512xbf16>
      %c0_13 = arith.constant 0 : index
      %c0_14 = arith.constant 0 : index
      %20 = vector.load %arg2[%c0_13, %c0_14] : memref<512x1024xbf16, #tpu.memory_space<vmem>>, vector<512x1024xbf16>
      %cst_15 = arith.constant dense<0.000000e+00> : vector<8x1024xf32>
      %21 = tpu.matmul %19, %20, %cst_15 {dimension_numbers = #tpu.dot_dimension_numbers<[1], [0], [0], [1], [0, 0, 1, 1], [], []>} : vector<8x512xbf16>, vector<512x1024xbf16>, vector<8x1024xf32> -> vector<8x1024xf32>
      %c0_16 = arith.constant 0 : index
      %c0_17 = arith.constant 0 : index
      %22 = vector.load %arg3[%c0_16, %c0_17] : memref<1x1024xf32, #tpu.memory_space<vmem>>, vector<1x1024xf32>
      %23 = vector.broadcast %22 : vector<1x1024xf32> to vector<8x1024xf32>
      %24 = arith.addf %21, %23 : vector<8x1024xf32>
      %cst_18 = arith.constant 0.000000e+00 : f32
      %25 = vector.broadcast %cst_18 : f32 to vector<8x1024xf32>
      %26 = arith.maximumf %24, %25 : vector<8x1024xf32>
      %c0_19 = arith.constant 0 : index
      %c0_20 = arith.constant 0 : index
      %27 = vector.load %arg9[%c0_19, %c0_20] : memref<8x1024xf32, #tpu.memory_space<vmem>>, vector<8x1024xf32>
      tpu.vector_store %arg9[%c0_19, %c0_20], %26 {strides = array<i32>} : memref<8x1024xf32, #tpu.memory_space<vmem>>, vector<8x1024xf32>,
    } else {
    }
    %c0 = arith.constant 0 : index
    %c0_1 = arith.constant 0 : index
    %3 = vector.load %arg9[%c0, %c0_1] : memref<8x1024xf32, #tpu.memory_space<vmem>>, vector<8x1024xf32>
    %4 = arith.truncf %3 : vector<8x1024xf32> to vector<8x1024xbf16>
    %c0_2 = arith.constant 0 : index
    %c0_3 = arith.constant 0 : index
    %c0_4 = arith.constant 0 : index
    %5 = vector.load %arg4[%c0_2, %c0_3, %c0_4] : memref<1x1024x1024xbf16, #tpu.memory_space<vmem>>, vector<1x1024x1024xbf16>
    %6 = vector.shape_cast %5 : vector<1x1024x1024xbf16> to vector<1024x1024xbf16>
    %cst = arith.constant dense<0.000000e+00> : vector<8x1024xf32>
    %7 = tpu.matmul %4, %6, %cst {dimension_numbers = #tpu.dot_dimension_numbers<[1], [0], [0], [1], [0, 0, 1, 1], [], []>} : vector<8x1024xbf16>, vector<1024x1024xbf16>, vector<8x1024xf32> -> vector<8x1024xf32>
    %8 = arith.index_cast %arg0 : i32 to index
    %c0_5 = arith.constant 0 : index
    %c0_6 = arith.constant 0 : index
    %9 = vector.load %arg5[%8, %c0_5, %c0_6] : memref<4x1x1024xf32, #tpu.memory_space<vmem>>, vector<1x1x1024xf32>
    %10 = vector.shape_cast %9 : vector<1x1x1024xf32> to vector<1x1024xf32>
    %11 = vector.broadcast %10 : vector<1x1024xf32> to vector<8x1024xf32>
    %12 = arith.addf %7, %11 : vector<8x1024xf32>
    %cst_7 = arith.constant 0.000000e+00 : f32
    %13 = vector.broadcast %cst_7 : f32 to vector<8x1024xf32>
    %14 = arith.maximumf %12, %13 : vector<8x1024xf32>
    %c0_8 = arith.constant 0 : index
    %c0_9 = arith.constant 0 : index
    %15 = vector.load %arg9[%c0_8, %c0_9] : memref<8x1024xf32, #tpu.memory_space<vmem>>, vector<8x1024xf32>
    tpu.vector_store %arg9[%c0_8, %c0_9], %14 {strides = array<i32>} : memref<8x1024xf32, #tpu.memory_space<vmem>>, vector<8x1024xf32>,
    %c3_i32 = arith.constant 3 : i32
    %16 = arith.cmpi eq, %arg0, %c3_i32 : i32
    %17 = arith.extui %16 : i1 to i32
    %c0_i32_10 = arith.constant 0 : i32
    %18 = arith.cmpi ne, %17, %c0_i32_10 : i32
    scf.if %18 {
      %c0_11 = arith.constant 0 : index
      %c0_12 = arith.constant 0 : index
      %19 = vector.load %arg9[%c0_11, %c0_12] : memref<8x1024xf32, #tpu.memory_space<vmem>>, vector<8x1024xf32>
      %20 = arith.truncf %19 : vector<8x1024xf32> to vector<8x1024xbf16>
      %c0_13 = arith.constant 0 : index
      %c0_14 = arith.constant 0 : index
      %21 = vector.load %arg6[%c0_13, %c0_14] : memref<1024x128xbf16, #tpu.memory_space<vmem>>, vector<1024x128xbf16>
      %cst_15 = arith.constant dense<0.000000e+00> : vector<8x128xf32>
      %22 = tpu.matmul %20, %21, %cst_15 {dimension_numbers = #tpu.dot_dimension_numbers<[1], [0], [0], [1], [0, 0, 1, 1], [], []>} : vector<8x1024xbf16>, vector<1024x128xbf16>, vector<8x128xf32> -> vector<8x128xf32>
      %c0_16 = arith.constant 0 : index
      %c0_17 = arith.constant 0 : index
      %23 = vector.load %arg7[%c0_16, %c0_17] : memref<1x128xf32, #tpu.memory_space<vmem>>, vector<1x128xf32>
      %24 = vector.broadcast %23 : vector<1x128xf32> to vector<8x128xf32>
      %25 = arith.addf %22, %24 : vector<8x128xf32>
      %c0_18 = arith.constant 0 : index
      %c0_19 = arith.constant 0 : index
      %26 = vector.load %arg8[%c0_18, %c0_19] : memref<8x128xf32, #tpu.memory_space<vmem>>, vector<8x128xf32>
      tpu.vector_store %arg8[%c0_18, %c0_19], %25 {strides = array<i32>} : memref<8x128xf32, #tpu.memory_space<vmem>>, vector<8x128xf32>,
    } else {
    }
    return
  }
  func.func @transform_0(%arg0: i32) -> (i32, i32) {
    %c0_i32 = arith.constant 0 : i32
    %c0_i32_0 = arith.constant 0 : i32
    %c0_i32_1 = arith.constant 0 : i32
    return %c0_i32, %c0_i32_0 : i32, i32
  }
  func.func @transform_1(%arg0: i32) -> (i32, i32) {
    %c0_i32 = arith.constant 0 : i32
    %c0_i32_0 = arith.constant 0 : i32
    %c0_i32_1 = arith.constant 0 : i32
    return %c0_i32, %c0_i32_0 : i32, i32
  }
  func.func @transform_2(%arg0: i32) -> (i32, i32) {
    %c0_i32 = arith.constant 0 : i32
    %c0_i32_0 = arith.constant 0 : i32
    %c0_i32_1 = arith.constant 0 : i32
    return %c0_i32, %c0_i32_0 : i32, i32
  }
  func.func @transform_3(%arg0: i32) -> (i32, i32, i32) {
    %c0_i32 = arith.constant 0 : i32
    %c0_i32_0 = arith.constant 0 : i32
    %c0_i32_1 = arith.constant 0 : i32
    return %arg0, %c0_i32, %c0_i32_0 : i32, i32, i32
  }
  func.func @transform_4(%arg0: i32) -> (i32, i32, i32) {
    %c0_i32 = arith.constant 0 : i32
    %c0_i32_0 = arith.constant 0 : i32
    %c0_i32_1 = arith.constant 0 : i32
    %c0_i32_2 = arith.constant 0 : i32
    return %c0_i32, %c0_i32_0, %c0_i32_1 : i32, i32, i32
  }
  func.func @transform_5(%arg0: i32) -> (i32, i32) {
    %c0_i32 = arith.constant 0 : i32
    %c0_i32_0 = arith.constant 0 : i32
    %c0_i32_1 = arith.constant 0 : i32
    return %c0_i32, %c0_i32_0 : i32, i32
  }
  func.func @transform_6(%arg0: i32) -> (i32, i32) {
    %c0_i32 = arith.constant 0 : i32
    %c0_i32_0 = arith.constant 0 : i32
    %c0_i32_1 = arith.constant 0 : i32
    return %c0_i32, %c0_i32_0 : i32, i32
  }
  func.func @transform_7(%arg0: i32) -> (i32, i32) {
    %c0_i32 = arith.constant 0 : i32
    %c0_i32_0 = arith.constant 0 : i32
    %c0_i32_1 = arith.constant 0 : i32
    return %c0_i32, %c0_i32_0 : i32, i32
  }
}

</mosaic_0001>

<llo_original>
// kernel: tpu_custom_call.1
$region0: #{tpu_custom_call.1}
  #allocation0 [shape = 'u32[]', space=smem, size = 0x4, offset = 0x4, fixed_abs, tag = 'smem constant byte address 0x4 - core index']
  #allocation1 [shape = 'u32[72,128]{1,0:T(1,128)}', space=vmem, size = 0x9000, scoped, tag = 'internal scratch']
  #allocation2 [shape = 'f32[8,1024]{1,0:T(8,128)}', space=vmem, size = 0x8000, scoped, tag = 'scratch operand']
  %s0 = inlined_call_operand.hbm [shape: bf16[8,512], index: 0, kind: input, shape index: {}]
  %s1 = inlined_call_operand.hbm [shape: bf16[512,1024], index: 1, kind: input, shape index: {}]
  %s2 = inlined_call_operand.hbm [shape: f32[1,1024], index: 2, kind: input, shape index: {}]
  %s3 = inlined_call_operand.hbm [shape: bf16[4,1024,1024], index: 3, kind: input, shape index: {}]
  %s4 = inlined_call_operand.hbm [shape: f32[4,1,1024], index: 4, kind: input, shape index: {}]
  %s5 = inlined_call_operand.hbm [shape: bf16[1024,128], index: 5, kind: input, shape index: {}]
  %s6 = inlined_call_operand.hbm [shape: f32[1,128], index: 6, kind: input, shape index: {}]
  %s7 = inlined_call_operand.hbm [shape: f32[8,128], index: 7, kind: output, shape index: {}]
  %s8 = sld [smem:[#allocation0]]
  $region97: #{tpu_custom_call.1} parent=0
    _
  %s10 = ssub.s32 1, %s8
  %s11 = scalar_select 0, %s10, %s8
  $region1: #{tpu_custom_call.1} parent=0
    #allocation3 [shape = 'u8[8192]{0}', space=vmem, size = 0x2000, scoped, tag = 'input window, operand 0, single buffered']
    #allocation4 [shape = 's32[2]{0}', space=sflag, size = 0x8, scoped, tag = 'scoped memory for tpu_custom_call.1']
    #allocation5 [shape = 's32[2]{0}', space=sflag, size = 0x8, scoped, tag = 'scoped memory for tpu_custom_call.1']
    #allocation6 [shape = 'u8[1048576]{0}', space=vmem, size = 0x100000, scoped, tag = 'input window, operand 1, single buffered']
    #allocation7 [shape = 's32[1]{0}', space=sflag, size = 0x4, scoped, tag = 'scoped memory for tpu_custom_call.1']
    #allocation8 [shape = 'u8[4096]{0}', space=vmem, size = 0x1000, scoped, tag = 'input window, operand 2, single buffered']
    #allocation9 [shape = 'u8[4194304]{0}', space=vmem, size = 0x400000, scoped, tag = 'input window, operand 3']
    #allocation10 [shape = 's32[2]{0}', space=sflag, size = 0x8, scoped, tag = 'scoped memory for tpu_custom_call.1']
    #allocation11 [shape = 'u8[16384]{0}', space=vmem, size = 0x4000, scoped, tag = 'input window, operand 4, single buffered']
    #allocation12 [shape = 'u8[262144]{0}', space=vmem, size = 0x40000, scoped, tag = 'input window, operand 5, single buffered']
    #allocation13 [shape = 's32[1]{0}', space=sflag, size = 0x4, scoped, tag = 'scoped memory for tpu_custom_call.1']
    #allocation14 [shape = 'u8[512]{0}', space=vmem, size = 0x400, scoped, tag = 'input window, operand 6, single buffered']
    #allocation15 [shape = 'u8[4096]{0}', space=vmem, size = 0x1000, scoped, tag = 'output window, operand 0, single buffered']
    %12 = vsyncpa [#allocation4], 0
    %13 = vsyncpa [#allocation7], 0
    %14 = vsyncpa [#allocation10], 0
    %s15 = scalar_lea.sflag [#allocation10], 1
    %16 = vsyncpa %s15, 0
    %17 = vsyncpa [#allocation13], 0
    %18 = vsyncpa [#allocation5], 0
    loop: start=0, step=1, limit=6
    $region2: #{tpu_custom_call.1} parent=1 // loop_pre_header
      _
    $region3: #{tpu_custom_call.1} parent=1 // loop_header
      %s20 = sphi 0, %s24
      %p21 = scmp.ge.s32.totalorder %s20, 6
      %s28 = sphi 0, %s28
      %s30 = sphi 0, %s28
      %s31 = sphi 0, %s30
      %s45 = sphi 0, %s31
      %s49 = sphi 0, %s49
      %s51 = sphi 0, %s49
      %s52 = sphi 0, %s51
      %s66 = sphi 0, %s52
      %s70 = sphi 0, %s70
      %s72 = sphi 0, %s70
      %s73 = sphi 0, %s72
      %s87 = sphi 0, %s73
      %s93 = sphi 0, %s95
      %s96 = sphi 0, %s93
      %s97 = sphi 0, %s96
      %s113 = sphi 0, %s97
      %s117 = sphi 0, %s117
      %s119 = sphi 0, %s117
      %s120 = sphi 0, %s119
      %s134 = sphi 0, %s120
      %s138 = sphi 0, %s138
      %s140 = sphi 0, %s138
      %s141 = sphi 0, %s140
      %s155 = sphi 0, %s141
      %s159 = sphi 0, %s159
      %s161 = sphi 0, %s159
      %s162 = sphi 0, %s161
      %s176 = sphi 0, %s162
      %s180 = sphi 0, %s180
      %s182 = sphi 0, %s180
      %s183 = sphi 0, %s182
      %s197 = sphi 0, %s183
    $region4: #{tpu_custom_call.1} parent=1 // loop_header_branch
      %23 = sbr.rel (%p21) target = $region8
    $region5: #{tpu_custom_call.1} parent=1 // loop_body
      %s25 = ssub.s32 %s20, 1
      %s26 = ssub.s32 %s20, 2
      %s27 = sadd.s32 %s20, 1
      %s29 = sadd.s32 %s28, 1
      %p32 = scmp.eq.s32.totalorder %s20, 3
      %p33 = scmp.ne.s32.totalorder %s28, %s30
      %p34 = scmp.eq.s32.totalorder %s20, 0
      %p35 = por %p33, %p34
      %p36 = scmp.ne.s32.totalorder %s28, %s30
      %p37 = scmp.eq.s32.totalorder %s25, 3
      %p38 = por %p36, %p37
      %p39 = scmp.ne.s32.totalorder %s30, %s31
      %p40 = scmp.eq.s32.totalorder %s25, 0
      %p41 = por %p39, %p40
      %p42 = scmp.ne.s32.totalorder %s30, %s31
      %p43 = scmp.eq.s32.totalorder %s26, 3
      %p44 = por %p42, %p43
      %p46 = scmp.ne.s32.totalorder %s31, %s45
      %p47 = scmp.eq.s32.totalorder %s26, 0
      %p48 = por %p46, %p47
      %s50 = sadd.s32 %s49, 1
      %p53 = scmp.eq.s32.totalorder %s20, 3
      %p54 = scmp.ne.s32.totalorder %s49, %s51
      %p55 = scmp.eq.s32.totalorder %s20, 0
      %p56 = por %p54, %p55
      %p57 = scmp.ne.s32.totalorder %s49, %s51
      %p58 = scmp.eq.s32.totalorder %s25, 3
      %p59 = por %p57, %p58
      %p60 = scmp.ne.s32.totalorder %s51, %s52
      %p61 = scmp.eq.s32.totalorder %s25, 0
      %p62 = por %p60, %p61
      %p63 = scmp.ne.s32.totalorder %s51, %s52
      %p64 = scmp.eq.s32.totalorder %s26, 3
      %p65 = por %p63, %p64
      %p67 = scmp.ne.s32.totalorder %s52, %s66
      %p68 = scmp.eq.s32.totalorder %s26, 0
      %p69 = por %p67, %p68
      %s71 = sadd.s32 %s70, 1
      %p74 = scmp.eq.s32.totalorder %s20, 3
      %p75 = scmp.ne.s32.totalorder %s70, %s72
      %p76 = scmp.eq.s32.totalorder %s20, 0
      %p77 = por %p75, %p76
      %p78 = scmp.ne.s32.totalorder %s70, %s72
      %p79 = scmp.eq.s32.totalorder %s25, 3
      %p80 = por %p78, %p79
      %p81 = scmp.ne.s32.totalorder %s72, %s73
      %p82 = scmp.eq.s32.totalorder %s25, 0
      %p83 = por %p81, %p82
      %p84 = scmp.ne.s32.totalorder %s72, %s73
      %p85 = scmp.eq.s32.totalorder %s26, 3
      %p86 = por %p84, %p85
      %p88 = scmp.ne.s32.totalorder %s73, %s87
      %p89 = scmp.eq.s32.totalorder %s26, 0
      %p90 = por %p88, %p89
      %s91 = ssub.s32 %s20, %s27
      %p92 = scmp.eq.s32.totalorder %s91, 0
      %s94 = sadd.s32 %s93, 1
      %s95 = scalar_select %p92, %s93, %s94
      %p98 = pneg %p92
      %p99 = scmp.eq.s32.totalorder %s20, 3
      %p100 = por %p98, %p99
      %p101 = scmp.ne.s32.totalorder %s93, %s96
      %p102 = scmp.eq.s32.totalorder %s20, 0
      %p103 = por %p101, %p102
      %p104 = scmp.ne.s32.totalorder %s93, %s96
      %p105 = scmp.eq.s32.totalorder %s25, 3
      %p106 = por %p104, %p105
      %p107 = scmp.ne.s32.totalorder %s96, %s97
      %p108 = scmp.eq.s32.totalorder %s25, 0
      %p109 = por %p107, %p108
      %p110 = scmp.ne.s32.totalorder %s96, %s97
      %p111 = scmp.eq.s32.totalorder %s26, 3
      %p112 = por %p110, %p111
      %p114 = scmp.ne.s32.totalorder %s97, %s113
      %p115 = scmp.eq.s32.totalorder %s26, 0
      %p116 = por %p114, %p115
      %s118 = sadd.s32 %s117, 1
      %p121 = scmp.eq.s32.totalorder %s20, 3
      %p122 = scmp.ne.s32.totalorder %s117, %s119
      %p123 = scmp.eq.s32.totalorder %s20, 0
      %p124 = por %p122, %p123
      %p125 = scmp.ne.s32.totalorder %s117, %s119
      %p126 = scmp.eq.s32.totalorder %s25, 3
      %p127 = por %p125, %p126
      %p128 = scmp.ne.s32.totalorder %s119, %s120
      %p129 = scmp.eq.s32.totalorder %s25, 0
      %p130 = por %p128, %p129
      %p131 = scmp.ne.s32.totalorder %s119, %s120
      %p132 = scmp.eq.s32.totalorder %s26, 3
      %p133 = por %p131, %p132
      %p135 = scmp.ne.s32.totalorder %s120, %s134
      %p136 = scmp.eq.s32.totalorder %s26, 0
      %p137 = por %p135, %p136
      %s139 = sadd.s32 %s138, 1
      %p142 = scmp.eq.s32.totalorder %s20, 3
      %p143 = scmp.ne.s32.totalorder %s138, %s140
      %p144 = scmp.eq.s32.totalorder %s20, 0
      %p145 = por %p143, %p144
      %p146 = scmp.ne.s32.totalorder %s138, %s140
      %p147 = scmp.eq.s32.totalorder %s25, 3
      %p148 = por %p146, %p147
      %p149 = scmp.ne.s32.totalorder %s140, %s141
      %p150 = scmp.eq.s32.totalorder %s25, 0
      %p151 = por %p149, %p150
      %p152 = scmp.ne.s32.totalorder %s140, %s141
      %p153 = scmp.eq.s32.totalorder %s26, 3
      %p154 = por %p152, %p153
      %p156 = scmp.ne.s32.totalorder %s141, %s155
      %p157 = scmp.eq.s32.totalorder %s26, 0
      %p158 = por %p156, %p157
      %s160 = sadd.s32 %s159, 1
      %p163 = scmp.eq.s32.totalorder %s20, 3
      %p164 = scmp.ne.s32.totalorder %s159, %s161
      %p165 = scmp.eq.s32.totalorder %s20, 0
      %p166 = por %p164, %p165
      %p167 = scmp.ne.s32.totalorder %s159, %s161
      %p168 = scmp.eq.s32.totalorder %s25, 3
      %p169 = por %p167, %p168
      %p170 = scmp.ne.s32.totalorder %s161, %s162
      %p171 = scmp.eq.s32.totalorder %s25, 0
      %p172 = por %p170, %p171
      %p173 = scmp.ne.s32.totalorder %s161, %s162
      %p174 = scmp.eq.s32.totalorder %s26, 3
      %p175 = por %p173, %p174
      %p177 = scmp.ne.s32.totalorder %s162, %s176
      %p178 = scmp.eq.s32.totalorder %s26, 0
      %p179 = por %p177, %p178
      %s181 = sadd.s32 %s180, 1
      %p184 = scmp.eq.s32.totalorder %s20, 3
      %p185 = scmp.ne.s32.totalorder %s180, %s182
      %p186 = scmp.eq.s32.totalorder %s20, 0
      %p187 = por %p185, %p186
      %p188 = scmp.ne.s32.totalorder %s180, %s182
      %p189 = scmp.eq.s32.totalorder %s25, 3
      %p190 = por %p188, %p189
      %p191 = scmp.ne.s32.totalorder %s182, %s183
      %p192 = scmp.eq.s32.totalorder %s25, 0
      %p193 = por %p191, %p192
      %p194 = scmp.ne.s32.totalorder %s182, %s183
      %p195 = scmp.eq.s32.totalorder %s26, 3
      %p196 = por %p194, %p195
      %p198 = scmp.ne.s32.totalorder %s183, %s197
      %p199 = scmp.eq.s32.totalorder %s26, 0
      %p200 = por %p198, %p199
      %p201 = scmp.le.s32.totalorder 1, %s20
      %p202 = scmp.lt.s32.totalorder %s20, 5
      %p203 = pnand %p201, %p202
      %p204 = pneg %p203
      // Predicated region
      $region9: #{tpu_custom_call.1} parent=5 // pred_check
        _
      $region10: #{tpu_custom_call.1} parent=5 // pred_check_branch
        %206 = sbr.rel (%p203) target = $region12
      $region11: #{tpu_custom_call.1} parent=5 // pred_region
        %s207 = ssub.s32 %s20, 1
        // Predicated region
        $region13: #{tpu_custom_call.1} parent=11 // pred_check
          %p208 = pneg %p41
        $region14: #{tpu_custom_call.1} parent=11 // pred_check_branch
          %210 = sbr.rel (%p208) target = $region16
        $region15: #{tpu_custom_call.1} parent=11 // pred_region
          %212 = vsyncadd [#allocation4], 0
          %s214 = sshll.u32 %s0, 4
          %s215 = int_to_ptr.hbm [resolvable:$true] %s214
          %s216 = sshll.u32 [#allocation3], 4
          %s217 = int_to_ptr.vmem [resolvable:$true] %s216
          %219 = dma.hbm_to_vmem [thread:$0]  %s215, 256, %s217, [#allocation4]
        $region16: #{tpu_custom_call.1} parent=11 // pred_fallthru
          _
        // Predicated region
        $region17: #{tpu_custom_call.1} parent=11 // pred_check
          %p220 = pneg %p62
        $region18: #{tpu_custom_call.1} parent=11 // pred_check_branch
          %222 = sbr.rel (%p220) target = $region20
        $region19: #{tpu_custom_call.1} parent=11 // pred_region
          %224 = vsyncadd [#allocation7], 0
          %s225 = sshll.u32 %s1, 4
          %s226 = int_to_ptr.hbm [resolvable:$true] %s225
          %s227 = sshll.u32 [#allocation6], 4
          %s228 = int_to_ptr.vmem [resolvable:$true] %s227
          %233 = dma.hbm_to_vmem [thread:$0]  %s226, 32768, %s228, [#allocation7], 512, 512, 32
        $region20: #{tpu_custom_call.1} parent=11 // pred_fallthru
          _
        // Predicated region
        $region21: #{tpu_custom_call.1} parent=11 // pred_check
          %p234 = pneg %p83
        $region22: #{tpu_custom_call.1} parent=11 // pred_check_branch
          %236 = sbr.rel (%p234) target = $region24
        $region23: #{tpu_custom_call.1} parent=11 // pred_region
          %238 = vsyncadd [#allocation7], 0
          %s240 = sshll.u32 %s2, 4
          %s241 = int_to_ptr.hbm [resolvable:$true] %s240
          %s242 = sshll.u32 [#allocation8], 4
          %s243 = int_to_ptr.vmem [resolvable:$true] %s242
          %245 = dma.hbm_to_vmem [thread:$0]  %s241, 128, %s243, [#allocation7]
        $region24: #{tpu_custom_call.1} parent=11 // pred_fallthru
          _
        // Predicated region
        $region25: #{tpu_custom_call.1} parent=11 // pred_check
          %p246 = pneg %p130
        $region26: #{tpu_custom_call.1} parent=11 // pred_check_branch
          %248 = sbr.rel (%p246) target = $region28
        $region27: #{tpu_custom_call.1} parent=11 // pred_region
          %250 = vsyncadd [#allocation10], 0
          %s251 = sshll.u32 %s4, 4
          %s252 = int_to_ptr.hbm [resolvable:$true] %s251
          %s253 = sshll.u32 [#allocation11], 4
          %s254 = int_to_ptr.vmem [resolvable:$true] %s253
          %259 = dma.hbm_to_vmem [thread:$0]  %s252, 512, %s254, [#allocation10], 128, 128, 8
        $region28: #{tpu_custom_call.1} parent=11 // pred_fallthru
          _
        // Predicated region
        $region29: #{tpu_custom_call.1} parent=11 // pred_check
          %p260 = pneg %p151
        $region30: #{tpu_custom_call.1} parent=11 // pred_check_branch
          %262 = sbr.rel (%p260) target = $region32
        $region31: #{tpu_custom_call.1} parent=11 // pred_region
          %264 = vsyncadd [#allocation13], 0
          %s265 = sshll.u32 %s5, 4
          %s266 = int_to_ptr.hbm [resolvable:$true] %s265
          %s267 = sshll.u32 [#allocation12], 4
          %s268 = int_to_ptr.vmem [resolvable:$true] %s267
          %273 = dma.hbm_to_vmem [thread:$0]  %s266, 8192, %s268, [#allocation13], 64, 64, 4
        $region32: #{tpu_custom_call.1} parent=11 // pred_fallthru
          _
        // Predicated region
        $region33: #{tpu_custom_call.1} parent=11 // pred_check
          %p274 = pneg %p172
        $region34: #{tpu_custom_call.1} parent=11 // pred_check_branch
          %276 = sbr.rel (%p274) target = $region36
        $region35: #{tpu_custom_call.1} parent=11 // pred_region
          %278 = vsyncadd [#allocation13], 0
          %s280 = sshll.u32 %s6, 4
          %s281 = int_to_ptr.hbm [resolvable:$true] %s280
          %s282 = sshll.u32 [#allocation14], 4
          %s283 = int_to_ptr.vmem [resolvable:$true] %s282
          %285 = dma.hbm_to_vmem [thread:$0]  %s281, 16, %s283, [#allocation13]
        $region36: #{tpu_custom_call.1} parent=11 // pred_fallthru
          _
      $region12: #{tpu_custom_call.1} parent=5 // pred_fallthru
        _
      %p286 = scmp.lt.s32.totalorder %s20, 4
      // Predicated region
      $region37: #{tpu_custom_call.1} parent=5 // pred_check
        %p287 = pneg %p286
      $region38: #{tpu_custom_call.1} parent=5 // pred_check_branch
        %289 = sbr.rel (%p287) target = $region40
      $region39: #{tpu_custom_call.1} parent=5 // pred_region
        // Predicated region
        $region41: #{tpu_custom_call.1} parent=39 // pred_check
          %p290 = pneg %p103
        $region42: #{tpu_custom_call.1} parent=39 // pred_check_branch
          %292 = sbr.rel (%p290) target = $region44
        $region43: #{tpu_custom_call.1} parent=39 // pred_region
          %s293 = sand.u32 %s20, 1
          %s294 = scalar_lea.sflag [#allocation10], %s293
          %s295 = sand.u32 %s93, 1
          %s296 = smul.addr %s295, 4096
          %s297 = scalar_lea.vmem [#allocation9], %s296
          %299 = vsyncadd %s294, 0
          %s300 = smul.addr %s20, 1024
          %s301 = smul.addr %s300, 4
          %s302 = scalar_lea.hbm %s3, %s301
          %s303 = sshll.u32 %s302, 4
          %s304 = int_to_ptr.hbm [resolvable:$true] %s303
          %s305 = sshll.u32 %s297, 4
          %s306 = int_to_ptr.vmem [resolvable:$true] %s305
          %311 = dma.hbm_to_vmem [thread:$0]  %s304, 65536, %s306, %s294, 512, 512, 32
        $region44: #{tpu_custom_call.1} parent=39 // pred_fallthru
          _
      $region40: #{tpu_custom_call.1} parent=5 // pred_fallthru
        _
      %p312 = scmp.le.s32.totalorder 1, %s20
      %p313 = scmp.lt.s32.totalorder %s20, 5
      %p314 = pnand %p312, %p313
      %p315 = pneg %p314
      // Predicated region
      $region45: #{tpu_custom_call.1} parent=5 // pred_check
        _
      $region46: #{tpu_custom_call.1} parent=5 // pred_check_branch
        %317 = sbr.rel (%p314) target = $region48
      $region47: #{tpu_custom_call.1} parent=5 // pred_region
        %s318 = ssub.s32 %s20, 1
        // Predicated region
        $region49: #{tpu_custom_call.1} parent=47 // pred_check
          %p319 = pneg %p41
        $region50: #{tpu_custom_call.1} parent=47 // pred_check_branch
          %321 = sbr.rel (%p319) target = $region52
        $region51: #{tpu_custom_call.1} parent=47 // pred_region
          %323 = dma.done [#allocation4], 256
        $region52: #{tpu_custom_call.1} parent=47 // pred_fallthru
          _
        // Predicated region
        $region53: #{tpu_custom_call.1} parent=47 // pred_check
          %p324 = pneg %p62
        $region54: #{tpu_custom_call.1} parent=47 // pred_check_branch
          %326 = sbr.rel (%p324) target = $region56
        $region55: #{tpu_custom_call.1} parent=47 // pred_region
          %328 = dma.done [#allocation7], 32768
        $region56: #{tpu_custom_call.1} parent=47 // pred_fallthru
          _
        // Predicated region
        $region57: #{tpu_custom_call.1} parent=47 // pred_check
          %p329 = pneg %p83
        $region58: #{tpu_custom_call.1} parent=47 // pred_check_branch
          %331 = sbr.rel (%p329) target = $region60
        $region59: #{tpu_custom_call.1} parent=47 // pred_region
          %333 = dma.done [#allocation7], 128
        $region60: #{tpu_custom_call.1} parent=47 // pred_fallthru
          _
        %s334 = sand.u32 %s25, 1
        %s335 = scalar_lea.sflag [#allocation10], %s334
        %s336 = sand.u32 %s96, 1
        %s337 = smul.addr %s336, 4096
        %s338 = scalar_lea.vmem [#allocation9], %s337
        // Predicated region
        $region61: #{tpu_custom_call.1} parent=47 // pred_check
          %p339 = pneg %p109
        $region62: #{tpu_custom_call.1} parent=47 // pred_check_branch
          %341 = sbr.rel (%p339) target = $region64
        $region63: #{tpu_custom_call.1} parent=47 // pred_region
          %343 = dma.done %s335, 65536
        $region64: #{tpu_custom_call.1} parent=47 // pred_fallthru
          _
        // Predicated region
        $region65: #{tpu_custom_call.1} parent=47 // pred_check
          %p344 = pneg %p130
        $region66: #{tpu_custom_call.1} parent=47 // pred_check_branch
          %346 = sbr.rel (%p344) target = $region68
        $region67: #{tpu_custom_call.1} parent=47 // pred_region
          %348 = dma.done [#allocation10], 512
        $region68: #{tpu_custom_call.1} parent=47 // pred_fallthru
          _
        // Predicated region
        $region69: #{tpu_custom_call.1} parent=47 // pred_check
          %p349 = pneg %p151
        $region70: #{tpu_custom_call.1} parent=47 // pred_check_branch
          %351 = sbr.rel (%p349) target = $region72
        $region71: #{tpu_custom_call.1} parent=47 // pred_region
          %353 = dma.done [#allocation13], 8192
        $region72: #{tpu_custom_call.1} parent=47 // pred_fallthru
          _
        // Predicated region
        $region73: #{tpu_custom_call.1} parent=47 // pred_check
          %p354 = pneg %p172
        $region74: #{tpu_custom_call.1} parent=47 // pred_check_branch
          %356 = sbr.rel (%p354) target = $region76
        $region75: #{tpu_custom_call.1} parent=47 // pred_region
          %358 = dma.done [#allocation13], 16
        $region76: #{tpu_custom_call.1} parent=47 // pred_fallthru
          _
        %p359 = pneg %p41
        %p360 = pneg %p38
        %p361 = pneg %p62
        %p362 = pneg %p59
        %p363 = pneg %p83
        %p364 = pneg %p80
        %s365 = sand.u32 %s25, 1
        %s366 = scalar_lea.sflag [#allocation10], %s365
        %s367 = sand.u32 %s96, 1
        %s368 = smul.addr %s367, 4096
        %s369 = scalar_lea.vmem [#allocation9], %s368
        %p370 = pneg %p109
        %p371 = pneg %p106
        %p372 = pneg %p130
        %p373 = pneg %p127
        %p374 = pneg %p151
        %p375 = pneg %p148
        %p376 = pneg %p172
        %p377 = pneg %p169
        %p378 = pneg %p193
        %p379 = pneg %p190
        %p380 = scmp.eq.s32.totalorder %s25, 0
        // Predicated region
        $region77: #{tpu_custom_call.1} parent=47 // pred_check
          %p381 = pneg %p380
        $region78: #{tpu_custom_call.1} parent=47 // pred_check_branch
          %383 = sbr.rel (%p381) target = $region80
        $region79: #{tpu_custom_call.1} parent=47 // pred_region
          %v384 = vld [vmem:[#allocation3] sm:$0xff]
          %v385 = vld [vmem:[#allocation3 + $0x8] sm:$0xff]
          %v386 = vld [vmem:[#allocation6] sm:$0xff]
          %v387 = vld [vmem:[#allocation6 + $0x8] sm:$0xff]
          %v388 = vld [vmem:[#allocation6 + $0x10] sm:$0xff]
          %v389 = vld [vmem:[#allocation6 + $0x18] sm:$0xff]
          %v390 = vld [vmem:[#allocation6 + $0x20] sm:$0xff]
          %v391 = vld [vmem:[#allocation6 + $0x28] sm:$0xff]
          %v392 = vld [vmem:[#allocation6 + $0x30] sm:$0xff]
          %v393 = vld [vmem:[#allocation6 + $0x38] sm:$0xff]
          %v394 = vld [vmem:[#allocation6 + $0x40] sm:$0xff]
          %v395 = vld [vmem:[#allocation6 + $0x48] sm:$0xff]
          %v396 = vld [vmem:[#allocation6 + $0x50] sm:$0xff]
          %v397 = vld [vmem:[#allocation6 + $0x58] sm:$0xff]
          %v398 = vld [vmem:[#allocation6 + $0x60] sm:$0xff]
          %v399 = vld [vmem:[#allocation6 + $0x68] sm:$0xff]
          %v400 = vld [vmem:[#allocation6 + $0x70] sm:$0xff]
          %v401 = vld [vmem:[#allocation6 + $0x78] sm:$0xff]
          %v402 = vld [vmem:[#allocation6 + $0x80] sm:$0xff]
          %v403 = vld [vmem:[#allocation6 + $0x88] sm:$0xff]
          %v404 = vld [vmem:[#allocation6 + $0x90] sm:$0xff]
          %v405 = vld [vmem:[#allocation6 + $0x98] sm:$0xff]
          %v406 = vld [vmem:[#allocation6 + $0xa0] sm:$0xff]
          %v407 = vld [vmem:[#allocation6 + $0xa8] sm:$0xff]
          %v408 = vld [vmem:[#allocation6 + $0xb0] sm:$0xff]
          %v409 = vld [vmem:[#allocation6 + $0xb8] sm:$0xff]
          %v410 = vld [vmem:[#allocation6 + $0xc0] sm:$0xff]
          %v411 = vld [vmem:[#allocation6 + $0xc8] sm:$0xff]
          %v412 = vld [vmem:[#allocation6 + $0xd0] sm:$0xff]
          %v413 = vld [vmem:[#allocation6 + $0xd8] sm:$0xff]
          %v414 = vld [vmem:[#allocation6 + $0xe0] sm:$0xff]
          %v415 = vld [vmem:[#allocation6 + $0xe8] sm:$0xff]
          %v416 = vld [vmem:[#allocation6 + $0xf0] sm:$0xff]
          %v417 = vld [vmem:[#allocation6 + $0xf8] sm:$0xff]
          %v418 = vld [vmem:[#allocation6 + $0x100] sm:$0xff]
          %v419 = vld [vmem:[#allocation6 + $0x108] sm:$0xff]
          %v420 = vld [vmem:[#allocation6 + $0x110] sm:$0xff]
          %v421 = vld [vmem:[#allocation6 + $0x118] sm:$0xff]
          %v422 = vld [vmem:[#allocation6 + $0x120] sm:$0xff]
          %v423 = vld [vmem:[#allocation6 + $0x128] sm:$0xff]
          %v424 = vld [vmem:[#allocation6 + $0x130] sm:$0xff]
          %v425 = vld [vmem:[#allocation6 + $0x138] sm:$0xff]
          %v426 = vld [vmem:[#allocation6 + $0x140] sm:$0xff]
          %v427 = vld [vmem:[#allocation6 + $0x148] sm:$0xff]
          %v428 = vld [vmem:[#allocation6 + $0x150] sm:$0xff]
          %v429 = vld [vmem:[#allocation6 + $0x158] sm:$0xff]
          %v430 = vld [vmem:[#allocation6 + $0x160] sm:$0xff]
          %v431 = vld [vmem:[#allocation6 + $0x168] sm:$0xff]
          %v432 = vld [vmem:[#allocation6 + $0x170] sm:$0xff]
          %v433 = vld [vmem:[#allocation6 + $0x178] sm:$0xff]
          %v434 = vld [vmem:[#allocation6 + $0x180] sm:$0xff]
          %v435 = vld [vmem:[#allocation6 + $0x188] sm:$0xff]
          %v436 = vld [vmem:[#allocation6 + $0x190] sm:$0xff]
          %v437 = vld [vmem:[#allocation6 + $0x198] sm:$0xff]
          %v438 = vld [vmem:[#allocation6 + $0x1a0] sm:$0xff]
          %v439 = vld [vmem:[#allocation6 + $0x1a8] sm:$0xff]
          %v440 = vld [vmem:[#allocation6 + $0x1b0] sm:$0xff]
          %v441 = vld [vmem:[#allocation6 + $0x1b8] sm:$0xff]
          %v442 = vld [vmem:[#allocation6 + $0x1c0] sm:$0xff]
          %v443 = vld [vmem:[#allocation6 + $0x1c8] sm:$0xff]
          %v444 = vld [vmem:[#allocation6 + $0x1d0] sm:$0xff]
          %v445 = vld [vmem:[#allocation6 + $0x1d8] sm:$0xff]
          %v446 = vld [vmem:[#allocation6 + $0x1e0] sm:$0xff]
          %v447 = vld [vmem:[#allocation6 + $0x1e8] sm:$0xff]
          %v448 = vld [vmem:[#allocation6 + $0x1f0] sm:$0xff]
          %v449 = vld [vmem:[#allocation6 + $0x1f8] sm:$0xff]
          %v450 = vld [vmem:[#allocation6 + $0x200] sm:$0xff]
          %v451 = vld [vmem:[#allocation6 + $0x208] sm:$0xff]
          %v452 = vld [vmem:[#allocation6 + $0x210] sm:$0xff]
          %v453 = vld [vmem:[#allocation6 + $0x218] sm:$0xff]
          %v454 = vld [vmem:[#allocation6 + $0x220] sm:$0xff]
          %v455 = vld [vmem:[#allocation6 + $0x228] sm:$0xff]
          %v456 = vld [vmem:[#allocation6 + $0x230] sm:$0xff]
          %v457 = vld [vmem:[#allocation6 + $0x238] sm:$0xff]
          %v458 = vld [vmem:[#allocation6 + $0x240] sm:$0xff]
          %v459 = vld [vmem:[#allocation6 + $0x248] sm:$0xff]
          %v460 = vld [vmem:[#allocation6 + $0x250] sm:$0xff]
          %v461 = vld [vmem:[#allocation6 + $0x258] sm:$0xff]
          %v462 = vld [vmem:[#allocation6 + $0x260] sm:$0xff]
          %v463 = vld [vmem:[#allocation6 + $0x268] sm:$0xff]
          %v464 = vld [vmem:[#allocation6 + $0x270] sm:$0xff]
          %v465 = vld [vmem:[#allocation6 + $0x278] sm:$0xff]
          %v466 = vld [vmem:[#allocation6 + $0x280] sm:$0xff]
          %v467 = vld [vmem:[#allocation6 + $0x288] sm:$0xff]
          %v468 = vld [vmem:[#allocation6 + $0x290] sm:$0xff]
          %v469 = vld [vmem:[#allocation6 + $0x298] sm:$0xff]
          %v470 = vld [vmem:[#allocation6 + $0x2a0] sm:$0xff]
          %v471 = vld [vmem:[#allocation6 + $0x2a8] sm:$0xff]
          %v472 = vld [vmem:[#allocation6 + $0x2b0] sm:$0xff]
          %v473 = vld [vmem:[#allocation6 + $0x2b8] sm:$0xff]
          %v474 = vld [vmem:[#allocation6 + $0x2c0] sm:$0xff]
          %v475 = vld [vmem:[#allocation6 + $0x2c8] sm:$0xff]
          %v476 = vld [vmem:[#allocation6 + $0x2d0] sm:$0xff]
          %v477 = vld [vmem:[#allocation6 + $0x2d8] sm:$0xff]
          %v478 = vld [vmem:[#allocation6 + $0x2e0] sm:$0xff]
          %v479 = vld [vmem:[#allocation6 + $0x2e8] sm:$0xff]
          %v480 = vld [vmem:[#allocation6 + $0x2f0] sm:$0xff]
          %v481 = vld [vmem:[#allocation6 + $0x2f8] sm:$0xff]
          %v482 = vld [vmem:[#allocation6 + $0x300] sm:$0xff]
          %v483 = vld [vmem:[#allocation6 + $0x308] sm:$0xff]
          %v484 = vld [vmem:[#allocation6 + $0x310] sm:$0xff]
          %v485 = vld [vmem:[#allocation6 + $0x318] sm:$0xff]
          %v486 = vld [vmem:[#allocation6 + $0x320] sm:$0xff]
          %v487 = vld [vmem:[#allocation6 + $0x328] sm:$0xff]
          %v488 = vld [vmem:[#allocation6 + $0x330] sm:$0xff]
          %v489 = vld [vmem:[#allocation6 + $0x338] sm:$0xff]
          %v490 = vld [vmem:[#allocation6 + $0x340] sm:$0xff]
          %v491 = vld [vmem:[#allocation6 + $0x348] sm:$0xff]
          %v492 = vld [vmem:[#allocation6 + $0x350] sm:$0xff]
          %v493 = vld [vmem:[#allocation6 + $0x358] sm:$0xff]
          %v494 = vld [vmem:[#allocation6 + $0x360] sm:$0xff]
          %v495 = vld [vmem:[#allocation6 + $0x368] sm:$0xff]
          %v496 = vld [vmem:[#allocation6 + $0x370] sm:$0xff]
          %v497 = vld [vmem:[#allocation6 + $0x378] sm:$0xff]
          %v498 = vld [vmem:[#allocation6 + $0x380] sm:$0xff]
          %v499 = vld [vmem:[#allocation6 + $0x388] sm:$0xff]
          %v500 = vld [vmem:[#allocation6 + $0x390] sm:$0xff]
          %v501 = vld [vmem:[#allocation6 + $0x398] sm:$0xff]
          %v502 = vld [vmem:[#allocation6 + $0x3a0] sm:$0xff]
          %v503 = vld [vmem:[#allocation6 + $0x3a8] sm:$0xff]
          %v504 = vld [vmem:[#allocation6 + $0x3b0] sm:$0xff]
          %v505 = vld [vmem:[#allocation6 + $0x3b8] sm:$0xff]
          %v506 = vld [vmem:[#allocation6 + $0x3c0] sm:$0xff]
          %v507 = vld [vmem:[#allocation6 + $0x3c8] sm:$0xff]
          %v508 = vld [vmem:[#allocation6 + $0x3d0] sm:$0xff]
          %v509 = vld [vmem:[#allocation6 + $0x3d8] sm:$0xff]
          %v510 = vld [vmem:[#allocation6 + $0x3e0] sm:$0xff]
          %v511 = vld [vmem:[#allocation6 + $0x3e8] sm:$0xff]
          %v512 = vld [vmem:[#allocation6 + $0x3f0] sm:$0xff]
          %v513 = vld [vmem:[#allocation6 + $0x3f8] sm:$0xff]
          %v514 = vld [vmem:[#allocation6 + $0x400] sm:$0xff]
          %v515 = vld [vmem:[#allocation6 + $0x408] sm:$0xff]
          %v516 = vld [vmem:[#allocation6 + $0x410] sm:$0xff]
          %v517 = vld [vmem:[#allocation6 + $0x418] sm:$0xff]
          %v518 = vld [vmem:[#allocation6 + $0x420] sm:$0xff]
          %v519 = vld [vmem:[#allocation6 + $0x428] sm:$0xff]
          %v520 = vld [vmem:[#allocation6 + $0x430] sm:$0xff]
          %v521 = vld [vmem:[#allocation6 + $0x438] sm:$0xff]
          %v522 = vld [vmem:[#allocation6 + $0x440] sm:$0xff]
          %v523 = vld [vmem:[#allocation6 + $0x448] sm:$0xff]
          %v524 = vld [vmem:[#allocation6 + $0x450] sm:$0xff]
          %v525 = vld [vmem:[#allocation6 + $0x458] sm:$0xff]
          %v526 = vld [vmem:[#allocation6 + $0x460] sm:$0xff]
          %v527 = vld [vmem:[#allocation6 + $0x468] sm:$0xff]
          %v528 = vld [vmem:[#allocation6 + $0x470] sm:$0xff]
          %v529 = vld [vmem:[#allocation6 + $0x478] sm:$0xff]
          %v530 = vld [vmem:[#allocation6 + $0x480] sm:$0xff]
          %v531 = vld [vmem:[#allocation6 + $0x488] sm:$0xff]
          %v532 = vld [vmem:[#allocation6 + $0x490] sm:$0xff]
          %v533 = vld [vmem:[#allocation6 + $0x498] sm:$0xff]
          %v534 = vld [vmem:[#allocation6 + $0x4a0] sm:$0xff]
          %v535 = vld [vmem:[#allocation6 + $0x4a8] sm:$0xff]
          %v536 = vld [vmem:[#allocation6 + $0x4b0] sm:$0xff]
          %v537 = vld [vmem:[#allocation6 + $0x4b8] sm:$0xff]
          %v538 = vld [vmem:[#allocation6 + $0x4c0] sm:$0xff]
          %v539 = vld [vmem:[#allocation6 + $0x4c8] sm:$0xff]
          %v540 = vld [vmem:[#allocation6 + $0x4d0] sm:$0xff]
          %v541 = vld [vmem:[#allocation6 + $0x4d8] sm:$0xff]
          %v542 = vld [vmem:[#allocation6 + $0x4e0] sm:$0xff]
          %v543 = vld [vmem:[#allocation6 + $0x4e8] sm:$0xff]
          %v544 = vld [vmem:[#allocation6 + $0x4f0] sm:$0xff]
          %v545 = vld [vmem:[#allocation6 + $0x4f8] sm:$0xff]
          %v546 = vld [vmem:[#allocation6 + $0x500] sm:$0xff]
          %v547 = vld [vmem:[#allocation6 + $0x508] sm:$0xff]
          %v548 = vld [vmem:[#allocation6 + $0x510] sm:$0xff]
          %v549 = vld [vmem:[#allocation6 + $0x518] sm:$0xff]
          %v550 = vld [vmem:[#allocation6 + $0x520] sm:$0xff]
          %v551 = vld [vmem:[#allocation6 + $0x528] sm:$0xff]
          %v552 = vld [vmem:[#allocation6 + $0x530] sm:$0xff]
          %v553 = vld [vmem:[#allocation6 + $0x538] sm:$0xff]
          %v554 = vld [vmem:[#allocation6 + $0x540] sm:$0xff]
          %v555 = vld [vmem:[#allocation6 + $0x548] sm:$0xff]
          %v556 = vld [vmem:[#allocation6 + $0x550] sm:$0xff]
          %v557 = vld [vmem:[#allocation6 + $0x558] sm:$0xff]
          %v558 = vld [vmem:[#allocation6 + $0x560] sm:$0xff]
          %v559 = vld [vmem:[#allocation6 + $0x568] sm:$0xff]
          %v560 = vld [vmem:[#allocation6 + $0x570] sm:$0xff]
          %v561 = vld [vmem:[#allocation6 + $0x578] sm:$0xff]
          %v562 = vld [vmem:[#allocation6 + $0x580] sm:$0xff]
          %v563 = vld [vmem:[#allocation6 + $0x588] sm:$0xff]
          %v564 = vld [vmem:[#allocation6 + $0x590] sm:$0xff]
          %v565 = vld [vmem:[#allocation6 + $0x598] sm:$0xff]
          %v566 = vld [vmem:[#allocation6 + $0x5a0] sm:$0xff]
          %v567 = vld [vmem:[#allocation6 + $0x5a8] sm:$0xff]
          %v568 = vld [vmem:[#allocation6 + $0x5b0] sm:$0xff]
          %v569 = vld [vmem:[#allocation6 + $0x5b8] sm:$0xff]
          %v570 = vld [vmem:[#allocation6 + $0x5c0] sm:$0xff]
          %v571 = vld [vmem:[#allocation6 + $0x5c8] sm:$0xff]
          %v572 = vld [vmem:[#allocation6 + $0x5d0] sm:$0xff]
          %v573 = vld [vmem:[#allocation6 + $0x5d8] sm:$0xff]
          %v574 = vld [vmem:[#allocation6 + $0x5e0] sm:$0xff]
          %v575 = vld [vmem:[#allocation6 + $0x5e8] sm:$0xff]
          %v576 = vld [vmem:[#allocation6 + $0x5f0] sm:$0xff]
          %v577 = vld [vmem:[#allocation6 + $0x5f8] sm:$0xff]
          %v578 = vld [vmem:[#allocation6 + $0x600] sm:$0xff]
          %v579 = vld [vmem:[#allocation6 + $0x608] sm:$0xff]
          %v580 = vld [vmem:[#allocation6 + $0x610] sm:$0xff]
          %v581 = vld [vmem:[#allocation6 + $0x618] sm:$0xff]
          %v582 = vld [vmem:[#allocation6 + $0x620] sm:$0xff]
          %v583 = vld [vmem:[#allocation6 + $0x628] sm:$0xff]
          %v584 = vld [vmem:[#allocation6 + $0x630] sm:$0xff]
          %v585 = vld [vmem:[#allocation6 + $0x638] sm:$0xff]
          %v586 = vld [vmem:[#allocation6 + $0x640] sm:$0xff]
          %v587 = vld [vmem:[#allocation6 + $0x648] sm:$0xff]
          %v588 = vld [vmem:[#allocation6 + $0x650] sm:$0xff]
          %v589 = vld [vmem:[#allocation6 + $0x658] sm:$0xff]
          %v590 = vld [vmem:[#allocation6 + $0x660] sm:$0xff]
          %v591 = vld [vmem:[#allocation6 + $0x668] sm:$0xff]
          %v592 = vld [vmem:[#allocation6 + $0x670] sm:$0xff]
          %v593 = vld [vmem:[#allocation6 + $0x678] sm:$0xff]
          %v594 = vld [vmem:[#allocation6 + $0x680] sm:$0xff]
          %v595 = vld [vmem:[#allocation6 + $0x688] sm:$0xff]
          %v596 = vld [vmem:[#allocation6 + $0x690] sm:$0xff]
          %v597 = vld [vmem:[#allocation6 + $0x698] sm:$0xff]
          %v598 = vld [vmem:[#allocation6 + $0x6a0] sm:$0xff]
          %v599 = vld [vmem:[#allocation6 + $0x6a8] sm:$0xff]
          %v600 = vld [vmem:[#allocation6 + $0x6b0] sm:$0xff]
          %v601 = vld [vmem:[#allocation6 + $0x6b8] sm:$0xff]
          %v602 = vld [vmem:[#allocation6 + $0x6c0] sm:$0xff]
          %v603 = vld [vmem:[#allocation6 + $0x6c8] sm:$0xff]
          %v604 = vld [vmem:[#allocation6 + $0x6d0] sm:$0xff]
          %v605 = vld [vmem:[#allocation6 + $0x6d8] sm:$0xff]
          %v606 = vld [vmem:[#allocation6 + $0x6e0] sm:$0xff]
          %v607 = vld [vmem:[#allocation6 + $0x6e8] sm:$0xff]
          %v608 = vld [vmem:[#allocation6 + $0x6f0] sm:$0xff]
          %v609 = vld [vmem:[#allocation6 + $0x6f8] sm:$0xff]
          %v610 = vld [vmem:[#allocation6 + $0x700] sm:$0xff]
          %v611 = vld [vmem:[#allocation6 + $0x708] sm:$0xff]
          %v612 = vld [vmem:[#allocation6 + $0x710] sm:$0xff]
          %v613 = vld [vmem:[#allocation6 + $0x718] sm:$0xff]
          %v614 = vld [vmem:[#allocation6 + $0x720] sm:$0xff]
          %v615 = vld [vmem:[#allocation6 + $0x728] sm:$0xff]
          %v616 = vld [vmem:[#allocation6 + $0x730] sm:$0xff]
          %v617 = vld [vmem:[#allocation6 + $0x738] sm:$0xff]
          %v618 = vld [vmem:[#allocation6 + $0x740] sm:$0xff]
          %v619 = vld [vmem:[#allocation6 + $0x748] sm:$0xff]
          %v620 = vld [vmem:[#allocation6 + $0x750] sm:$0xff]
          %v621 = vld [vmem:[#allocation6 + $0x758] sm:$0xff]
          %v622 = vld [vmem:[#allocation6 + $0x760] sm:$0xff]
          %v623 = vld [vmem:[#allocation6 + $0x768] sm:$0xff]
          %v624 = vld [vmem:[#allocation6 + $0x770] sm:$0xff]
          %v625 = vld [vmem:[#allocation6 + $0x778] sm:$0xff]
          %v626 = vld [vmem:[#allocation6 + $0x780] sm:$0xff]
          %v627 = vld [vmem:[#allocation6 + $0x788] sm:$0xff]
          %v628 = vld [vmem:[#allocation6 + $0x790] sm:$0xff]
          %v629 = vld [vmem:[#allocation6 + $0x798] sm:$0xff]
          %v630 = vld [vmem:[#allocation6 + $0x7a0] sm:$0xff]
          %v631 = vld [vmem:[#allocation6 + $0x7a8] sm:$0xff]
          %v632 = vld [vmem:[#allocation6 + $0x7b0] sm:$0xff]
          %v633 = vld [vmem:[#allocation6 + $0x7b8] sm:$0xff]
          %v634 = vld [vmem:[#allocation6 + $0x7c0] sm:$0xff]
          %v635 = vld [vmem:[#allocation6 + $0x7c8] sm:$0xff]
          %v636 = vld [vmem:[#allocation6 + $0x7d0] sm:$0xff]
          %v637 = vld [vmem:[#allocation6 + $0x7d8] sm:$0xff]
          %v638 = vld [vmem:[#allocation6 + $0x7e0] sm:$0xff]
          %v639 = vld [vmem:[#allocation6 + $0x7e8] sm:$0xff]
          %v640 = vld [vmem:[#allocation6 + $0x7f0] sm:$0xff]
          %v641 = vld [vmem:[#allocation6 + $0x7f8] sm:$0xff]
          %v642 = vld [vmem:[#allocation8] sm:$0xff]
          %v644 = vperm.slane %v642, 0
          %v645 = vperm.slane %v642, 1
          %v646 = vperm.slane %v642, 2
          %v647 = vperm.slane %v642, 3
          %v648 = vperm.slane %v642, 4
          %v649 = vperm.slane %v642, 5
          %v650 = vperm.slane %v642, 6
          %v651 = vperm.slane %v642, 7
          %v662 = vunpack.c.l.b16 %v384
          %v663 = vunpack.c.h.b16 %v384
          %v664 = vunpack.c.l.b16 %v385
          %v665 = vunpack.c.h.b16 %v385
          %v666 = vpack.c.b16 %v662, %v662
          %v667 = vpack.c.b16 %v663, %v663
          %v668 = vpack.c.b16 %v664, %v664
          %v669 = vpack.c.b16 %v665, %v665
          %v930 = vunpack.c.l.b16 %v386
          %v931 = vunpack.c.h.b16 %v386
          %v932 = vunpack.c.l.b16 %v387
          %v933 = vunpack.c.h.b16 %v387
          %v934 = vunpack.c.l.b16 %v388
          %v935 = vunpack.c.h.b16 %v388
          %v936 = vunpack.c.l.b16 %v389
          %v937 = vunpack.c.h.b16 %v389
          %v938 = vunpack.c.l.b16 %v390
          %v939 = vunpack.c.h.b16 %v390
          %v940 = vunpack.c.l.b16 %v391
          %v941 = vunpack.c.h.b16 %v391
          %v942 = vunpack.c.l.b16 %v392
          %v943 = vunpack.c.h.b16 %v392
          %v944 = vunpack.c.l.b16 %v393
          %v945 = vunpack.c.h.b16 %v393
          %v946 = vunpack.c.l.b16 %v394
          %v947 = vunpack.c.h.b16 %v394
          %v948 = vunpack.c.l.b16 %v395
          %v949 = vunpack.c.h.b16 %v395
          %v950 = vunpack.c.l.b16 %v396
          %v951 = vunpack.c.h.b16 %v396
          %v952 = vunpack.c.l.b16 %v397
          %v953 = vunpack.c.h.b16 %v397
          %v954 = vunpack.c.l.b16 %v398
          %v955 = vunpack.c.h.b16 %v398
          %v956 = vunpack.c.l.b16 %v399
          %v957 = vunpack.c.h.b16 %v399
          %v958 = vunpack.c.l.b16 %v400
          %v959 = vunpack.c.h.b16 %v400
          %v960 = vunpack.c.l.b16 %v401
          %v961 = vunpack.c.h.b16 %v401
          %v962 = vunpack.c.l.b16 %v402
          %v963 = vunpack.c.h.b16 %v402
          %v964 = vunpack.c.l.b16 %v403
          %v965 = vunpack.c.h.b16 %v403
          %v966 = vunpack.c.l.b16 %v404
          %v967 = vunpack.c.h.b16 %v404
          %v968 = vunpack.c.l.b16 %v405
          %v969 = vunpack.c.h.b16 %v405
          %v970 = vunpack.c.l.b16 %v406
          %v971 = vunpack.c.h.b16 %v406
          %v972 = vunpack.c.l.b16 %v407
          %v973 = vunpack.c.h.b16 %v407
          %v974 = vunpack.c.l.b16 %v408
          %v975 = vunpack.c.h.b16 %v408
          %v976 = vunpack.c.l.b16 %v409
          %v977 = vunpack.c.h.b16 %v409
          %v978 = vunpack.c.l.b16 %v410
          %v979 = vunpack.c.h.b16 %v410
          %v980 = vunpack.c.l.b16 %v411
          %v981 = vunpack.c.h.b16 %v411
          %v982 = vunpack.c.l.b16 %v412
          %v983 = vunpack.c.h.b16 %v412
          %v984 = vunpack.c.l.b16 %v413
          %v985 = vunpack.c.h.b16 %v413
          %v986 = vunpack.c.l.b16 %v414
          %v987 = vunpack.c.h.b16 %v414
          %v988 = vunpack.c.l.b16 %v415
          %v989 = vunpack.c.h.b16 %v415
          %v990 = vunpack.c.l.b16 %v416
          %v991 = vunpack.c.h.b16 %v416
          %v992 = vunpack.c.l.b16 %v417
          %v993 = vunpack.c.h.b16 %v417
          %v994 = vunpack.c.l.b16 %v418
          %v995 = vunpack.c.h.b16 %v418
          %v996 = vunpack.c.l.b16 %v419
          %v997 = vunpack.c.h.b16 %v419
          %v998 = vunpack.c.l.b16 %v420
          %v999 = vunpack.c.h.b16 %v420
          %v1000 = vunpack.c.l.b16 %v421
          %v1001 = vunpack.c.h.b16 %v421
          %v1002 = vunpack.c.l.b16 %v422
          %v1003 = vunpack.c.h.b16 %v422
          %v1004 = vunpack.c.l.b16 %v423
          %v1005 = vunpack.c.h.b16 %v423
          %v1006 = vunpack.c.l.b16 %v424
          %v1007 = vunpack.c.h.b16 %v424
          %v1008 = vunpack.c.l.b16 %v425
          %v1009 = vunpack.c.h.b16 %v425
          %v1010 = vunpack.c.l.b16 %v426
          %v1011 = vunpack.c.h.b16 %v426
          %v1012 = vunpack.c.l.b16 %v427
          %v1013 = vunpack.c.h.b16 %v427
          %v1014 = vunpack.c.l.b16 %v428
          %v1015 = vunpack.c.h.b16 %v428
          %v1016 = vunpack.c.l.b16 %v429
          %v1017 = vunpack.c.h.b16 %v429
          %v1018 = vunpack.c.l.b16 %v430
          %v1019 = vunpack.c.h.b16 %v430
          %v1020 = vunpack.c.l.b16 %v431
          %v1021 = vunpack.c.h.b16 %v431
          %v1022 = vunpack.c.l.b16 %v432
          %v1023 = vunpack.c.h.b16 %v432
          %v1024 = vunpack.c.l.b16 %v433
          %v1025 = vunpack.c.h.b16 %v433
          %v1026 = vunpack.c.l.b16 %v434
          %v1027 = vunpack.c.h.b16 %v434
          %v1028 = vunpack.c.l.b16 %v435
          %v1029 = vunpack.c.h.b16 %v435
          %v1030 = vunpack.c.l.b16 %v436
          %v1031 = vunpack.c.h.b16 %v436
          %v1032 = vunpack.c.l.b16 %v437
          %v1033 = vunpack.c.h.b16 %v437
          %v1034 = vunpack.c.l.b16 %v438
          %v1035 = vunpack.c.h.b16 %v438
          %v1036 = vunpack.c.l.b16 %v439
          %v1037 = vunpack.c.h.b16 %v439
          %v1038 = vunpack.c.l.b16 %v440
          %v1039 = vunpack.c.h.b16 %v440
          %v1040 = vunpack.c.l.b16 %v441
          %v1041 = vunpack.c.h.b16 %v441
          %v1042 = vunpack.c.l.b16 %v442
          %v1043 = vunpack.c.h.b16 %v442
          %v1044 = vunpack.c.l.b16 %v443
          %v1045 = vunpack.c.h.b16 %v443
          %v1046 = vunpack.c.l.b16 %v444
          %v1047 = vunpack.c.h.b16 %v444
          %v1048 = vunpack.c.l.b16 %v445
          %v1049 = vunpack.c.h.b16 %v445
          %v1050 = vunpack.c.l.b16 %v446
          %v1051 = vunpack.c.h.b16 %v446
          %v1052 = vunpack.c.l.b16 %v447
          %v1053 = vunpack.c.h.b16 %v447
          %v1054 = vunpack.c.l.b16 %v448
          %v1055 = vunpack.c.h.b16 %v448
          %v1056 = vunpack.c.l.b16 %v449
          %v1057 = vunpack.c.h.b16 %v449
          %v1058 = vunpack.c.l.b16 %v450
          %v1059 = vunpack.c.h.b16 %v450
          %v1060 = vunpack.c.l.b16 %v451
          %v1061 = vunpack.c.h.b16 %v451
          %v1062 = vunpack.c.l.b16 %v452
          %v1063 = vunpack.c.h.b16 %v452
          %v1064 = vunpack.c.l.b16 %v453
          %v1065 = vunpack.c.h.b16 %v453
          %v1066 = vunpack.c.l.b16 %v454
          %v1067 = vunpack.c.h.b16 %v454
          %v1068 = vunpack.c.l.b16 %v455
          %v1069 = vunpack.c.h.b16 %v455
          %v1070 = vunpack.c.l.b16 %v456
          %v1071 = vunpack.c.h.b16 %v456
          %v1072 = vunpack.c.l.b16 %v457
          %v1073 = vunpack.c.h.b16 %v457
          %v1074 = vunpack.c.l.b16 %v458
          %v1075 = vunpack.c.h.b16 %v458
          %v1076 = vunpack.c.l.b16 %v459
          %v1077 = vunpack.c.h.b16 %v459
          %v1078 = vunpack.c.l.b16 %v460
          %v1079 = vunpack.c.h.b16 %v460
          %v1080 = vunpack.c.l.b16 %v461
          %v1081 = vunpack.c.h.b16 %v461
          %v1082 = vunpack.c.l.b16 %v462
          %v1083 = vunpack.c.h.b16 %v462
          %v1084 = vunpack.c.l.b16 %v463
          %v1085 = vunpack.c.h.b16 %v463
          %v1086 = vunpack.c.l.b16 %v464
          %v1087 = vunpack.c.h.b16 %v464
          %v1088 = vunpack.c.l.b16 %v465
          %v1089 = vunpack.c.h.b16 %v465
          %v1090 = vunpack.c.l.b16 %v466
          %v1091 = vunpack.c.h.b16 %v466
          %v1092 = vunpack.c.l.b16 %v467
          %v1093 = vunpack.c.h.b16 %v467
          %v1094 = vunpack.c.l.b16 %v468
          %v1095 = vunpack.c.h.b16 %v468
          %v1096 = vunpack.c.l.b16 %v469
          %v1097 = vunpack.c.h.b16 %v469
          %v1098 = vunpack.c.l.b16 %v470
          %v1099 = vunpack.c.h.b16 %v470
          %v1100 = vunpack.c.l.b16 %v471
          %v1101 = vunpack.c.h.b16 %v471
          %v1102 = vunpack.c.l.b16 %v472
          %v1103 = vunpack.c.h.b16 %v472
          %v1104 = vunpack.c.l.b16 %v473
          %v1105 = vunpack.c.h.b16 %v473
          %v1106 = vunpack.c.l.b16 %v474
          %v1107 = vunpack.c.h.b16 %v474
          %v1108 = vunpack.c.l.b16 %v475
          %v1109 = vunpack.c.h.b16 %v475
          %v1110 = vunpack.c.l.b16 %v476
          %v1111 = vunpack.c.h.b16 %v476
          %v1112 = vunpack.c.l.b16 %v477
          %v1113 = vunpack.c.h.b16 %v477
          %v1114 = vunpack.c.l.b16 %v478
          %v1115 = vunpack.c.h.b16 %v478
          %v1116 = vunpack.c.l.b16 %v479
          %v1117 = vunpack.c.h.b16 %v479
          %v1118 = vunpack.c.l.b16 %v480
          %v1119 = vunpack.c.h.b16 %v480
          %v1120 = vunpack.c.l.b16 %v481
          %v1121 = vunpack.c.h.b16 %v481
          %v1122 = vunpack.c.l.b16 %v482
          %v1123 = vunpack.c.h.b16 %v482
          %v1124 = vunpack.c.l.b16 %v483
          %v1125 = vunpack.c.h.b16 %v483
          %v1126 = vunpack.c.l.b16 %v484
          %v1127 = vunpack.c.h.b16 %v484
          %v1128 = vunpack.c.l.b16 %v485
          %v1129 = vunpack.c.h.b16 %v485
          %v1130 = vunpack.c.l.b16 %v486
          %v1131 = vunpack.c.h.b16 %v486
          %v1132 = vunpack.c.l.b16 %v487
          %v1133 = vunpack.c.h.b16 %v487
          %v1134 = vunpack.c.l.b16 %v488
          %v1135 = vunpack.c.h.b16 %v488
          %v1136 = vunpack.c.l.b16 %v489
          %v1137 = vunpack.c.h.b16 %v489
          %v1138 = vunpack.c.l.b16 %v490
          %v1139 = vunpack.c.h.b16 %v490
          %v1140 = vunpack.c.l.b16 %v491
          %v1141 = vunpack.c.h.b16 %v491
          %v1142 = vunpack.c.l.b16 %v492
          %v1143 = vunpack.c.h.b16 %v492
          %v1144 = vunpack.c.l.b16 %v493
          %v1145 = vunpack.c.h.b16 %v493
          %v1146 = vunpack.c.l.b16 %v494
          %v1147 = vunpack.c.h.b16 %v494
          %v1148 = vunpack.c.l.b16 %v495
          %v1149 = vunpack.c.h.b16 %v495
          %v1150 = vunpack.c.l.b16 %v496
          %v1151 = vunpack.c.h.b16 %v496
          %v1152 = vunpack.c.l.b16 %v497
          %v1153 = vunpack.c.h.b16 %v497
          %v1154 = vunpack.c.l.b16 %v498
          %v1155 = vunpack.c.h.b16 %v498
          %v1156 = vunpack.c.l.b16 %v499
          %v1157 = vunpack.c.h.b16 %v499
          %v1158 = vunpack.c.l.b16 %v500
          %v1159 = vunpack.c.h.b16 %v500
          %v1160 = vunpack.c.l.b16 %v501
          %v1161 = vunpack.c.h.b16 %v501
          %v1162 = vunpack.c.l.b16 %v502
          %v1163 = vunpack.c.h.b16 %v502
          %v1164 = vunpack.c.l.b16 %v503
          %v1165 = vunpack.c.h.b16 %v503
          %v1166 = vunpack.c.l.b16 %v504
          %v1167 = vunpack.c.h.b16 %v504
          %v1168 = vunpack.c.l.b16 %v505
          %v1169 = vunpack.c.h.b16 %v505
          %v1170 = vunpack.c.l.b16 %v506
          %v1171 = vunpack.c.h.b16 %v506
          %v1172 = vunpack.c.l.b16 %v507
          %v1173 = vunpack.c.h.b16 %v507
          %v1174 = vunpack.c.l.b16 %v508
          %v1175 = vunpack.c.h.b16 %v508
          %v1176 = vunpack.c.l.b16 %v509
          %v1177 = vunpack.c.h.b16 %v509
          %v1178 = vunpack.c.l.b16 %v510
          %v1179 = vunpack.c.h.b16 %v510
          %v1180 = vunpack.c.l.b16 %v511
          %v1181 = vunpack.c.h.b16 %v511
          %v1182 = vunpack.c.l.b16 %v512
          %v1183 = vunpack.c.h.b16 %v512
          %v1184 = vunpack.c.l.b16 %v513
          %v1185 = vunpack.c.h.b16 %v513
          %v1186 = vunpack.c.l.b16 %v514
          %v1187 = vunpack.c.h.b16 %v514
          %v1188 = vunpack.c.l.b16 %v515
          %v1189 = vunpack.c.h.b16 %v515
          %v1190 = vunpack.c.l.b16 %v516
          %v1191 = vunpack.c.h.b16 %v516
          %v1192 = vunpack.c.l.b16 %v517
          %v1193 = vunpack.c.h.b16 %v517
          %v1194 = vunpack.c.l.b16 %v518
          %v1195 = vunpack.c.h.b16 %v518
          %v1196 = vunpack.c.l.b16 %v519
          %v1197 = vunpack.c.h.b16 %v519
          %v1198 = vunpack.c.l.b16 %v520
          %v1199 = vunpack.c.h.b16 %v520
          %v1200 = vunpack.c.l.b16 %v521
          %v1201 = vunpack.c.h.b16 %v521
          %v1202 = vunpack.c.l.b16 %v522
          %v1203 = vunpack.c.h.b16 %v522
          %v1204 = vunpack.c.l.b16 %v523
          %v1205 = vunpack.c.h.b16 %v523
          %v1206 = vunpack.c.l.b16 %v524
          %v1207 = vunpack.c.h.b16 %v524
          %v1208 = vunpack.c.l.b16 %v525
          %v1209 = vunpack.c.h.b16 %v525
          %v1210 = vunpack.c.l.b16 %v526
          %v1211 = vunpack.c.h.b16 %v526
          %v1212 = vunpack.c.l.b16 %v527
          %v1213 = vunpack.c.h.b16 %v527
          %v1214 = vunpack.c.l.b16 %v528
          %v1215 = vunpack.c.h.b16 %v528
          %v1216 = vunpack.c.l.b16 %v529
          %v1217 = vunpack.c.h.b16 %v529
          %v1218 = vunpack.c.l.b16 %v530
          %v1219 = vunpack.c.h.b16 %v530
          %v1220 = vunpack.c.l.b16 %v531
          %v1221 = vunpack.c.h.b16 %v531
          %v1222 = vunpack.c.l.b16 %v532
          %v1223 = vunpack.c.h.b16 %v532
          %v1224 = vunpack.c.l.b16 %v533
          %v1225 = vunpack.c.h.b16 %v533
          %v1226 = vunpack.c.l.b16 %v534
          %v1227 = vunpack.c.h.b16 %v534
          %v1228 = vunpack.c.l.b16 %v535
          %v1229 = vunpack.c.h.b16 %v535
          %v1230 = vunpack.c.l.b16 %v536
          %v1231 = vunpack.c.h.b16 %v536
          %v1232 = vunpack.c.l.b16 %v537
          %v1233 = vunpack.c.h.b16 %v537
          %v1234 = vunpack.c.l.b16 %v538
          %v1235 = vunpack.c.h.b16 %v538
          %v1236 = vunpack.c.l.b16 %v539
          %v1237 = vunpack.c.h.b16 %v539
          %v1238 = vunpack.c.l.b16 %v540
          %v1239 = vunpack.c.h.b16 %v540
          %v1240 = vunpack.c.l.b16 %v541
          %v1241 = vunpack.c.h.b16 %v541
          %v1242 = vunpack.c.l.b16 %v542
          %v1243 = vunpack.c.h.b16 %v542
          %v1244 = vunpack.c.l.b16 %v543
          %v1245 = vunpack.c.h.b16 %v543
          %v1246 = vunpack.c.l.b16 %v544
          %v1247 = vunpack.c.h.b16 %v544
          %v1248 = vunpack.c.l.b16 %v545
          %v1249 = vunpack.c.h.b16 %v545
          %v1250 = vunpack.c.l.b16 %v546
          %v1251 = vunpack.c.h.b16 %v546
          %v1252 = vunpack.c.l.b16 %v547
          %v1253 = vunpack.c.h.b16 %v547
          %v1254 = vunpack.c.l.b16 %v548
          %v1255 = vunpack.c.h.b16 %v548
          %v1256 = vunpack.c.l.b16 %v549
          %v1257 = vunpack.c.h.b16 %v549
          %v1258 = vunpack.c.l.b16 %v550
          %v1259 = vunpack.c.h.b16 %v550
          %v1260 = vunpack.c.l.b16 %v551
          %v1261 = vunpack.c.h.b16 %v551
          %v1262 = vunpack.c.l.b16 %v552
          %v1263 = vunpack.c.h.b16 %v552
          %v1264 = vunpack.c.l.b16 %v553
          %v1265 = vunpack.c.h.b16 %v553
          %v1266 = vunpack.c.l.b16 %v554
          %v1267 = vunpack.c.h.b16 %v554
          %v1268 = vunpack.c.l.b16 %v555
          %v1269 = vunpack.c.h.b16 %v555
          %v1270 = vunpack.c.l.b16 %v556
          %v1271 = vunpack.c.h.b16 %v556
          %v1272 = vunpack.c.l.b16 %v557
          %v1273 = vunpack.c.h.b16 %v557
          %v1274 = vunpack.c.l.b16 %v558
          %v1275 = vunpack.c.h.b16 %v558
          %v1276 = vunpack.c.l.b16 %v559
          %v1277 = vunpack.c.h.b16 %v559
          %v1278 = vunpack.c.l.b16 %v560
          %v1279 = vunpack.c.h.b16 %v560
          %v1280 = vunpack.c.l.b16 %v561
          %v1281 = vunpack.c.h.b16 %v561
          %v1282 = vunpack.c.l.b16 %v562
          %v1283 = vunpack.c.h.b16 %v562
          %v1284 = vunpack.c.l.b16 %v563
          %v1285 = vunpack.c.h.b16 %v563
          %v1286 = vunpack.c.l.b16 %v564
          %v1287 = vunpack.c.h.b16 %v564
          %v1288 = vunpack.c.l.b16 %v565
          %v1289 = vunpack.c.h.b16 %v565
          %v1290 = vunpack.c.l.b16 %v566
          %v1291 = vunpack.c.h.b16 %v566
          %v1292 = vunpack.c.l.b16 %v567
          %v1293 = vunpack.c.h.b16 %v567
          %v1294 = vunpack.c.l.b16 %v568
          %v1295 = vunpack.c.h.b16 %v568
          %v1296 = vunpack.c.l.b16 %v569
          %v1297 = vunpack.c.h.b16 %v569
          %v1298 = vunpack.c.l.b16 %v570
          %v1299 = vunpack.c.h.b16 %v570
          %v1300 = vunpack.c.l.b16 %v571
          %v1301 = vunpack.c.h.b16 %v571
          %v1302 = vunpack.c.l.b16 %v572
          %v1303 = vunpack.c.h.b16 %v572
          %v1304 = vunpack.c.l.b16 %v573
          %v1305 = vunpack.c.h.b16 %v573
          %v1306 = vunpack.c.l.b16 %v574
          %v1307 = vunpack.c.h.b16 %v574
          %v1308 = vunpack.c.l.b16 %v575
          %v1309 = vunpack.c.h.b16 %v575
          %v1310 = vunpack.c.l.b16 %v576
          %v1311 = vunpack.c.h.b16 %v576
          %v1312 = vunpack.c.l.b16 %v577
          %v1313 = vunpack.c.h.b16 %v577
          %v1314 = vunpack.c.l.b16 %v578
          %v1315 = vunpack.c.h.b16 %v578
          %v1316 = vunpack.c.l.b16 %v579
          %v1317 = vunpack.c.h.b16 %v579
          %v1318 = vunpack.c.l.b16 %v580
          %v1319 = vunpack.c.h.b16 %v580
          %v1320 = vunpack.c.l.b16 %v581
          %v1321 = vunpack.c.h.b16 %v581
          %v1322 = vunpack.c.l.b16 %v582
          %v1323 = vunpack.c.h.b16 %v582
          %v1324 = vunpack.c.l.b16 %v583
          %v1325 = vunpack.c.h.b16 %v583
          %v1326 = vunpack.c.l.b16 %v584
          %v1327 = vunpack.c.h.b16 %v584
          %v1328 = vunpack.c.l.b16 %v585
          %v1329 = vunpack.c.h.b16 %v585
          %v1330 = vunpack.c.l.b16 %v586
          %v1331 = vunpack.c.h.b16 %v586
          %v1332 = vunpack.c.l.b16 %v587
          %v1333 = vunpack.c.h.b16 %v587
          %v1334 = vunpack.c.l.b16 %v588
          %v1335 = vunpack.c.h.b16 %v588
          %v1336 = vunpack.c.l.b16 %v589
          %v1337 = vunpack.c.h.b16 %v589
          %v1338 = vunpack.c.l.b16 %v590
          %v1339 = vunpack.c.h.b16 %v590
          %v1340 = vunpack.c.l.b16 %v591
          %v1341 = vunpack.c.h.b16 %v591
          %v1342 = vunpack.c.l.b16 %v592
          %v1343 = vunpack.c.h.b16 %v592
          %v1344 = vunpack.c.l.b16 %v593
          %v1345 = vunpack.c.h.b16 %v593
          %v1346 = vunpack.c.l.b16 %v594
          %v1347 = vunpack.c.h.b16 %v594
          %v1348 = vunpack.c.l.b16 %v595
          %v1349 = vunpack.c.h.b16 %v595
          %v1350 = vunpack.c.l.b16 %v596
          %v1351 = vunpack.c.h.b16 %v596
          %v1352 = vunpack.c.l.b16 %v597
          %v1353 = vunpack.c.h.b16 %v597
          %v1354 = vunpack.c.l.b16 %v598
          %v1355 = vunpack.c.h.b16 %v598
          %v1356 = vunpack.c.l.b16 %v599
          %v1357 = vunpack.c.h.b16 %v599
          %v1358 = vunpack.c.l.b16 %v600
          %v1359 = vunpack.c.h.b16 %v600
          %v1360 = vunpack.c.l.b16 %v601
          %v1361 = vunpack.c.h.b16 %v601
          %v1362 = vunpack.c.l.b16 %v602
          %v1363 = vunpack.c.h.b16 %v602
          %v1364 = vunpack.c.l.b16 %v603
          %v1365 = vunpack.c.h.b16 %v603
          %v1366 = vunpack.c.l.b16 %v604
          %v1367 = vunpack.c.h.b16 %v604
          %v1368 = vunpack.c.l.b16 %v605
          %v1369 = vunpack.c.h.b16 %v605
          %v1370 = vunpack.c.l.b16 %v606
          %v1371 = vunpack.c.h.b16 %v606
          %v1372 = vunpack.c.l.b16 %v607
          %v1373 = vunpack.c.h.b16 %v607
          %v1374 = vunpack.c.l.b16 %v608
          %v1375 = vunpack.c.h.b16 %v608
          %v1376 = vunpack.c.l.b16 %v609
          %v1377 = vunpack.c.h.b16 %v609
          %v1378 = vunpack.c.l.b16 %v610
          %v1379 = vunpack.c.h.b16 %v610
          %v1380 = vunpack.c.l.b16 %v611
          %v1381 = vunpack.c.h.b16 %v611
          %v1382 = vunpack.c.l.b16 %v612
          %v1383 = vunpack.c.h.b16 %v612
          %v1384 = vunpack.c.l.b16 %v613
          %v1385 = vunpack.c.h.b16 %v613
          %v1386 = vunpack.c.l.b16 %v614
          %v1387 = vunpack.c.h.b16 %v614
          %v1388 = vunpack.c.l.b16 %v615
          %v1389 = vunpack.c.h.b16 %v615
          %v1390 = vunpack.c.l.b16 %v616
          %v1391 = vunpack.c.h.b16 %v616
          %v1392 = vunpack.c.l.b16 %v617
          %v1393 = vunpack.c.h.b16 %v617
          %v1394 = vunpack.c.l.b16 %v618
          %v1395 = vunpack.c.h.b16 %v618
          %v1396 = vunpack.c.l.b16 %v619
          %v1397 = vunpack.c.h.b16 %v619
          %v1398 = vunpack.c.l.b16 %v620
          %v1399 = vunpack.c.h.b16 %v620
          %v1400 = vunpack.c.l.b16 %v621
          %v1401 = vunpack.c.h.b16 %v621
          %v1402 = vunpack.c.l.b16 %v622
          %v1403 = vunpack.c.h.b16 %v622
          %v1404 = vunpack.c.l.b16 %v623
          %v1405 = vunpack.c.h.b16 %v623
          %v1406 = vunpack.c.l.b16 %v624
          %v1407 = vunpack.c.h.b16 %v624
          %v1408 = vunpack.c.l.b16 %v625
          %v1409 = vunpack.c.h.b16 %v625
          %v1410 = vunpack.c.l.b16 %v626
          %v1411 = vunpack.c.h.b16 %v626
          %v1412 = vunpack.c.l.b16 %v627
          %v1413 = vunpack.c.h.b16 %v627
          %v1414 = vunpack.c.l.b16 %v628
          %v1415 = vunpack.c.h.b16 %v628
          %v1416 = vunpack.c.l.b16 %v629
          %v1417 = vunpack.c.h.b16 %v629
          %v1418 = vunpack.c.l.b16 %v630
          %v1419 = vunpack.c.h.b16 %v630
          %v1420 = vunpack.c.l.b16 %v631
          %v1421 = vunpack.c.h.b16 %v631
          %v1422 = vunpack.c.l.b16 %v632
          %v1423 = vunpack.c.h.b16 %v632
          %v1424 = vunpack.c.l.b16 %v633
          %v1425 = vunpack.c.h.b16 %v633
          %v1426 = vunpack.c.l.b16 %v634
          %v1427 = vunpack.c.h.b16 %v634
          %v1428 = vunpack.c.l.b16 %v635
          %v1429 = vunpack.c.h.b16 %v635
          %v1430 = vunpack.c.l.b16 %v636
          %v1431 = vunpack.c.h.b16 %v636
          %v1432 = vunpack.c.l.b16 %v637
          %v1433 = vunpack.c.h.b16 %v637
          %v1434 = vunpack.c.l.b16 %v638
          %v1435 = vunpack.c.h.b16 %v638
          %v1436 = vunpack.c.l.b16 %v639
          %v1437 = vunpack.c.h.b16 %v639
          %v1438 = vunpack.c.l.b16 %v640
          %v1439 = vunpack.c.h.b16 %v640
          %v1440 = vunpack.c.l.b16 %v641
          %v1441 = vunpack.c.h.b16 %v641
          %v1442 = vpack.c.b16 %v938, %v930
          %v1443 = vpack.c.b16 %v939, %v931
          %v1444 = vpack.c.b16 %v940, %v932
          %v1445 = vpack.c.b16 %v941, %v933
          %v1446 = vpack.c.b16 %v942, %v934
          %v1447 = vpack.c.b16 %v943, %v935
          %v1448 = vpack.c.b16 %v944, %v936
          %v1449 = vpack.c.b16 %v945, %v937
          %v1450 = vpack.c.b16 %v954, %v946
          %v1451 = vpack.c.b16 %v955, %v947
          %v1452 = vpack.c.b16 %v956, %v948
          %v1453 = vpack.c.b16 %v957, %v949
          %v1454 = vpack.c.b16 %v958, %v950
          %v1455 = vpack.c.b16 %v959, %v951
          %v1456 = vpack.c.b16 %v960, %v952
          %v1457 = vpack.c.b16 %v961, %v953
          %v1458 = vpack.c.b16 %v970, %v962
          %v1459 = vpack.c.b16 %v971, %v963
          %v1460 = vpack.c.b16 %v972, %v964
          %v1461 = vpack.c.b16 %v973, %v965
          %v1462 = vpack.c.b16 %v974, %v966
          %v1463 = vpack.c.b16 %v975, %v967
          %v1464 = vpack.c.b16 %v976, %v968
          %v1465 = vpack.c.b16 %v977, %v969
          %v1466 = vpack.c.b16 %v986, %v978
          %v1467 = vpack.c.b16 %v987, %v979
          %v1468 = vpack.c.b16 %v988, %v980
          %v1469 = vpack.c.b16 %v989, %v981
          %v1470 = vpack.c.b16 %v990, %v982
          %v1471 = vpack.c.b16 %v991, %v983
          %v1472 = vpack.c.b16 %v992, %v984
          %v1473 = vpack.c.b16 %v993, %v985
          %v1474 = vpack.c.b16 %v1002, %v994
          %v1475 = vpack.c.b16 %v1003, %v995
          %v1476 = vpack.c.b16 %v1004, %v996
          %v1477 = vpack.c.b16 %v1005, %v997
          %v1478 = vpack.c.b16 %v1006, %v998
          %v1479 = vpack.c.b16 %v1007, %v999
          %v1480 = vpack.c.b16 %v1008, %v1000
          %v1481 = vpack.c.b16 %v1009, %v1001
          %v1482 = vpack.c.b16 %v1018, %v1010
          %v1483 = vpack.c.b16 %v1019, %v1011
          %v1484 = vpack.c.b16 %v1020, %v1012
          %v1485 = vpack.c.b16 %v1021, %v1013
          %v1486 = vpack.c.b16 %v1022, %v1014
          %v1487 = vpack.c.b16 %v1023, %v1015
          %v1488 = vpack.c.b16 %v1024, %v1016
          %v1489 = vpack.c.b16 %v1025, %v1017
          %v1490 = vpack.c.b16 %v1034, %v1026
          %v1491 = vpack.c.b16 %v1035, %v1027
          %v1492 = vpack.c.b16 %v1036, %v1028
          %v1493 = vpack.c.b16 %v1037, %v1029
          %v1494 = vpack.c.b16 %v1038, %v1030
          %v1495 = vpack.c.b16 %v1039, %v1031
          %v1496 = vpack.c.b16 %v1040, %v1032
          %v1497 = vpack.c.b16 %v1041, %v1033
          %v1498 = vpack.c.b16 %v1050, %v1042
          %v1499 = vpack.c.b16 %v1051, %v1043
          %v1500 = vpack.c.b16 %v1052, %v1044
          %v1501 = vpack.c.b16 %v1053, %v1045
          %v1502 = vpack.c.b16 %v1054, %v1046
          %v1503 = vpack.c.b16 %v1055, %v1047
          %v1504 = vpack.c.b16 %v1056, %v1048
          %v1505 = vpack.c.b16 %v1057, %v1049
          %v1506 = vpack.c.b16 %v1066, %v1058
          %v1507 = vpack.c.b16 %v1067, %v1059
          %v1508 = vpack.c.b16 %v1068, %v1060
          %v1509 = vpack.c.b16 %v1069, %v1061
          %v1510 = vpack.c.b16 %v1070, %v1062
          %v1511 = vpack.c.b16 %v1071, %v1063
          %v1512 = vpack.c.b16 %v1072, %v1064
          %v1513 = vpack.c.b16 %v1073, %v1065
          %v1514 = vpack.c.b16 %v1082, %v1074
          %v1515 = vpack.c.b16 %v1083, %v1075
          %v1516 = vpack.c.b16 %v1084, %v1076
          %v1517 = vpack.c.b16 %v1085, %v1077
          %v1518 = vpack.c.b16 %v1086, %v1078
          %v1519 = vpack.c.b16 %v1087, %v1079
          %v1520 = vpack.c.b16 %v1088, %v1080
          %v1521 = vpack.c.b16 %v1089, %v1081
          %v1522 = vpack.c.b16 %v1098, %v1090
          %v1523 = vpack.c.b16 %v1099, %v1091
          %v1524 = vpack.c.b16 %v1100, %v1092
          %v1525 = vpack.c.b16 %v1101, %v1093
          %v1526 = vpack.c.b16 %v1102, %v1094
          %v1527 = vpack.c.b16 %v1103, %v1095
          %v1528 = vpack.c.b16 %v1104, %v1096
          %v1529 = vpack.c.b16 %v1105, %v1097
          %v1530 = vpack.c.b16 %v1114, %v1106
          %v1531 = vpack.c.b16 %v1115, %v1107
          %v1532 = vpack.c.b16 %v1116, %v1108
          %v1533 = vpack.c.b16 %v1117, %v1109
          %v1534 = vpack.c.b16 %v1118, %v1110
          %v1535 = vpack.c.b16 %v1119, %v1111
          %v1536 = vpack.c.b16 %v1120, %v1112
          %v1537 = vpack.c.b16 %v1121, %v1113
          %v1538 = vpack.c.b16 %v1130, %v1122
          %v1539 = vpack.c.b16 %v1131, %v1123
          %v1540 = vpack.c.b16 %v1132, %v1124
          %v1541 = vpack.c.b16 %v1133, %v1125
          %v1542 = vpack.c.b16 %v1134, %v1126
          %v1543 = vpack.c.b16 %v1135, %v1127
          %v1544 = vpack.c.b16 %v1136, %v1128
          %v1545 = vpack.c.b16 %v1137, %v1129
          %v1546 = vpack.c.b16 %v1146, %v1138
          %v1547 = vpack.c.b16 %v1147, %v1139
          %v1548 = vpack.c.b16 %v1148, %v1140
          %v1549 = vpack.c.b16 %v1149, %v1141
          %v1550 = vpack.c.b16 %v1150, %v1142
          %v1551 = vpack.c.b16 %v1151, %v1143
          %v1552 = vpack.c.b16 %v1152, %v1144
          %v1553 = vpack.c.b16 %v1153, %v1145
          %v1554 = vpack.c.b16 %v1162, %v1154
          %v1555 = vpack.c.b16 %v1163, %v1155
          %v1556 = vpack.c.b16 %v1164, %v1156
          %v1557 = vpack.c.b16 %v1165, %v1157
          %v1558 = vpack.c.b16 %v1166, %v1158
          %v1559 = vpack.c.b16 %v1167, %v1159
          %v1560 = vpack.c.b16 %v1168, %v1160
          %v1561 = vpack.c.b16 %v1169, %v1161
          %v1562 = vpack.c.b16 %v1178, %v1170
          %v1563 = vpack.c.b16 %v1179, %v1171
          %v1564 = vpack.c.b16 %v1180, %v1172
          %v1565 = vpack.c.b16 %v1181, %v1173
          %v1566 = vpack.c.b16 %v1182, %v1174
          %v1567 = vpack.c.b16 %v1183, %v1175
          %v1568 = vpack.c.b16 %v1184, %v1176
          %v1569 = vpack.c.b16 %v1185, %v1177
          %v1570 = vpack.c.b16 %v1194, %v1186
          %v1571 = vpack.c.b16 %v1195, %v1187
          %v1572 = vpack.c.b16 %v1196, %v1188
          %v1573 = vpack.c.b16 %v1197, %v1189
          %v1574 = vpack.c.b16 %v1198, %v1190
          %v1575 = vpack.c.b16 %v1199, %v1191
          %v1576 = vpack.c.b16 %v1200, %v1192
          %v1577 = vpack.c.b16 %v1201, %v1193
          %v1578 = vpack.c.b16 %v1210, %v1202
          %v1579 = vpack.c.b16 %v1211, %v1203
          %v1580 = vpack.c.b16 %v1212, %v1204
          %v1581 = vpack.c.b16 %v1213, %v1205
          %v1582 = vpack.c.b16 %v1214, %v1206
          %v1583 = vpack.c.b16 %v1215, %v1207
          %v1584 = vpack.c.b16 %v1216, %v1208
          %v1585 = vpack.c.b16 %v1217, %v1209
          %v1586 = vpack.c.b16 %v1226, %v1218
          %v1587 = vpack.c.b16 %v1227, %v1219
          %v1588 = vpack.c.b16 %v1228, %v1220
          %v1589 = vpack.c.b16 %v1229, %v1221
          %v1590 = vpack.c.b16 %v1230, %v1222
          %v1591 = vpack.c.b16 %v1231, %v1223
          %v1592 = vpack.c.b16 %v1232, %v1224
          %v1593 = vpack.c.b16 %v1233, %v1225
          %v1594 = vpack.c.b16 %v1242, %v1234
          %v1595 = vpack.c.b16 %v1243, %v1235
          %v1596 = vpack.c.b16 %v1244, %v1236
          %v1597 = vpack.c.b16 %v1245, %v1237
          %v1598 = vpack.c.b16 %v1246, %v1238
          %v1599 = vpack.c.b16 %v1247, %v1239
          %v1600 = vpack.c.b16 %v1248, %v1240
          %v1601 = vpack.c.b16 %v1249, %v1241
          %v1602 = vpack.c.b16 %v1258, %v1250
          %v1603 = vpack.c.b16 %v1259, %v1251
          %v1604 = vpack.c.b16 %v1260, %v1252
          %v1605 = vpack.c.b16 %v1261, %v1253
          %v1606 = vpack.c.b16 %v1262, %v1254
          %v1607 = vpack.c.b16 %v1263, %v1255
          %v1608 = vpack.c.b16 %v1264, %v1256
          %v1609 = vpack.c.b16 %v1265, %v1257
          %v1610 = vpack.c.b16 %v1274, %v1266
          %v1611 = vpack.c.b16 %v1275, %v1267
          %v1612 = vpack.c.b16 %v1276, %v1268
          %v1613 = vpack.c.b16 %v1277, %v1269
          %v1614 = vpack.c.b16 %v1278, %v1270
          %v1615 = vpack.c.b16 %v1279, %v1271
          %v1616 = vpack.c.b16 %v1280, %v1272
          %v1617 = vpack.c.b16 %v1281, %v1273
          %v1618 = vpack.c.b16 %v1290, %v1282
          %v1619 = vpack.c.b16 %v1291, %v1283
          %v1620 = vpack.c.b16 %v1292, %v1284
          %v1621 = vpack.c.b16 %v1293, %v1285
          %v1622 = vpack.c.b16 %v1294, %v1286
          %v1623 = vpack.c.b16 %v1295, %v1287
          %v1624 = vpack.c.b16 %v1296, %v1288
          %v1625 = vpack.c.b16 %v1297, %v1289
          %v1626 = vpack.c.b16 %v1306, %v1298
          %v1627 = vpack.c.b16 %v1307, %v1299
          %v1628 = vpack.c.b16 %v1308, %v1300
          %v1629 = vpack.c.b16 %v1309, %v1301
          %v1630 = vpack.c.b16 %v1310, %v1302
          %v1631 = vpack.c.b16 %v1311, %v1303
          %v1632 = vpack.c.b16 %v1312, %v1304
          %v1633 = vpack.c.b16 %v1313, %v1305
          %v1634 = vpack.c.b16 %v1322, %v1314
          %v1635 = vpack.c.b16 %v1323, %v1315
          %v1636 = vpack.c.b16 %v1324, %v1316
          %v1637 = vpack.c.b16 %v1325, %v1317
          %v1638 = vpack.c.b16 %v1326, %v1318
          %v1639 = vpack.c.b16 %v1327, %v1319
          %v1640 = vpack.c.b16 %v1328, %v1320
          %v1641 = vpack.c.b16 %v1329, %v1321
          %v1642 = vpack.c.b16 %v1338, %v1330
          %v1643 = vpack.c.b16 %v1339, %v1331
          %v1644 = vpack.c.b16 %v1340, %v1332
          %v1645 = vpack.c.b16 %v1341, %v1333
          %v1646 = vpack.c.b16 %v1342, %v1334
          %v1647 = vpack.c.b16 %v1343, %v1335
          %v1648 = vpack.c.b16 %v1344, %v1336
          %v1649 = vpack.c.b16 %v1345, %v1337
          %v1650 = vpack.c.b16 %v1354, %v1346
          %v1651 = vpack.c.b16 %v1355, %v1347
          %v1652 = vpack.c.b16 %v1356, %v1348
          %v1653 = vpack.c.b16 %v1357, %v1349
          %v1654 = vpack.c.b16 %v1358, %v1350
          %v1655 = vpack.c.b16 %v1359, %v1351
          %v1656 = vpack.c.b16 %v1360, %v1352
          %v1657 = vpack.c.b16 %v1361, %v1353
          %v1658 = vpack.c.b16 %v1370, %v1362
          %v1659 = vpack.c.b16 %v1371, %v1363
          %v1660 = vpack.c.b16 %v1372, %v1364
          %v1661 = vpack.c.b16 %v1373, %v1365
          %v1662 = vpack.c.b16 %v1374, %v1366
          %v1663 = vpack.c.b16 %v1375, %v1367
          %v1664 = vpack.c.b16 %v1376, %v1368
          %v1665 = vpack.c.b16 %v1377, %v1369
          %v1666 = vpack.c.b16 %v1386, %v1378
          %v1667 = vpack.c.b16 %v1387, %v1379
          %v1668 = vpack.c.b16 %v1388, %v1380
          %v1669 = vpack.c.b16 %v1389, %v1381
          %v1670 = vpack.c.b16 %v1390, %v1382
          %v1671 = vpack.c.b16 %v1391, %v1383
          %v1672 = vpack.c.b16 %v1392, %v1384
          %v1673 = vpack.c.b16 %v1393, %v1385
          %v1674 = vpack.c.b16 %v1402, %v1394
          %v1675 = vpack.c.b16 %v1403, %v1395
          %v1676 = vpack.c.b16 %v1404, %v1396
          %v1677 = vpack.c.b16 %v1405, %v1397
          %v1678 = vpack.c.b16 %v1406, %v1398
          %v1679 = vpack.c.b16 %v1407, %v1399
          %v1680 = vpack.c.b16 %v1408, %v1400
          %v1681 = vpack.c.b16 %v1409, %v1401
          %v1682 = vpack.c.b16 %v1418, %v1410
          %v1683 = vpack.c.b16 %v1419, %v1411
          %v1684 = vpack.c.b16 %v1420, %v1412
          %v1685 = vpack.c.b16 %v1421, %v1413
          %v1686 = vpack.c.b16 %v1422, %v1414
          %v1687 = vpack.c.b16 %v1423, %v1415
          %v1688 = vpack.c.b16 %v1424, %v1416
          %v1689 = vpack.c.b16 %v1425, %v1417
          %v1690 = vpack.c.b16 %v1434, %v1426
          %v1691 = vpack.c.b16 %v1435, %v1427
          %v1692 = vpack.c.b16 %v1436, %v1428
          %v1693 = vpack.c.b16 %v1437, %v1429
          %v1694 = vpack.c.b16 %v1438, %v1430
          %v1695 = vpack.c.b16 %v1439, %v1431
          %v1696 = vpack.c.b16 %v1440, %v1432
          %v1697 = vpack.c.b16 %v1441, %v1433
          %1954 = vmatpush.bf16.msra.mxu0 %v1498
          %1955 = vmatpush.bf16.msra.mxu0 %v1490
          %1956 = vmatpush.bf16.msra.mxu0 %v1482
          %1957 = vmatpush.bf16.msra.mxu0 %v1474
          %1958 = vmatpush.bf16.msra.mxu0 %v1466
          %1959 = vmatpush.bf16.msra.mxu0 %v1458
          %1960 = vmatpush.bf16.msra.mxu0 %v1450
          %1961 = vmatpush.bf16.msra.mxu0 %v1442
          %1962 = vmatmul.bf16.gmra.mxu0 %v666
          %v1963 = vpop.f32.mrf.mxu0
          %v1964 = vadd.f32 %v644, %v1963
          %v1965 = vpop.f32.mrf.mxu0
          %1966 = vdwg.mxu0
          %1967 = vmatpush.bf16.msra.mxu0 %v1562
          %1968 = vmatpush.bf16.msra.mxu0 %v1554
          %1969 = vmatpush.bf16.msra.mxu0 %v1546
          %1970 = vmatpush.bf16.msra.mxu0 %v1538
          %1971 = vmatpush.bf16.msra.mxu0 %v1530
          %1972 = vmatpush.bf16.msra.mxu0 %v1522
          %1973 = vmatpush.bf16.msra.mxu0 %v1514
          %1974 = vmatpush.bf16.msra.mxu0 %v1506
          %1975 = vmatmul.bf16.gmra.mxu0 %v667
          %v1976 = vpop.f32.mrf.mxu0
          %v1977 = vadd.f32 %v1964, %v1976
          %v1978 = vpop.f32.mrf.mxu0
          %1979 = vdwg.mxu0
          %1980 = vmatpush.bf16.msra.mxu0 %v1626
          %1981 = vmatpush.bf16.msra.mxu0 %v1618
          %1982 = vmatpush.bf16.msra.mxu0 %v1610
          %1983 = vmatpush.bf16.msra.mxu0 %v1602
          %1984 = vmatpush.bf16.msra.mxu0 %v1594
          %1985 = vmatpush.bf16.msra.mxu0 %v1586
          %1986 = vmatpush.bf16.msra.mxu0 %v1578
          %1987 = vmatpush.bf16.msra.mxu0 %v1570
          %1988 = vmatmul.bf16.gmra.mxu0 %v668
          %v1989 = vpop.f32.mrf.mxu0
          %v1990 = vadd.f32 %v1977, %v1989
          %v1991 = vpop.f32.mrf.mxu0
          %1992 = vdwg.mxu0
          %1993 = vmatpush.bf16.msra.mxu0 %v1690
          %1994 = vmatpush.bf16.msra.mxu0 %v1682
          %1995 = vmatpush.bf16.msra.mxu0 %v1674
          %1996 = vmatpush.bf16.msra.mxu0 %v1666
          %1997 = vmatpush.bf16.msra.mxu0 %v1658
          %1998 = vmatpush.bf16.msra.mxu0 %v1650
          %1999 = vmatpush.bf16.msra.mxu0 %v1642
          %2000 = vmatpush.bf16.msra.mxu0 %v1634
          %2001 = vmatmul.bf16.gmra.mxu0 %v669
          %v2002 = vpop.f32.mrf.mxu0
          %v2003 = vadd.f32 %v1990, %v2002
          %v2004 = vpop.f32.mrf.mxu0
          %2005 = vdwg.mxu0
          %2006 = vmatpush.bf16.msra.mxu0 %v1499
          %2007 = vmatpush.bf16.msra.mxu0 %v1491
          %2008 = vmatpush.bf16.msra.mxu0 %v1483
          %2009 = vmatpush.bf16.msra.mxu0 %v1475
          %2010 = vmatpush.bf16.msra.mxu0 %v1467
          %2011 = vmatpush.bf16.msra.mxu0 %v1459
          %2012 = vmatpush.bf16.msra.mxu0 %v1451
          %2013 = vmatpush.bf16.msra.mxu0 %v1443
          %2014 = vmatmul.bf16.gmra.mxu0 %v666
          %v2015 = vpop.f32.mrf.mxu0
          %v2016 = vadd.f32 %v645, %v2015
          %v2017 = vpop.f32.mrf.mxu0
          %2018 = vdwg.mxu0
          %2019 = vmatpush.bf16.msra.mxu0 %v1563
          %2020 = vmatpush.bf16.msra.mxu0 %v1555
          %2021 = vmatpush.bf16.msra.mxu0 %v1547
          %2022 = vmatpush.bf16.msra.mxu0 %v1539
          %2023 = vmatpush.bf16.msra.mxu0 %v1531
          %2024 = vmatpush.bf16.msra.mxu0 %v1523
          %2025 = vmatpush.bf16.msra.mxu0 %v1515
          %2026 = vmatpush.bf16.msra.mxu0 %v1507
          %2027 = vmatmul.bf16.gmra.mxu0 %v667
          %v2028 = vpop.f32.mrf.mxu0
          %v2029 = vadd.f32 %v2016, %v2028
          %v2030 = vpop.f32.mrf.mxu0
          %2031 = vdwg.mxu0
          %2032 = vmatpush.bf16.msra.mxu0 %v1627
          %2033 = vmatpush.bf16.msra.mxu0 %v1619
          %2034 = vmatpush.bf16.msra.mxu0 %v1611
          %2035 = vmatpush.bf16.msra.mxu0 %v1603
          %2036 = vmatpush.bf16.msra.mxu0 %v1595
          %2037 = vmatpush.bf16.msra.mxu0 %v1587
          %2038 = vmatpush.bf16.msra.mxu0 %v1579
          %2039 = vmatpush.bf16.msra.mxu0 %v1571
          %2040 = vmatmul.bf16.gmra.mxu0 %v668
          %v2041 = vpop.f32.mrf.mxu0
          %v2042 = vadd.f32 %v2029, %v2041
          %v2043 = vpop.f32.mrf.mxu0
          %2044 = vdwg.mxu0
          %2045 = vmatpush.bf16.msra.mxu0 %v1691
          %2046 = vmatpush.bf16.msra.mxu0 %v1683
          %2047 = vmatpush.bf16.msra.mxu0 %v1675
          %2048 = vmatpush.bf16.msra.mxu0 %v1667
          %2049 = vmatpush.bf16.msra.mxu0 %v1659
          %2050 = vmatpush.bf16.msra.mxu0 %v1651
          %2051 = vmatpush.bf16.msra.mxu0 %v1643
          %2052 = vmatpush.bf16.msra.mxu0 %v1635
          %2053 = vmatmul.bf16.gmra.mxu0 %v669
          %v2054 = vpop.f32.mrf.mxu0
          %v2055 = vadd.f32 %v2042, %v2054
          %v2056 = vpop.f32.mrf.mxu0
          %2057 = vdwg.mxu0
          %2058 = vmatpush.bf16.msra.mxu0 %v1500
          %2059 = vmatpush.bf16.msra.mxu0 %v1492
          %2060 = vmatpush.bf16.msra.mxu0 %v1484
          %2061 = vmatpush.bf16.msra.mxu0 %v1476
          %2062 = vmatpush.bf16.msra.mxu0 %v1468
          %2063 = vmatpush.bf16.msra.mxu0 %v1460
          %2064 = vmatpush.bf16.msra.mxu0 %v1452
          %2065 = vmatpush.bf16.msra.mxu0 %v1444
          %2066 = vmatmul.bf16.gmra.mxu0 %v666
          %v2067 = vpop.f32.mrf.mxu0
          %v2068 = vadd.f32 %v646, %v2067
          %v2069 = vpop.f32.mrf.mxu0
          %2070 = vdwg.mxu0
          %2071 = vmatpush.bf16.msra.mxu0 %v1564
          %2072 = vmatpush.bf16.msra.mxu0 %v1556
          %2073 = vmatpush.bf16.msra.mxu0 %v1548
          %2074 = vmatpush.bf16.msra.mxu0 %v1540
          %2075 = vmatpush.bf16.msra.mxu0 %v1532
          %2076 = vmatpush.bf16.msra.mxu0 %v1524
          %2077 = vmatpush.bf16.msra.mxu0 %v1516
          %2078 = vmatpush.bf16.msra.mxu0 %v1508
          %2079 = vmatmul.bf16.gmra.mxu0 %v667
          %v2080 = vpop.f32.mrf.mxu0
          %v2081 = vadd.f32 %v2068, %v2080
          %v2082 = vpop.f32.mrf.mxu0
          %2083 = vdwg.mxu0
          %2084 = vmatpush.bf16.msra.mxu0 %v1628
          %2085 = vmatpush.bf16.msra.mxu0 %v1620
          %2086 = vmatpush.bf16.msra.mxu0 %v1612
          %2087 = vmatpush.bf16.msra.mxu0 %v1604
          %2088 = vmatpush.bf16.msra.mxu0 %v1596
          %2089 = vmatpush.bf16.msra.mxu0 %v1588
          %2090 = vmatpush.bf16.msra.mxu0 %v1580
          %2091 = vmatpush.bf16.msra.mxu0 %v1572
          %2092 = vmatmul.bf16.gmra.mxu0 %v668
          %v2093 = vpop.f32.mrf.mxu0
          %v2094 = vadd.f32 %v2081, %v2093
          %v2095 = vpop.f32.mrf.mxu0
          %2096 = vdwg.mxu0
          %2097 = vmatpush.bf16.msra.mxu0 %v1692
          %2098 = vmatpush.bf16.msra.mxu0 %v1684
          %2099 = vmatpush.bf16.msra.mxu0 %v1676
          %2100 = vmatpush.bf16.msra.mxu0 %v1668
          %2101 = vmatpush.bf16.msra.mxu0 %v1660
          %2102 = vmatpush.bf16.msra.mxu0 %v1652
          %2103 = vmatpush.bf16.msra.mxu0 %v1644
          %2104 = vmatpush.bf16.msra.mxu0 %v1636
          %2105 = vmatmul.bf16.gmra.mxu0 %v669
          %v2106 = vpop.f32.mrf.mxu0
          %v2107 = vadd.f32 %v2094, %v2106
          %v2108 = vpop.f32.mrf.mxu0
          %2109 = vdwg.mxu0
          %2110 = vmatpush.bf16.msra.mxu0 %v1501
          %2111 = vmatpush.bf16.msra.mxu0 %v1493
          %2112 = vmatpush.bf16.msra.mxu0 %v1485
          %2113 = vmatpush.bf16.msra.mxu0 %v1477
          %2114 = vmatpush.bf16.msra.mxu0 %v1469
          %2115 = vmatpush.bf16.msra.mxu0 %v1461
          %2116 = vmatpush.bf16.msra.mxu0 %v1453
          %2117 = vmatpush.bf16.msra.mxu0 %v1445
          %2118 = vmatmul.bf16.gmra.mxu0 %v666
          %v2119 = vpop.f32.mrf.mxu0
          %v2120 = vadd.f32 %v647, %v2119
          %v2121 = vpop.f32.mrf.mxu0
          %2122 = vdwg.mxu0
          %2123 = vmatpush.bf16.msra.mxu0 %v1565
          %2124 = vmatpush.bf16.msra.mxu0 %v1557
          %2125 = vmatpush.bf16.msra.mxu0 %v1549
          %2126 = vmatpush.bf16.msra.mxu0 %v1541
          %2127 = vmatpush.bf16.msra.mxu0 %v1533
          %2128 = vmatpush.bf16.msra.mxu0 %v1525
          %2129 = vmatpush.bf16.msra.mxu0 %v1517
          %2130 = vmatpush.bf16.msra.mxu0 %v1509
          %2131 = vmatmul.bf16.gmra.mxu0 %v667
          %v2132 = vpop.f32.mrf.mxu0
          %v2133 = vadd.f32 %v2120, %v2132
          %v2134 = vpop.f32.mrf.mxu0
          %2135 = vdwg.mxu0
          %2136 = vmatpush.bf16.msra.mxu0 %v1629
          %2137 = vmatpush.bf16.msra.mxu0 %v1621
          %2138 = vmatpush.bf16.msra.mxu0 %v1613
          %2139 = vmatpush.bf16.msra.mxu0 %v1605
          %2140 = vmatpush.bf16.msra.mxu0 %v1597
          %2141 = vmatpush.bf16.msra.mxu0 %v1589
          %2142 = vmatpush.bf16.msra.mxu0 %v1581
          %2143 = vmatpush.bf16.msra.mxu0 %v1573
          %2144 = vmatmul.bf16.gmra.mxu0 %v668
          %v2145 = vpop.f32.mrf.mxu0
          %v2146 = vadd.f32 %v2133, %v2145
          %v2147 = vpop.f32.mrf.mxu0
          %2148 = vdwg.mxu0
          %2149 = vmatpush.bf16.msra.mxu0 %v1693
          %2150 = vmatpush.bf16.msra.mxu0 %v1685
          %2151 = vmatpush.bf16.msra.mxu0 %v1677
          %2152 = vmatpush.bf16.msra.mxu0 %v1669
          %2153 = vmatpush.bf16.msra.mxu0 %v1661
          %2154 = vmatpush.bf16.msra.mxu0 %v1653
          %2155 = vmatpush.bf16.msra.mxu0 %v1645
          %2156 = vmatpush.bf16.msra.mxu0 %v1637
          %2157 = vmatmul.bf16.gmra.mxu0 %v669
          %v2158 = vpop.f32.mrf.mxu0
          %v2159 = vadd.f32 %v2146, %v2158
          %v2160 = vpop.f32.mrf.mxu0
          %2161 = vdwg.mxu0
          %2162 = vmatpush.bf16.msra.mxu0 %v1502
          %2163 = vmatpush.bf16.msra.mxu0 %v1494
          %2164 = vmatpush.bf16.msra.mxu0 %v1486
          %2165 = vmatpush.bf16.msra.mxu0 %v1478
          %2166 = vmatpush.bf16.msra.mxu0 %v1470
          %2167 = vmatpush.bf16.msra.mxu0 %v1462
          %2168 = vmatpush.bf16.msra.mxu0 %v1454
          %2169 = vmatpush.bf16.msra.mxu0 %v1446
          %2170 = vmatmul.bf16.gmra.mxu0 %v666
          %v2171 = vpop.f32.mrf.mxu0
          %v2172 = vadd.f32 %v648, %v2171
          %v2173 = vpop.f32.mrf.mxu0
          %2174 = vdwg.mxu0
          %2175 = vmatpush.bf16.msra.mxu0 %v1566
          %2176 = vmatpush.bf16.msra.mxu0 %v1558
          %2177 = vmatpush.bf16.msra.mxu0 %v1550
          %2178 = vmatpush.bf16.msra.mxu0 %v1542
          %2179 = vmatpush.bf16.msra.mxu0 %v1534
          %2180 = vmatpush.bf16.msra.mxu0 %v1526
          %2181 = vmatpush.bf16.msra.mxu0 %v1518
          %2182 = vmatpush.bf16.msra.mxu0 %v1510
          %2183 = vmatmul.bf16.gmra.mxu0 %v667
          %v2184 = vpop.f32.mrf.mxu0
          %v2185 = vadd.f32 %v2172, %v2184
          %v2186 = vpop.f32.mrf.mxu0
          %2187 = vdwg.mxu0
          %2188 = vmatpush.bf16.msra.mxu0 %v1630
          %2189 = vmatpush.bf16.msra.mxu0 %v1622
          %2190 = vmatpush.bf16.msra.mxu0 %v1614
          %2191 = vmatpush.bf16.msra.mxu0 %v1606
          %2192 = vmatpush.bf16.msra.mxu0 %v1598
          %2193 = vmatpush.bf16.msra.mxu0 %v1590
          %2194 = vmatpush.bf16.msra.mxu0 %v1582
          %2195 = vmatpush.bf16.msra.mxu0 %v1574
          %2196 = vmatmul.bf16.gmra.mxu0 %v668
          %v2197 = vpop.f32.mrf.mxu0
          %v2198 = vadd.f32 %v2185, %v2197
          %v2199 = vpop.f32.mrf.mxu0
          %2200 = vdwg.mxu0
          %2201 = vmatpush.bf16.msra.mxu0 %v1694
          %2202 = vmatpush.bf16.msra.mxu0 %v1686
          %2203 = vmatpush.bf16.msra.mxu0 %v1678
          %2204 = vmatpush.bf16.msra.mxu0 %v1670
          %2205 = vmatpush.bf16.msra.mxu0 %v1662
          %2206 = vmatpush.bf16.msra.mxu0 %v1654
          %2207 = vmatpush.bf16.msra.mxu0 %v1646
          %2208 = vmatpush.bf16.msra.mxu0 %v1638
          %2209 = vmatmul.bf16.gmra.mxu0 %v669
          %v2210 = vpop.f32.mrf.mxu0
          %v2211 = vadd.f32 %v2198, %v2210
          %v2212 = vpop.f32.mrf.mxu0
          %2213 = vdwg.mxu0
          %2214 = vmatpush.bf16.msra.mxu0 %v1503
          %2215 = vmatpush.bf16.msra.mxu0 %v1495
          %2216 = vmatpush.bf16.msra.mxu0 %v1487
          %2217 = vmatpush.bf16.msra.mxu0 %v1479
          %2218 = vmatpush.bf16.msra.mxu0 %v1471
          %2219 = vmatpush.bf16.msra.mxu0 %v1463
          %2220 = vmatpush.bf16.msra.mxu0 %v1455
          %2221 = vmatpush.bf16.msra.mxu0 %v1447
          %2222 = vmatmul.bf16.gmra.mxu0 %v666
          %v2223 = vpop.f32.mrf.mxu0
          %v2224 = vadd.f32 %v649, %v2223
          %v2225 = vpop.f32.mrf.mxu0
          %2226 = vdwg.mxu0
          %2227 = vmatpush.bf16.msra.mxu0 %v1567
          %2228 = vmatpush.bf16.msra.mxu0 %v1559
          %2229 = vmatpush.bf16.msra.mxu0 %v1551
          %2230 = vmatpush.bf16.msra.mxu0 %v1543
          %2231 = vmatpush.bf16.msra.mxu0 %v1535
          %2232 = vmatpush.bf16.msra.mxu0 %v1527
          %2233 = vmatpush.bf16.msra.mxu0 %v1519
          %2234 = vmatpush.bf16.msra.mxu0 %v1511
          %2235 = vmatmul.bf16.gmra.mxu0 %v667
          %v2236 = vpop.f32.mrf.mxu0
          %v2237 = vadd.f32 %v2224, %v2236
          %v2238 = vpop.f32.mrf.mxu0
          %2239 = vdwg.mxu0
          %2240 = vmatpush.bf16.msra.mxu0 %v1631
          %2241 = vmatpush.bf16.msra.mxu0 %v1623
          %2242 = vmatpush.bf16.msra.mxu0 %v1615
          %2243 = vmatpush.bf16.msra.mxu0 %v1607
          %2244 = vmatpush.bf16.msra.mxu0 %v1599
          %2245 = vmatpush.bf16.msra.mxu0 %v1591
          %2246 = vmatpush.bf16.msra.mxu0 %v1583
          %2247 = vmatpush.bf16.msra.mxu0 %v1575
          %2248 = vmatmul.bf16.gmra.mxu0 %v668
          %v2249 = vpop.f32.mrf.mxu0
          %v2250 = vadd.f32 %v2237, %v2249
          %v2251 = vpop.f32.mrf.mxu0
          %2252 = vdwg.mxu0
          %2253 = vmatpush.bf16.msra.mxu0 %v1695
          %2254 = vmatpush.bf16.msra.mxu0 %v1687
          %2255 = vmatpush.bf16.msra.mxu0 %v1679
          %2256 = vmatpush.bf16.msra.mxu0 %v1671
          %2257 = vmatpush.bf16.msra.mxu0 %v1663
          %2258 = vmatpush.bf16.msra.mxu0 %v1655
          %2259 = vmatpush.bf16.msra.mxu0 %v1647
          %2260 = vmatpush.bf16.msra.mxu0 %v1639
          %2261 = vmatmul.bf16.gmra.mxu0 %v669
          %v2262 = vpop.f32.mrf.mxu0
          %v2263 = vadd.f32 %v2250, %v2262
          %v2264 = vpop.f32.mrf.mxu0
          %2265 = vdwg.mxu0
          %2266 = vmatpush.bf16.msra.mxu0 %v1504
          %2267 = vmatpush.bf16.msra.mxu0 %v1496
          %2268 = vmatpush.bf16.msra.mxu0 %v1488
          %2269 = vmatpush.bf16.msra.mxu0 %v1480
          %2270 = vmatpush.bf16.msra.mxu0 %v1472
          %2271 = vmatpush.bf16.msra.mxu0 %v1464
          %2272 = vmatpush.bf16.msra.mxu0 %v1456
          %2273 = vmatpush.bf16.msra.mxu0 %v1448
          %2274 = vmatmul.bf16.gmra.mxu0 %v666
          %v2275 = vpop.f32.mrf.mxu0
          %v2276 = vadd.f32 %v650, %v2275
          %v2277 = vpop.f32.mrf.mxu0
          %2278 = vdwg.mxu0
          %2279 = vmatpush.bf16.msra.mxu0 %v1568
          %2280 = vmatpush.bf16.msra.mxu0 %v1560
          %2281 = vmatpush.bf16.msra.mxu0 %v1552
          %2282 = vmatpush.bf16.msra.mxu0 %v1544
          %2283 = vmatpush.bf16.msra.mxu0 %v1536
          %2284 = vmatpush.bf16.msra.mxu0 %v1528
          %2285 = vmatpush.bf16.msra.mxu0 %v1520
          %2286 = vmatpush.bf16.msra.mxu0 %v1512
          %2287 = vmatmul.bf16.gmra.mxu0 %v667
          %v2288 = vpop.f32.mrf.mxu0
          %v2289 = vadd.f32 %v2276, %v2288
          %v2290 = vpop.f32.mrf.mxu0
          %2291 = vdwg.mxu0
          %2292 = vmatpush.bf16.msra.mxu0 %v1632
          %2293 = vmatpush.bf16.msra.mxu0 %v1624
          %2294 = vmatpush.bf16.msra.mxu0 %v1616
          %2295 = vmatpush.bf16.msra.mxu0 %v1608
          %2296 = vmatpush.bf16.msra.mxu0 %v1600
          %2297 = vmatpush.bf16.msra.mxu0 %v1592
          %2298 = vmatpush.bf16.msra.mxu0 %v1584
          %2299 = vmatpush.bf16.msra.mxu0 %v1576
          %2300 = vmatmul.bf16.gmra.mxu0 %v668
          %v2301 = vpop.f32.mrf.mxu0
          %v2302 = vadd.f32 %v2289, %v2301
          %v2303 = vpop.f32.mrf.mxu0
          %2304 = vdwg.mxu0
          %2305 = vmatpush.bf16.msra.mxu0 %v1696
          %2306 = vmatpush.bf16.msra.mxu0 %v1688
          %2307 = vmatpush.bf16.msra.mxu0 %v1680
          %2308 = vmatpush.bf16.msra.mxu0 %v1672
          %2309 = vmatpush.bf16.msra.mxu0 %v1664
          %2310 = vmatpush.bf16.msra.mxu0 %v1656
          %2311 = vmatpush.bf16.msra.mxu0 %v1648
          %2312 = vmatpush.bf16.msra.mxu0 %v1640
          %2313 = vmatmul.bf16.gmra.mxu0 %v669
          %v2314 = vpop.f32.mrf.mxu0
          %v2315 = vadd.f32 %v2302, %v2314
          %v2316 = vpop.f32.mrf.mxu0
          %2317 = vdwg.mxu0
          %2318 = vmatpush.bf16.msra.mxu0 %v1505
          %2319 = vmatpush.bf16.msra.mxu0 %v1497
          %2320 = vmatpush.bf16.msra.mxu0 %v1489
          %2321 = vmatpush.bf16.msra.mxu0 %v1481
          %2322 = vmatpush.bf16.msra.mxu0 %v1473
          %2323 = vmatpush.bf16.msra.mxu0 %v1465
          %2324 = vmatpush.bf16.msra.mxu0 %v1457
          %2325 = vmatpush.bf16.msra.mxu0 %v1449
          %2326 = vmatmul.bf16.gmra.mxu0 %v666
          %v2327 = vpop.f32.mrf.mxu0
          %v2328 = vadd.f32 %v651, %v2327
          %v2329 = vpop.f32.mrf.mxu0
          %2330 = vdwg.mxu0
          %2331 = vmatpush.bf16.msra.mxu0 %v1569
          %2332 = vmatpush.bf16.msra.mxu0 %v1561
          %2333 = vmatpush.bf16.msra.mxu0 %v1553
          %2334 = vmatpush.bf16.msra.mxu0 %v1545
          %2335 = vmatpush.bf16.msra.mxu0 %v1537
          %2336 = vmatpush.bf16.msra.mxu0 %v1529
          %2337 = vmatpush.bf16.msra.mxu0 %v1521
          %2338 = vmatpush.bf16.msra.mxu0 %v1513
          %2339 = vmatmul.bf16.gmra.mxu0 %v667
          %v2340 = vpop.f32.mrf.mxu0
          %v2341 = vadd.f32 %v2328, %v2340
          %v2342 = vpop.f32.mrf.mxu0
          %2343 = vdwg.mxu0
          %2344 = vmatpush.bf16.msra.mxu0 %v1633
          %2345 = vmatpush.bf16.msra.mxu0 %v1625
          %2346 = vmatpush.bf16.msra.mxu0 %v1617
          %2347 = vmatpush.bf16.msra.mxu0 %v1609
          %2348 = vmatpush.bf16.msra.mxu0 %v1601
          %2349 = vmatpush.bf16.msra.mxu0 %v1593
          %2350 = vmatpush.bf16.msra.mxu0 %v1585
          %2351 = vmatpush.bf16.msra.mxu0 %v1577
          %2352 = vmatmul.bf16.gmra.mxu0 %v668
          %v2353 = vpop.f32.mrf.mxu0
          %v2354 = vadd.f32 %v2341, %v2353
          %v2355 = vpop.f32.mrf.mxu0
          %2356 = vdwg.mxu0
          %2357 = vmatpush.bf16.msra.mxu0 %v1697
          %2358 = vmatpush.bf16.msra.mxu0 %v1689
          %2359 = vmatpush.bf16.msra.mxu0 %v1681
          %2360 = vmatpush.bf16.msra.mxu0 %v1673
          %2361 = vmatpush.bf16.msra.mxu0 %v1665
          %2362 = vmatpush.bf16.msra.mxu0 %v1657
          %2363 = vmatpush.bf16.msra.mxu0 %v1649
          %2364 = vmatpush.bf16.msra.mxu0 %v1641
          %2365 = vmatmul.bf16.gmra.mxu0 %v669
          %v2366 = vpop.f32.mrf.mxu0
          %v2367 = vadd.f32 %v2354, %v2366
          %v2368 = vpop.f32.mrf.mxu0
          %2369 = vdwg.mxu0
          %v2370 = vmax.f32 %v2003, 0.0
          %v2371 = vmax.f32 %v2055, 0.0
          %v2372 = vmax.f32 %v2107, 0.0
          %v2373 = vmax.f32 %v2159, 0.0
          %v2374 = vmax.f32 %v2211, 0.0
          %v2375 = vmax.f32 %v2263, 0.0
          %v2376 = vmax.f32 %v2315, 0.0
          %v2377 = vmax.f32 %v2367, 0.0
          %2378 = vst [vmem:[#allocation2] sm:$0xff] %v2370
          %2379 = vst [vmem:[#allocation2 + $0x8] sm:$0xff] %v2371
          %2380 = vst [vmem:[#allocation2 + $0x10] sm:$0xff] %v2372
          %2381 = vst [vmem:[#allocation2 + $0x18] sm:$0xff] %v2373
          %2382 = vst [vmem:[#allocation2 + $0x20] sm:$0xff] %v2374
          %2383 = vst [vmem:[#allocation2 + $0x28] sm:$0xff] %v2375
          %2384 = vst [vmem:[#allocation2 + $0x30] sm:$0xff] %v2376
          %2385 = vst [vmem:[#allocation2 + $0x38] sm:$0xff] %v2377
        $region80: #{tpu_custom_call.1} parent=47 // pred_fallthru
          _
        %v2386 = vld [vmem:[#allocation2] sm:$0xff]
        %v2387 = vld [vmem:[#allocation2 + $0x8] sm:$0xff]
        %v2388 = vld [vmem:[#allocation2 + $0x10] sm:$0xff]
        %v2389 = vld [vmem:[#allocation2 + $0x18] sm:$0xff]
        %v2390 = vld [vmem:[#allocation2 + $0x20] sm:$0xff]
        %v2391 = vld [vmem:[#allocation2 + $0x28] sm:$0xff]
        %v2392 = vld [vmem:[#allocation2 + $0x30] sm:$0xff]
        %v2393 = vld [vmem:[#allocation2 + $0x38] sm:$0xff]
        %v2394 = vpack.c.bf16 %v2386, %v2386
        %v2395 = vpack.c.bf16 %v2387, %v2387
        %v2396 = vpack.c.bf16 %v2388, %v2388
        %v2397 = vpack.c.bf16 %v2389, %v2389
        %v2398 = vpack.c.bf16 %v2390, %v2390
        %v2399 = vpack.c.bf16 %v2391, %v2391
        %v2400 = vpack.c.bf16 %v2392, %v2392
        %v2401 = vpack.c.bf16 %v2393, %v2393
        %v2402 = vld [vmem:[%s338] sm:$0xff]
        %v2403 = vld [vmem:[%s338 + $0x8] sm:$0xff]
        %v2404 = vld [vmem:[%s338 + $0x10] sm:$0xff]
        %v2405 = vld [vmem:[%s338 + $0x18] sm:$0xff]
        %v2406 = vld [vmem:[%s338 + $0x20] sm:$0xff]
        %v2407 = vld [vmem:[%s338 + $0x28] sm:$0xff]
        %v2408 = vld [vmem:[%s338 + $0x30] sm:$0xff]
        %v2409 = vld [vmem:[%s338 + $0x38] sm:$0xff]
        %v2410 = vld [vmem:[%s338 + $0x40] sm:$0xff]
        %v2411 = vld [vmem:[%s338 + $0x48] sm:$0xff]
        %v2412 = vld [vmem:[%s338 + $0x50] sm:$0xff]
        %v2413 = vld [vmem:[%s338 + $0x58] sm:$0xff]
        %v2414 = vld [vmem:[%s338 + $0x60] sm:$0xff]
        %v2415 = vld [vmem:[%s338 + $0x68] sm:$0xff]
        %v2416 = vld [vmem:[%s338 + $0x70] sm:$0xff]
        %v2417 = vld [vmem:[%s338 + $0x78] sm:$0xff]
        %v2418 = vld [vmem:[%s338 + $0x80] sm:$0xff]
        %v2419 = vld [vmem:[%s338 + $0x88] sm:$0xff]
        %v2420 = vld [vmem:[%s338 + $0x90] sm:$0xff]
        %v2421 = vld [vmem:[%s338 + $0x98] sm:$0xff]
        %v2422 = vld [vmem:[%s338 + $0xa0] sm:$0xff]
        %v2423 = vld [vmem:[%s338 + $0xa8] sm:$0xff]
        %v2424 = vld [vmem:[%s338 + $0xb0] sm:$0xff]
        %v2425 = vld [vmem:[%s338 + $0xb8] sm:$0xff]
        %v2426 = vld [vmem:[%s338 + $0xc0] sm:$0xff]
        %v2427 = vld [vmem:[%s338 + $0xc8] sm:$0xff]
        %v2428 = vld [vmem:[%s338 + $0xd0] sm:$0xff]
        %v2429 = vld [vmem:[%s338 + $0xd8] sm:$0xff]
        %v2430 = vld [vmem:[%s338 + $0xe0] sm:$0xff]
        %v2431 = vld [vmem:[%s338 + $0xe8] sm:$0xff]
        %v2432 = vld [vmem:[%s338 + $0xf0] sm:$0xff]
        %v2433 = vld [vmem:[%s338 + $0xf8] sm:$0xff]
        %v2434 = vld [vmem:[%s338 + $0x100] sm:$0xff]
        %v2435 = vld [vmem:[%s338 + $0x108] sm:$0xff]
        %v2436 = vld [vmem:[%s338 + $0x110] sm:$0xff]
        %v2437 = vld [vmem:[%s338 + $0x118] sm:$0xff]
        %v2438 = vld [vmem:[%s338 + $0x120] sm:$0xff]
        %v2439 = vld [vmem:[%s338 + $0x128] sm:$0xff]
        %v2440 = vld [vmem:[%s338 + $0x130] sm:$0xff]
        %v2441 = vld [vmem:[%s338 + $0x138] sm:$0xff]
        %v2442 = vld [vmem:[%s338 + $0x140] sm:$0xff]
        %v2443 = vld [vmem:[%s338 + $0x148] sm:$0xff]
        %v2444 = vld [vmem:[%s338 + $0x150] sm:$0xff]
        %v2445 = vld [vmem:[%s338 + $0x158] sm:$0xff]
        %v2446 = vld [vmem:[%s338 + $0x160] sm:$0xff]
        %v2447 = vld [vmem:[%s338 + $0x168] sm:$0xff]
        %v2448 = vld [vmem:[%s338 + $0x170] sm:$0xff]
        %v2449 = vld [vmem:[%s338 + $0x178] sm:$0xff]
        %v2450 = vld [vmem:[%s338 + $0x180] sm:$0xff]
        %v2451 = vld [vmem:[%s338 + $0x188] sm:$0xff]
        %v2452 = vld [vmem:[%s338 + $0x190] sm:$0xff]
        %v2453 = vld [vmem:[%s338 + $0x198] sm:$0xff]
        %v2454 = vld [vmem:[%s338 + $0x1a0] sm:$0xff]
        %v2455 = vld [vmem:[%s338 + $0x1a8] sm:$0xff]
        %v2456 = vld [vmem:[%s338 + $0x1b0] sm:$0xff]
        %v2457 = vld [vmem:[%s338 + $0x1b8] sm:$0xff]
        %v2458 = vld [vmem:[%s338 + $0x1c0] sm:$0xff]
        %v2459 = vld [vmem:[%s338 + $0x1c8] sm:$0xff]
        %v2460 = vld [vmem:[%s338 + $0x1d0] sm:$0xff]
        %v2461 = vld [vmem:[%s338 + $0x1d8] sm:$0xff]
        %v2462 = vld [vmem:[%s338 + $0x1e0] sm:$0xff]
        %v2463 = vld [vmem:[%s338 + $0x1e8] sm:$0xff]
        %v2464 = vld [vmem:[%s338 + $0x1f0] sm:$0xff]
        %v2465 = vld [vmem:[%s338 + $0x1f8] sm:$0xff]
        %v2466 = vld [vmem:[%s338 + $0x200] sm:$0xff]
        %v2467 = vld [vmem:[%s338 + $0x208] sm:$0xff]
        %v2468 = vld [vmem:[%s338 + $0x210] sm:$0xff]
        %v2469 = vld [vmem:[%s338 + $0x218] sm:$0xff]
        %v2470 = vld [vmem:[%s338 + $0x220] sm:$0xff]
        %v2471 = vld [vmem:[%s338 + $0x228] sm:$0xff]
        %v2472 = vld [vmem:[%s338 + $0x230] sm:$0xff]
        %v2473 = vld [vmem:[%s338 + $0x238] sm:$0xff]
        %v2474 = vld [vmem:[%s338 + $0x240] sm:$0xff]
        %v2475 = vld [vmem:[%s338 + $0x248] sm:$0xff]
        %v2476 = vld [vmem:[%s338 + $0x250] sm:$0xff]
        %v2477 = vld [vmem:[%s338 + $0x258] sm:$0xff]
        %v2478 = vld [vmem:[%s338 + $0x260] sm:$0xff]
        %v2479 = vld [vmem:[%s338 + $0x268] sm:$0xff]
        %v2480 = vld [vmem:[%s338 + $0x270] sm:$0xff]
        %v2481 = vld [vmem:[%s338 + $0x278] sm:$0xff]
        %v2482 = vld [vmem:[%s338 + $0x280] sm:$0xff]
        %v2483 = vld [vmem:[%s338 + $0x288] sm:$0xff]
        %v2484 = vld [vmem:[%s338 + $0x290] sm:$0xff]
        %v2485 = vld [vmem:[%s338 + $0x298] sm:$0xff]
        %v2486 = vld [vmem:[%s338 + $0x2a0] sm:$0xff]
        %v2487 = vld [vmem:[%s338 + $0x2a8] sm:$0xff]
        %v2488 = vld [vmem:[%s338 + $0x2b0] sm:$0xff]
        %v2489 = vld [vmem:[%s338 + $0x2b8] sm:$0xff]
        %v2490 = vld [vmem:[%s338 + $0x2c0] sm:$0xff]
        %v2491 = vld [vmem:[%s338 + $0x2c8] sm:$0xff]
        %v2492 = vld [vmem:[%s338 + $0x2d0] sm:$0xff]
        %v2493 = vld [vmem:[%s338 + $0x2d8] sm:$0xff]
        %v2494 = vld [vmem:[%s338 + $0x2e0] sm:$0xff]
        %v2495 = vld [vmem:[%s338 + $0x2e8] sm:$0xff]
        %v2496 = vld [vmem:[%s338 + $0x2f0] sm:$0xff]
        %v2497 = vld [vmem:[%s338 + $0x2f8] sm:$0xff]
        %v2498 = vld [vmem:[%s338 + $0x300] sm:$0xff]
        %v2499 = vld [vmem:[%s338 + $0x308] sm:$0xff]
        %v2500 = vld [vmem:[%s338 + $0x310] sm:$0xff]
        %v2501 = vld [vmem:[%s338 + $0x318] sm:$0xff]
        %v2502 = vld [vmem:[%s338 + $0x320] sm:$0xff]
        %v2503 = vld [vmem:[%s338 + $0x328] sm:$0xff]
        %v2504 = vld [vmem:[%s338 + $0x330] sm:$0xff]
        %v2505 = vld [vmem:[%s338 + $0x338] sm:$0xff]
        %v2506 = vld [vmem:[%s338 + $0x340] sm:$0xff]
        %v2507 = vld [vmem:[%s338 + $0x348] sm:$0xff]
        %v2508 = vld [vmem:[%s338 + $0x350] sm:$0xff]
        %v2509 = vld [vmem:[%s338 + $0x358] sm:$0xff]
        %v2510 = vld [vmem:[%s338 + $0x360] sm:$0xff]
        %v2511 = vld [vmem:[%s338 + $0x368] sm:$0xff]
        %v2512 = vld [vmem:[%s338 + $0x370] sm:$0xff]
        %v2513 = vld [vmem:[%s338 + $0x378] sm:$0xff]
        %v2514 = vld [vmem:[%s338 + $0x380] sm:$0xff]
        %v2515 = vld [vmem:[%s338 + $0x388] sm:$0xff]
        %v2516 = vld [vmem:[%s338 + $0x390] sm:$0xff]
        %v2517 = vld [vmem:[%s338 + $0x398] sm:$0xff]
        %v2518 = vld [vmem:[%s338 + $0x3a0] sm:$0xff]
        %v2519 = vld [vmem:[%s338 + $0x3a8] sm:$0xff]
        %v2520 = vld [vmem:[%s338 + $0x3b0] sm:$0xff]
        %v2521 = vld [vmem:[%s338 + $0x3b8] sm:$0xff]
        %v2522 = vld [vmem:[%s338 + $0x3c0] sm:$0xff]
        %v2523 = vld [vmem:[%s338 + $0x3c8] sm:$0xff]
        %v2524 = vld [vmem:[%s338 + $0x3d0] sm:$0xff]
        %v2525 = vld [vmem:[%s338 + $0x3d8] sm:$0xff]
        %v2526 = vld [vmem:[%s338 + $0x3e0] sm:$0xff]
        %v2527 = vld [vmem:[%s338 + $0x3e8] sm:$0xff]
        %v2528 = vld [vmem:[%s338 + $0x3f0] sm:$0xff]
        %v2529 = vld [vmem:[%s338 + $0x3f8] sm:$0xff]
        %v2530 = vld [vmem:[%s338 + $0x400] sm:$0xff]
        %v2531 = vld [vmem:[%s338 + $0x408] sm:$0xff]
        %v2532 = vld [vmem:[%s338 + $0x410] sm:$0xff]
        %v2533 = vld [vmem:[%s338 + $0x418] sm:$0xff]
        %v2534 = vld [vmem:[%s338 + $0x420] sm:$0xff]
        %v2535 = vld [vmem:[%s338 + $0x428] sm:$0xff]
        %v2536 = vld [vmem:[%s338 + $0x430] sm:$0xff]
        %v2537 = vld [vmem:[%s338 + $0x438] sm:$0xff]
        %v2538 = vld [vmem:[%s338 + $0x440] sm:$0xff]
        %v2539 = vld [vmem:[%s338 + $0x448] sm:$0xff]
        %v2540 = vld [vmem:[%s338 + $0x450] sm:$0xff]
        %v2541 = vld [vmem:[%s338 + $0x458] sm:$0xff]
        %v2542 = vld [vmem:[%s338 + $0x460] sm:$0xff]
        %v2543 = vld [vmem:[%s338 + $0x468] sm:$0xff]
        %v2544 = vld [vmem:[%s338 + $0x470] sm:$0xff]
        %v2545 = vld [vmem:[%s338 + $0x478] sm:$0xff]
        %v2546 = vld [vmem:[%s338 + $0x480] sm:$0xff]
        %v2547 = vld [vmem:[%s338 + $0x488] sm:$0xff]
        %v2548 = vld [vmem:[%s338 + $0x490] sm:$0xff]
        %v2549 = vld [vmem:[%s338 + $0x498] sm:$0xff]
        %v2550 = vld [vmem:[%s338 + $0x4a0] sm:$0xff]
        %v2551 = vld [vmem:[%s338 + $0x4a8] sm:$0xff]
        %v2552 = vld [vmem:[%s338 + $0x4b0] sm:$0xff]
        %v2553 = vld [vmem:[%s338 + $0x4b8] sm:$0xff]
        %v2554 = vld [vmem:[%s338 + $0x4c0] sm:$0xff]
        %v2555 = vld [vmem:[%s338 + $0x4c8] sm:$0xff]
        %v2556 = vld [vmem:[%s338 + $0x4d0] sm:$0xff]
        %v2557 = vld [vmem:[%s338 + $0x4d8] sm:$0xff]
        %v2558 = vld [vmem:[%s338 + $0x4e0] sm:$0xff]
        %v2559 = vld [vmem:[%s338 + $0x4e8] sm:$0xff]
        %v2560 = vld [vmem:[%s338 + $0x4f0] sm:$0xff]
        %v2561 = vld [vmem:[%s338 + $0x4f8] sm:$0xff]
        %v2562 = vld [vmem:[%s338 + $0x500] sm:$0xff]
        %v2563 = vld [vmem:[%s338 + $0x508] sm:$0xff]
        %v2564 = vld [vmem:[%s338 + $0x510] sm:$0xff]
        %v2565 = vld [vmem:[%s338 + $0x518] sm:$0xff]
        %v2566 = vld [vmem:[%s338 + $0x520] sm:$0xff]
        %v2567 = vld [vmem:[%s338 + $0x528] sm:$0xff]
        %v2568 = vld [vmem:[%s338 + $0x530] sm:$0xff]
        %v2569 = vld [vmem:[%s338 + $0x538] sm:$0xff]
        %v2570 = vld [vmem:[%s338 + $0x540] sm:$0xff]
        %v2571 = vld [vmem:[%s338 + $0x548] sm:$0xff]
        %v2572 = vld [vmem:[%s338 + $0x550] sm:$0xff]
        %v2573 = vld [vmem:[%s338 + $0x558] sm:$0xff]
        %v2574 = vld [vmem:[%s338 + $0x560] sm:$0xff]
        %v2575 = vld [vmem:[%s338 + $0x568] sm:$0xff]
        %v2576 = vld [vmem:[%s338 + $0x570] sm:$0xff]
        %v2577 = vld [vmem:[%s338 + $0x578] sm:$0xff]
        %v2578 = vld [vmem:[%s338 + $0x580] sm:$0xff]
        %v2579 = vld [vmem:[%s338 + $0x588] sm:$0xff]
        %v2580 = vld [vmem:[%s338 + $0x590] sm:$0xff]
        %v2581 = vld [vmem:[%s338 + $0x598] sm:$0xff]
        %v2582 = vld [vmem:[%s338 + $0x5a0] sm:$0xff]
        %v2583 = vld [vmem:[%s338 + $0x5a8] sm:$0xff]
        %v2584 = vld [vmem:[%s338 + $0x5b0] sm:$0xff]
        %v2585 = vld [vmem:[%s338 + $0x5b8] sm:$0xff]
        %v2586 = vld [vmem:[%s338 + $0x5c0] sm:$0xff]
        %v2587 = vld [vmem:[%s338 + $0x5c8] sm:$0xff]
        %v2588 = vld [vmem:[%s338 + $0x5d0] sm:$0xff]
        %v2589 = vld [vmem:[%s338 + $0x5d8] sm:$0xff]
        %v2590 = vld [vmem:[%s338 + $0x5e0] sm:$0xff]
        %v2591 = vld [vmem:[%s338 + $0x5e8] sm:$0xff]
        %v2592 = vld [vmem:[%s338 + $0x5f0] sm:$0xff]
        %v2593 = vld [vmem:[%s338 + $0x5f8] sm:$0xff]
        %v2594 = vld [vmem:[%s338 + $0x600] sm:$0xff]
        %v2595 = vld [vmem:[%s338 + $0x608] sm:$0xff]
        %v2596 = vld [vmem:[%s338 + $0x610] sm:$0xff]
        %v2597 = vld [vmem:[%s338 + $0x618] sm:$0xff]
        %v2598 = vld [vmem:[%s338 + $0x620] sm:$0xff]
        %v2599 = vld [vmem:[%s338 + $0x628] sm:$0xff]
        %v2600 = vld [vmem:[%s338 + $0x630] sm:$0xff]
        %v2601 = vld [vmem:[%s338 + $0x638] sm:$0xff]
        %v2602 = vld [vmem:[%s338 + $0x640] sm:$0xff]
        %v2603 = vld [vmem:[%s338 + $0x648] sm:$0xff]
        %v2604 = vld [vmem:[%s338 + $0x650] sm:$0xff]
        %v2605 = vld [vmem:[%s338 + $0x658] sm:$0xff]
        %v2606 = vld [vmem:[%s338 + $0x660] sm:$0xff]
        %v2607 = vld [vmem:[%s338 + $0x668] sm:$0xff]
        %v2608 = vld [vmem:[%s338 + $0x670] sm:$0xff]
        %v2609 = vld [vmem:[%s338 + $0x678] sm:$0xff]
        %v2610 = vld [vmem:[%s338 + $0x680] sm:$0xff]
        %v2611 = vld [vmem:[%s338 + $0x688] sm:$0xff]
        %v2612 = vld [vmem:[%s338 + $0x690] sm:$0xff]
        %v2613 = vld [vmem:[%s338 + $0x698] sm:$0xff]
        %v2614 = vld [vmem:[%s338 + $0x6a0] sm:$0xff]
        %v2615 = vld [vmem:[%s338 + $0x6a8] sm:$0xff]
        %v2616 = vld [vmem:[%s338 + $0x6b0] sm:$0xff]
        %v2617 = vld [vmem:[%s338 + $0x6b8] sm:$0xff]
        %v2618 = vld [vmem:[%s338 + $0x6c0] sm:$0xff]
        %v2619 = vld [vmem:[%s338 + $0x6c8] sm:$0xff]
        %v2620 = vld [vmem:[%s338 + $0x6d0] sm:$0xff]
        %v2621 = vld [vmem:[%s338 + $0x6d8] sm:$0xff]
        %v2622 = vld [vmem:[%s338 + $0x6e0] sm:$0xff]
        %v2623 = vld [vmem:[%s338 + $0x6e8] sm:$0xff]
        %v2624 = vld [vmem:[%s338 + $0x6f0] sm:$0xff]
        %v2625 = vld [vmem:[%s338 + $0x6f8] sm:$0xff]
        %v2626 = vld [vmem:[%s338 + $0x700] sm:$0xff]
        %v2627 = vld [vmem:[%s338 + $0x708] sm:$0xff]
        %v2628 = vld [vmem:[%s338 + $0x710] sm:$0xff]
        %v2629 = vld [vmem:[%s338 + $0x718] sm:$0xff]
        %v2630 = vld [vmem:[%s338 + $0x720] sm:$0xff]
        %v2631 = vld [vmem:[%s338 + $0x728] sm:$0xff]
        %v2632 = vld [vmem:[%s338 + $0x730] sm:$0xff]
        %v2633 = vld [vmem:[%s338 + $0x738] sm:$0xff]
        %v2634 = vld [vmem:[%s338 + $0x740] sm:$0xff]
        %v2635 = vld [vmem:[%s338 + $0x748] sm:$0xff]
        %v2636 = vld [vmem:[%s338 + $0x750] sm:$0xff]
        %v2637 = vld [vmem:[%s338 + $0x758] sm:$0xff]
        %v2638 = vld [vmem:[%s338 + $0x760] sm:$0xff]
        %v2639 = vld [vmem:[%s338 + $0x768] sm:$0xff]
        %v2640 = vld [vmem:[%s338 + $0x770] sm:$0xff]
        %v2641 = vld [vmem:[%s338 + $0x778] sm:$0xff]
        %v2642 = vld [vmem:[%s338 + $0x780] sm:$0xff]
        %v2643 = vld [vmem:[%s338 + $0x788] sm:$0xff]
        %v2644 = vld [vmem:[%s338 + $0x790] sm:$0xff]
        %v2645 = vld [vmem:[%s338 + $0x798] sm:$0xff]
        %v2646 = vld [vmem:[%s338 + $0x7a0] sm:$0xff]
        %v2647 = vld [vmem:[%s338 + $0x7a8] sm:$0xff]
        %v2648 = vld [vmem:[%s338 + $0x7b0] sm:$0xff]
        %v2649 = vld [vmem:[%s338 + $0x7b8] sm:$0xff]
        %v2650 = vld [vmem:[%s338 + $0x7c0] sm:$0xff]
        %v2651 = vld [vmem:[%s338 + $0x7c8] sm:$0xff]
        %v2652 = vld [vmem:[%s338 + $0x7d0] sm:$0xff]
        %v2653 = vld [vmem:[%s338 + $0x7d8] sm:$0xff]
        %v2654 = vld [vmem:[%s338 + $0x7e0] sm:$0xff]
        %v2655 = vld [vmem:[%s338 + $0x7e8] sm:$0xff]
        %v2656 = vld [vmem:[%s338 + $0x7f0] sm:$0xff]
        %v2657 = vld [vmem:[%s338 + $0x7f8] sm:$0xff]
        %v2658 = vld [vmem:[%s338 + $0x800] sm:$0xff]
        %v2659 = vld [vmem:[%s338 + $0x808] sm:$0xff]
        %v2660 = vld [vmem:[%s338 + $0x810] sm:$0xff]
        %v2661 = vld [vmem:[%s338 + $0x818] sm:$0xff]
        %v2662 = vld [vmem:[%s338 + $0x820] sm:$0xff]
        %v2663 = vld [vmem:[%s338 + $0x828] sm:$0xff]
        %v2664 = vld [vmem:[%s338 + $0x830] sm:$0xff]
        %v2665 = vld [vmem:[%s338 + $0x838] sm:$0xff]
        %v2666 = vld [vmem:[%s338 + $0x840] sm:$0xff]
        %v2667 = vld [vmem:[%s338 + $0x848] sm:$0xff]
        %v2668 = vld [vmem:[%s338 + $0x850] sm:$0xff]
        %v2669 = vld [vmem:[%s338 + $0x858] sm:$0xff]
        %v2670 = vld [vmem:[%s338 + $0x860] sm:$0xff]
        %v2671 = vld [vmem:[%s338 + $0x868] sm:$0xff]
        %v2672 = vld [vmem:[%s338 + $0x870] sm:$0xff]
        %v2673 = vld [vmem:[%s338 + $0x878] sm:$0xff]
        %v2674 = vld [vmem:[%s338 + $0x880] sm:$0xff]
        %v2675 = vld [vmem:[%s338 + $0x888] sm:$0xff]
        %v2676 = vld [vmem:[%s338 + $0x890] sm:$0xff]
        %v2677 = vld [vmem:[%s338 + $0x898] sm:$0xff]
        %v2678 = vld [vmem:[%s338 + $0x8a0] sm:$0xff]
        %v2679 = vld [vmem:[%s338 + $0x8a8] sm:$0xff]
        %v2680 = vld [vmem:[%s338 + $0x8b0] sm:$0xff]
        %v2681 = vld [vmem:[%s338 + $0x8b8] sm:$0xff]
        %v2682 = vld [vmem:[%s338 + $0x8c0] sm:$0xff]
        %v2683 = vld [vmem:[%s338 + $0x8c8] sm:$0xff]
        %v2684 = vld [vmem:[%s338 + $0x8d0] sm:$0xff]
        %v2685 = vld [vmem:[%s338 + $0x8d8] sm:$0xff]
        %v2686 = vld [vmem:[%s338 + $0x8e0] sm:$0xff]
        %v2687 = vld [vmem:[%s338 + $0x8e8] sm:$0xff]
        %v2688 = vld [vmem:[%s338 + $0x8f0] sm:$0xff]
        %v2689 = vld [vmem:[%s338 + $0x8f8] sm:$0xff]
        %v2690 = vld [vmem:[%s338 + $0x900] sm:$0xff]
        %v2691 = vld [vmem:[%s338 + $0x908] sm:$0xff]
        %v2692 = vld [vmem:[%s338 + $0x910] sm:$0xff]
        %v2693 = vld [vmem:[%s338 + $0x918] sm:$0xff]
        %v2694 = vld [vmem:[%s338 + $0x920] sm:$0xff]
        %v2695 = vld [vmem:[%s338 + $0x928] sm:$0xff]
        %v2696 = vld [vmem:[%s338 + $0x930] sm:$0xff]
        %v2697 = vld [vmem:[%s338 + $0x938] sm:$0xff]
        %v2698 = vld [vmem:[%s338 + $0x940] sm:$0xff]
        %v2699 = vld [vmem:[%s338 + $0x948] sm:$0xff]
        %v2700 = vld [vmem:[%s338 + $0x950] sm:$0xff]
        %v2701 = vld [vmem:[%s338 + $0x958] sm:$0xff]
        %v2702 = vld [vmem:[%s338 + $0x960] sm:$0xff]
        %v2703 = vld [vmem:[%s338 + $0x968] sm:$0xff]
        %v2704 = vld [vmem:[%s338 + $0x970] sm:$0xff]
        %v2705 = vld [vmem:[%s338 + $0x978] sm:$0xff]
        %v2706 = vld [vmem:[%s338 + $0x980] sm:$0xff]
        %v2707 = vld [vmem:[%s338 + $0x988] sm:$0xff]
        %v2708 = vld [vmem:[%s338 + $0x990] sm:$0xff]
        %v2709 = vld [vmem:[%s338 + $0x998] sm:$0xff]
        %v2710 = vld [vmem:[%s338 + $0x9a0] sm:$0xff]
        %v2711 = vld [vmem:[%s338 + $0x9a8] sm:$0xff]
        %v2712 = vld [vmem:[%s338 + $0x9b0] sm:$0xff]
        %v2713 = vld [vmem:[%s338 + $0x9b8] sm:$0xff]
        %v2714 = vld [vmem:[%s338 + $0x9c0] sm:$0xff]
        %v2715 = vld [vmem:[%s338 + $0x9c8] sm:$0xff]
        %v2716 = vld [vmem:[%s338 + $0x9d0] sm:$0xff]
        %v2717 = vld [vmem:[%s338 + $0x9d8] sm:$0xff]
        %v2718 = vld [vmem:[%s338 + $0x9e0] sm:$0xff]
        %v2719 = vld [vmem:[%s338 + $0x9e8] sm:$0xff]
        %v2720 = vld [vmem:[%s338 + $0x9f0] sm:$0xff]
        %v2721 = vld [vmem:[%s338 + $0x9f8] sm:$0xff]
        %v2722 = vld [vmem:[%s338 + $0xa00] sm:$0xff]
        %v2723 = vld [vmem:[%s338 + $0xa08] sm:$0xff]
        %v2724 = vld [vmem:[%s338 + $0xa10] sm:$0xff]
        %v2725 = vld [vmem:[%s338 + $0xa18] sm:$0xff]
        %v2726 = vld [vmem:[%s338 + $0xa20] sm:$0xff]
        %v2727 = vld [vmem:[%s338 + $0xa28] sm:$0xff]
        %v2728 = vld [vmem:[%s338 + $0xa30] sm:$0xff]
        %v2729 = vld [vmem:[%s338 + $0xa38] sm:$0xff]
        %v2730 = vld [vmem:[%s338 + $0xa40] sm:$0xff]
        %v2731 = vld [vmem:[%s338 + $0xa48] sm:$0xff]
        %v2732 = vld [vmem:[%s338 + $0xa50] sm:$0xff]
        %v2733 = vld [vmem:[%s338 + $0xa58] sm:$0xff]
        %v2734 = vld [vmem:[%s338 + $0xa60] sm:$0xff]
        %v2735 = vld [vmem:[%s338 + $0xa68] sm:$0xff]
        %v2736 = vld [vmem:[%s338 + $0xa70] sm:$0xff]
        %v2737 = vld [vmem:[%s338 + $0xa78] sm:$0xff]
        %v2738 = vld [vmem:[%s338 + $0xa80] sm:$0xff]
        %v2739 = vld [vmem:[%s338 + $0xa88] sm:$0xff]
        %v2740 = vld [vmem:[%s338 + $0xa90] sm:$0xff]
        %v2741 = vld [vmem:[%s338 + $0xa98] sm:$0xff]
        %v2742 = vld [vmem:[%s338 + $0xaa0] sm:$0xff]
        %v2743 = vld [vmem:[%s338 + $0xaa8] sm:$0xff]
        %v2744 = vld [vmem:[%s338 + $0xab0] sm:$0xff]
        %v2745 = vld [vmem:[%s338 + $0xab8] sm:$0xff]
        %v2746 = vld [vmem:[%s338 + $0xac0] sm:$0xff]
        %v2747 = vld [vmem:[%s338 + $0xac8] sm:$0xff]
        %v2748 = vld [vmem:[%s338 + $0xad0] sm:$0xff]
        %v2749 = vld [vmem:[%s338 + $0xad8] sm:$0xff]
        %v2750 = vld [vmem:[%s338 + $0xae0] sm:$0xff]
        %v2751 = vld [vmem:[%s338 + $0xae8] sm:$0xff]
        %v2752 = vld [vmem:[%s338 + $0xaf0] sm:$0xff]
        %v2753 = vld [vmem:[%s338 + $0xaf8] sm:$0xff]
        %v2754 = vld [vmem:[%s338 + $0xb00] sm:$0xff]
        %v2755 = vld [vmem:[%s338 + $0xb08] sm:$0xff]
        %v2756 = vld [vmem:[%s338 + $0xb10] sm:$0xff]
        %v2757 = vld [vmem:[%s338 + $0xb18] sm:$0xff]
        %v2758 = vld [vmem:[%s338 + $0xb20] sm:$0xff]
        %v2759 = vld [vmem:[%s338 + $0xb28] sm:$0xff]
        %v2760 = vld [vmem:[%s338 + $0xb30] sm:$0xff]
        %v2761 = vld [vmem:[%s338 + $0xb38] sm:$0xff]
        %v2762 = vld [vmem:[%s338 + $0xb40] sm:$0xff]
        %v2763 = vld [vmem:[%s338 + $0xb48] sm:$0xff]
        %v2764 = vld [vmem:[%s338 + $0xb50] sm:$0xff]
        %v2765 = vld [vmem:[%s338 + $0xb58] sm:$0xff]
        %v2766 = vld [vmem:[%s338 + $0xb60] sm:$0xff]
        %v2767 = vld [vmem:[%s338 + $0xb68] sm:$0xff]
        %v2768 = vld [vmem:[%s338 + $0xb70] sm:$0xff]
        %v2769 = vld [vmem:[%s338 + $0xb78] sm:$0xff]
        %v2770 = vld [vmem:[%s338 + $0xb80] sm:$0xff]
        %v2771 = vld [vmem:[%s338 + $0xb88] sm:$0xff]
        %v2772 = vld [vmem:[%s338 + $0xb90] sm:$0xff]
        %v2773 = vld [vmem:[%s338 + $0xb98] sm:$0xff]
        %v2774 = vld [vmem:[%s338 + $0xba0] sm:$0xff]
        %v2775 = vld [vmem:[%s338 + $0xba8] sm:$0xff]
        %v2776 = vld [vmem:[%s338 + $0xbb0] sm:$0xff]
        %v2777 = vld [vmem:[%s338 + $0xbb8] sm:$0xff]
        %v2778 = vld [vmem:[%s338 + $0xbc0] sm:$0xff]
        %v2779 = vld [vmem:[%s338 + $0xbc8] sm:$0xff]
        %v2780 = vld [vmem:[%s338 + $0xbd0] sm:$0xff]
        %v2781 = vld [vmem:[%s338 + $0xbd8] sm:$0xff]
        %v2782 = vld [vmem:[%s338 + $0xbe0] sm:$0xff]
        %v2783 = vld [vmem:[%s338 + $0xbe8] sm:$0xff]
        %v2784 = vld [vmem:[%s338 + $0xbf0] sm:$0xff]
        %v2785 = vld [vmem:[%s338 + $0xbf8] sm:$0xff]
        %v2786 = vld [vmem:[%s338 + $0xc00] sm:$0xff]
        %v2787 = vld [vmem:[%s338 + $0xc08] sm:$0xff]
        %v2788 = vld [vmem:[%s338 + $0xc10] sm:$0xff]
        %v2789 = vld [vmem:[%s338 + $0xc18] sm:$0xff]
        %v2790 = vld [vmem:[%s338 + $0xc20] sm:$0xff]
        %v2791 = vld [vmem:[%s338 + $0xc28] sm:$0xff]
        %v2792 = vld [vmem:[%s338 + $0xc30] sm:$0xff]
        %v2793 = vld [vmem:[%s338 + $0xc38] sm:$0xff]
        %v2794 = vld [vmem:[%s338 + $0xc40] sm:$0xff]
        %v2795 = vld [vmem:[%s338 + $0xc48] sm:$0xff]
        %v2796 = vld [vmem:[%s338 + $0xc50] sm:$0xff]
        %v2797 = vld [vmem:[%s338 + $0xc58] sm:$0xff]
        %v2798 = vld [vmem:[%s338 + $0xc60] sm:$0xff]
        %v2799 = vld [vmem:[%s338 + $0xc68] sm:$0xff]
        %v2800 = vld [vmem:[%s338 + $0xc70] sm:$0xff]
        %v2801 = vld [vmem:[%s338 + $0xc78] sm:$0xff]
        %v2802 = vld [vmem:[%s338 + $0xc80] sm:$0xff]
        %v2803 = vld [vmem:[%s338 + $0xc88] sm:$0xff]
        %v2804 = vld [vmem:[%s338 + $0xc90] sm:$0xff]
        %v2805 = vld [vmem:[%s338 + $0xc98] sm:$0xff]
        %v2806 = vld [vmem:[%s338 + $0xca0] sm:$0xff]
        %v2807 = vld [vmem:[%s338 + $0xca8] sm:$0xff]
        %v2808 = vld [vmem:[%s338 + $0xcb0] sm:$0xff]
        %v2809 = vld [vmem:[%s338 + $0xcb8] sm:$0xff]
        %v2810 = vld [vmem:[%s338 + $0xcc0] sm:$0xff]
        %v2811 = vld [vmem:[%s338 + $0xcc8] sm:$0xff]
        %v2812 = vld [vmem:[%s338 + $0xcd0] sm:$0xff]
        %v2813 = vld [vmem:[%s338 + $0xcd8] sm:$0xff]
        %v2814 = vld [vmem:[%s338 + $0xce0] sm:$0xff]
        %v2815 = vld [vmem:[%s338 + $0xce8] sm:$0xff]
        %v2816 = vld [vmem:[%s338 + $0xcf0] sm:$0xff]
        %v2817 = vld [vmem:[%s338 + $0xcf8] sm:$0xff]
        %v2818 = vld [vmem:[%s338 + $0xd00] sm:$0xff]
        %v2819 = vld [vmem:[%s338 + $0xd08] sm:$0xff]
        %v2820 = vld [vmem:[%s338 + $0xd10] sm:$0xff]
        %v2821 = vld [vmem:[%s338 + $0xd18] sm:$0xff]
        %v2822 = vld [vmem:[%s338 + $0xd20] sm:$0xff]
        %v2823 = vld [vmem:[%s338 + $0xd28] sm:$0xff]
        %v2824 = vld [vmem:[%s338 + $0xd30] sm:$0xff]
        %v2825 = vld [vmem:[%s338 + $0xd38] sm:$0xff]
        %v2826 = vld [vmem:[%s338 + $0xd40] sm:$0xff]
        %v2827 = vld [vmem:[%s338 + $0xd48] sm:$0xff]
        %v2828 = vld [vmem:[%s338 + $0xd50] sm:$0xff]
        %v2829 = vld [vmem:[%s338 + $0xd58] sm:$0xff]
        %v2830 = vld [vmem:[%s338 + $0xd60] sm:$0xff]
        %v2831 = vld [vmem:[%s338 + $0xd68] sm:$0xff]
        %v2832 = vld [vmem:[%s338 + $0xd70] sm:$0xff]
        %v2833 = vld [vmem:[%s338 + $0xd78] sm:$0xff]
        %v2834 = vld [vmem:[%s338 + $0xd80] sm:$0xff]
        %v2835 = vld [vmem:[%s338 + $0xd88] sm:$0xff]
        %v2836 = vld [vmem:[%s338 + $0xd90] sm:$0xff]
        %v2837 = vld [vmem:[%s338 + $0xd98] sm:$0xff]
        %v2838 = vld [vmem:[%s338 + $0xda0] sm:$0xff]
        %v2839 = vld [vmem:[%s338 + $0xda8] sm:$0xff]
        %v2840 = vld [vmem:[%s338 + $0xdb0] sm:$0xff]
        %v2841 = vld [vmem:[%s338 + $0xdb8] sm:$0xff]
        %v2842 = vld [vmem:[%s338 + $0xdc0] sm:$0xff]
        %v2843 = vld [vmem:[%s338 + $0xdc8] sm:$0xff]
        %v2844 = vld [vmem:[%s338 + $0xdd0] sm:$0xff]
        %v2845 = vld [vmem:[%s338 + $0xdd8] sm:$0xff]
        %v2846 = vld [vmem:[%s338 + $0xde0] sm:$0xff]
        %v2847 = vld [vmem:[%s338 + $0xde8] sm:$0xff]
        %v2848 = vld [vmem:[%s338 + $0xdf0] sm:$0xff]
        %v2849 = vld [vmem:[%s338 + $0xdf8] sm:$0xff]
        %v2850 = vld [vmem:[%s338 + $0xe00] sm:$0xff]
        %v2851 = vld [vmem:[%s338 + $0xe08] sm:$0xff]
        %v2852 = vld [vmem:[%s338 + $0xe10] sm:$0xff]
        %v2853 = vld [vmem:[%s338 + $0xe18] sm:$0xff]
        %v2854 = vld [vmem:[%s338 + $0xe20] sm:$0xff]
        %v2855 = vld [vmem:[%s338 + $0xe28] sm:$0xff]
        %v2856 = vld [vmem:[%s338 + $0xe30] sm:$0xff]
        %v2857 = vld [vmem:[%s338 + $0xe38] sm:$0xff]
        %v2858 = vld [vmem:[%s338 + $0xe40] sm:$0xff]
        %v2859 = vld [vmem:[%s338 + $0xe48] sm:$0xff]
        %v2860 = vld [vmem:[%s338 + $0xe50] sm:$0xff]
        %v2861 = vld [vmem:[%s338 + $0xe58] sm:$0xff]
        %v2862 = vld [vmem:[%s338 + $0xe60] sm:$0xff]
        %v2863 = vld [vmem:[%s338 + $0xe68] sm:$0xff]
        %v2864 = vld [vmem:[%s338 + $0xe70] sm:$0xff]
        %v2865 = vld [vmem:[%s338 + $0xe78] sm:$0xff]
        %v2866 = vld [vmem:[%s338 + $0xe80] sm:$0xff]
        %v2867 = vld [vmem:[%s338 + $0xe88] sm:$0xff]
        %v2868 = vld [vmem:[%s338 + $0xe90] sm:$0xff]
        %v2869 = vld [vmem:[%s338 + $0xe98] sm:$0xff]
        %v2870 = vld [vmem:[%s338 + $0xea0] sm:$0xff]
        %v2871 = vld [vmem:[%s338 + $0xea8] sm:$0xff]
        %v2872 = vld [vmem:[%s338 + $0xeb0] sm:$0xff]
        %v2873 = vld [vmem:[%s338 + $0xeb8] sm:$0xff]
        %v2874 = vld [vmem:[%s338 + $0xec0] sm:$0xff]
        %v2875 = vld [vmem:[%s338 + $0xec8] sm:$0xff]
        %v2876 = vld [vmem:[%s338 + $0xed0] sm:$0xff]
        %v2877 = vld [vmem:[%s338 + $0xed8] sm:$0xff]
        %v2878 = vld [vmem:[%s338 + $0xee0] sm:$0xff]
        %v2879 = vld [vmem:[%s338 + $0xee8] sm:$0xff]
        %v2880 = vld [vmem:[%s338 + $0xef0] sm:$0xff]
        %v2881 = vld [vmem:[%s338 + $0xef8] sm:$0xff]
        %v2882 = vld [vmem:[%s338 + $0xf00] sm:$0xff]
        %v2883 = vld [vmem:[%s338 + $0xf08] sm:$0xff]
        %v2884 = vld [vmem:[%s338 + $0xf10] sm:$0xff]
        %v2885 = vld [vmem:[%s338 + $0xf18] sm:$0xff]
        %v2886 = vld [vmem:[%s338 + $0xf20] sm:$0xff]
        %v2887 = vld [vmem:[%s338 + $0xf28] sm:$0xff]
        %v2888 = vld [vmem:[%s338 + $0xf30] sm:$0xff]
        %v2889 = vld [vmem:[%s338 + $0xf38] sm:$0xff]
        %v2890 = vld [vmem:[%s338 + $0xf40] sm:$0xff]
        %v2891 = vld [vmem:[%s338 + $0xf48] sm:$0xff]
        %v2892 = vld [vmem:[%s338 + $0xf50] sm:$0xff]
        %v2893 = vld [vmem:[%s338 + $0xf58] sm:$0xff]
        %v2894 = vld [vmem:[%s338 + $0xf60] sm:$0xff]
        %v2895 = vld [vmem:[%s338 + $0xf68] sm:$0xff]
        %v2896 = vld [vmem:[%s338 + $0xf70] sm:$0xff]
        %v2897 = vld [vmem:[%s338 + $0xf78] sm:$0xff]
        %v2898 = vld [vmem:[%s338 + $0xf80] sm:$0xff]
        %v2899 = vld [vmem:[%s338 + $0xf88] sm:$0xff]
        %v2900 = vld [vmem:[%s338 + $0xf90] sm:$0xff]
        %v2901 = vld [vmem:[%s338 + $0xf98] sm:$0xff]
        %v2902 = vld [vmem:[%s338 + $0xfa0] sm:$0xff]
        %v2903 = vld [vmem:[%s338 + $0xfa8] sm:$0xff]
        %v2904 = vld [vmem:[%s338 + $0xfb0] sm:$0xff]
        %v2905 = vld [vmem:[%s338 + $0xfb8] sm:$0xff]
        %v2906 = vld [vmem:[%s338 + $0xfc0] sm:$0xff]
        %v2907 = vld [vmem:[%s338 + $0xfc8] sm:$0xff]
        %v2908 = vld [vmem:[%s338 + $0xfd0] sm:$0xff]
        %v2909 = vld [vmem:[%s338 + $0xfd8] sm:$0xff]
        %v2910 = vld [vmem:[%s338 + $0xfe0] sm:$0xff]
        %v2911 = vld [vmem:[%s338 + $0xfe8] sm:$0xff]
        %v2912 = vld [vmem:[%s338 + $0xff0] sm:$0xff]
        %v2913 = vld [vmem:[%s338 + $0xff8] sm:$0xff]
        %s2914 = smul.u32 %s25, 8
        %s2915 = scalar_lea.vmem [#allocation11], %s2914
        %v2916 = vld [vmem:[%s2915] sm:$0xff]
        %v2918 = vperm.slane %v2916, 0
        %v2919 = vperm.slane %v2916, 1
        %v2920 = vperm.slane %v2916, 2
        %v2921 = vperm.slane %v2916, 3
        %v2922 = vperm.slane %v2916, 4
        %v2923 = vperm.slane %v2916, 5
        %v2924 = vperm.slane %v2916, 6
        %v2925 = vperm.slane %v2916, 7
        %v3446 = vunpack.c.l.b16 %v2402
        %v3447 = vunpack.c.h.b16 %v2402
        %v3448 = vunpack.c.l.b16 %v2403
        %v3449 = vunpack.c.h.b16 %v2403
        %v3450 = vunpack.c.l.b16 %v2404
        %v3451 = vunpack.c.h.b16 %v2404
        %v3452 = vunpack.c.l.b16 %v2405
        %v3453 = vunpack.c.h.b16 %v2405
        %v3454 = vunpack.c.l.b16 %v2406
        %v3455 = vunpack.c.h.b16 %v2406
        %v3456 = vunpack.c.l.b16 %v2407
        %v3457 = vunpack.c.h.b16 %v2407
        %v3458 = vunpack.c.l.b16 %v2408
        %v3459 = vunpack.c.h.b16 %v2408
        %v3460 = vunpack.c.l.b16 %v2409
        %v3461 = vunpack.c.h.b16 %v2409
        %v3462 = vunpack.c.l.b16 %v2410
        %v3463 = vunpack.c.h.b16 %v2410
        %v3464 = vunpack.c.l.b16 %v2411
        %v3465 = vunpack.c.h.b16 %v2411
        %v3466 = vunpack.c.l.b16 %v2412
        %v3467 = vunpack.c.h.b16 %v2412
        %v3468 = vunpack.c.l.b16 %v2413
        %v3469 = vunpack.c.h.b16 %v2413
        %v3470 = vunpack.c.l.b16 %v2414
        %v3471 = vunpack.c.h.b16 %v2414
        %v3472 = vunpack.c.l.b16 %v2415
        %v3473 = vunpack.c.h.b16 %v2415
        %v3474 = vunpack.c.l.b16 %v2416
        %v3475 = vunpack.c.h.b16 %v2416
        %v3476 = vunpack.c.l.b16 %v2417
        %v3477 = vunpack.c.h.b16 %v2417
        %v3478 = vunpack.c.l.b16 %v2418
        %v3479 = vunpack.c.h.b16 %v2418
        %v3480 = vunpack.c.l.b16 %v2419
        %v3481 = vunpack.c.h.b16 %v2419
        %v3482 = vunpack.c.l.b16 %v2420
        %v3483 = vunpack.c.h.b16 %v2420
        %v3484 = vunpack.c.l.b16 %v2421
        %v3485 = vunpack.c.h.b16 %v2421
        %v3486 = vunpack.c.l.b16 %v2422
        %v3487 = vunpack.c.h.b16 %v2422
        %v3488 = vunpack.c.l.b16 %v2423
        %v3489 = vunpack.c.h.b16 %v2423
        %v3490 = vunpack.c.l.b16 %v2424
        %v3491 = vunpack.c.h.b16 %v2424
        %v3492 = vunpack.c.l.b16 %v2425
        %v3493 = vunpack.c.h.b16 %v2425
        %v3494 = vunpack.c.l.b16 %v2426
        %v3495 = vunpack.c.h.b16 %v2426
        %v3496 = vunpack.c.l.b16 %v2427
        %v3497 = vunpack.c.h.b16 %v2427
        %v3498 = vunpack.c.l.b16 %v2428
        %v3499 = vunpack.c.h.b16 %v2428
        %v3500 = vunpack.c.l.b16 %v2429
        %v3501 = vunpack.c.h.b16 %v2429
        %v3502 = vunpack.c.l.b16 %v2430
        %v3503 = vunpack.c.h.b16 %v2430
        %v3504 = vunpack.c.l.b16 %v2431
        %v3505 = vunpack.c.h.b16 %v2431
        %v3506 = vunpack.c.l.b16 %v2432
        %v3507 = vunpack.c.h.b16 %v2432
        %v3508 = vunpack.c.l.b16 %v2433
        %v3509 = vunpack.c.h.b16 %v2433
        %v3510 = vunpack.c.l.b16 %v2434
        %v3511 = vunpack.c.h.b16 %v2434
        %v3512 = vunpack.c.l.b16 %v2435
        %v3513 = vunpack.c.h.b16 %v2435
        %v3514 = vunpack.c.l.b16 %v2436
        %v3515 = vunpack.c.h.b16 %v2436
        %v3516 = vunpack.c.l.b16 %v2437
        %v3517 = vunpack.c.h.b16 %v2437
        %v3518 = vunpack.c.l.b16 %v2438
        %v3519 = vunpack.c.h.b16 %v2438
        %v3520 = vunpack.c.l.b16 %v2439
        %v3521 = vunpack.c.h.b16 %v2439
        %v3522 = vunpack.c.l.b16 %v2440
        %v3523 = vunpack.c.h.b16 %v2440
        %v3524 = vunpack.c.l.b16 %v2441
        %v3525 = vunpack.c.h.b16 %v2441
        %v3526 = vunpack.c.l.b16 %v2442
        %v3527 = vunpack.c.h.b16 %v2442
        %v3528 = vunpack.c.l.b16 %v2443
        %v3529 = vunpack.c.h.b16 %v2443
        %v3530 = vunpack.c.l.b16 %v2444
        %v3531 = vunpack.c.h.b16 %v2444
        %v3532 = vunpack.c.l.b16 %v2445
        %v3533 = vunpack.c.h.b16 %v2445
        %v3534 = vunpack.c.l.b16 %v2446
        %v3535 = vunpack.c.h.b16 %v2446
        %v3536 = vunpack.c.l.b16 %v2447
        %v3537 = vunpack.c.h.b16 %v2447
        %v3538 = vunpack.c.l.b16 %v2448
        %v3539 = vunpack.c.h.b16 %v2448
        %v3540 = vunpack.c.l.b16 %v2449
        %v3541 = vunpack.c.h.b16 %v2449
        %v3542 = vunpack.c.l.b16 %v2450
        %v3543 = vunpack.c.h.b16 %v2450
        %v3544 = vunpack.c.l.b16 %v2451
        %v3545 = vunpack.c.h.b16 %v2451
        %v3546 = vunpack.c.l.b16 %v2452
        %v3547 = vunpack.c.h.b16 %v2452
        %v3548 = vunpack.c.l.b16 %v2453
        %v3549 = vunpack.c.h.b16 %v2453
        %v3550 = vunpack.c.l.b16 %v2454
        %v3551 = vunpack.c.h.b16 %v2454
        %v3552 = vunpack.c.l.b16 %v2455
        %v3553 = vunpack.c.h.b16 %v2455
        %v3554 = vunpack.c.l.b16 %v2456
        %v3555 = vunpack.c.h.b16 %v2456
        %v3556 = vunpack.c.l.b16 %v2457
        %v3557 = vunpack.c.h.b16 %v2457
        %v3558 = vunpack.c.l.b16 %v2458
        %v3559 = vunpack.c.h.b16 %v2458
        %v3560 = vunpack.c.l.b16 %v2459
        %v3561 = vunpack.c.h.b16 %v2459
        %v3562 = vunpack.c.l.b16 %v2460
        %v3563 = vunpack.c.h.b16 %v2460
        %v3564 = vunpack.c.l.b16 %v2461
        %v3565 = vunpack.c.h.b16 %v2461
        %v3566 = vunpack.c.l.b16 %v2462
        %v3567 = vunpack.c.h.b16 %v2462
        %v3568 = vunpack.c.l.b16 %v2463
        %v3569 = vunpack.c.h.b16 %v2463
        %v3570 = vunpack.c.l.b16 %v2464
        %v3571 = vunpack.c.h.b16 %v2464
        %v3572 = vunpack.c.l.b16 %v2465
        %v3573 = vunpack.c.h.b16 %v2465
        %v3574 = vunpack.c.l.b16 %v2466
        %v3575 = vunpack.c.h.b16 %v2466
        %v3576 = vunpack.c.l.b16 %v2467
        %v3577 = vunpack.c.h.b16 %v2467
        %v3578 = vunpack.c.l.b16 %v2468
        %v3579 = vunpack.c.h.b16 %v2468
        %v3580 = vunpack.c.l.b16 %v2469
        %v3581 = vunpack.c.h.b16 %v2469
        %v3582 = vunpack.c.l.b16 %v2470
        %v3583 = vunpack.c.h.b16 %v2470
        %v3584 = vunpack.c.l.b16 %v2471
        %v3585 = vunpack.c.h.b16 %v2471
        %v3586 = vunpack.c.l.b16 %v2472
        %v3587 = vunpack.c.h.b16 %v2472
        %v3588 = vunpack.c.l.b16 %v2473
        %v3589 = vunpack.c.h.b16 %v2473
        %v3590 = vunpack.c.l.b16 %v2474
        %v3591 = vunpack.c.h.b16 %v2474
        %v3592 = vunpack.c.l.b16 %v2475
        %v3593 = vunpack.c.h.b16 %v2475
        %v3594 = vunpack.c.l.b16 %v2476
        %v3595 = vunpack.c.h.b16 %v2476
        %v3596 = vunpack.c.l.b16 %v2477
        %v3597 = vunpack.c.h.b16 %v2477
        %v3598 = vunpack.c.l.b16 %v2478
        %v3599 = vunpack.c.h.b16 %v2478
        %v3600 = vunpack.c.l.b16 %v2479
        %v3601 = vunpack.c.h.b16 %v2479
        %v3602 = vunpack.c.l.b16 %v2480
        %v3603 = vunpack.c.h.b16 %v2480
        %v3604 = vunpack.c.l.b16 %v2481
        %v3605 = vunpack.c.h.b16 %v2481
        %v3606 = vunpack.c.l.b16 %v2482
        %v3607 = vunpack.c.h.b16 %v2482
        %v3608 = vunpack.c.l.b16 %v2483
        %v3609 = vunpack.c.h.b16 %v2483
        %v3610 = vunpack.c.l.b16 %v2484
        %v3611 = vunpack.c.h.b16 %v2484
        %v3612 = vunpack.c.l.b16 %v2485
        %v3613 = vunpack.c.h.b16 %v2485
        %v3614 = vunpack.c.l.b16 %v2486
        %v3615 = vunpack.c.h.b16 %v2486
        %v3616 = vunpack.c.l.b16 %v2487
        %v3617 = vunpack.c.h.b16 %v2487
        %v3618 = vunpack.c.l.b16 %v2488
        %v3619 = vunpack.c.h.b16 %v2488
        %v3620 = vunpack.c.l.b16 %v2489
        %v3621 = vunpack.c.h.b16 %v2489
        %v3622 = vunpack.c.l.b16 %v2490
        %v3623 = vunpack.c.h.b16 %v2490
        %v3624 = vunpack.c.l.b16 %v2491
        %v3625 = vunpack.c.h.b16 %v2491
        %v3626 = vunpack.c.l.b16 %v2492
        %v3627 = vunpack.c.h.b16 %v2492
        %v3628 = vunpack.c.l.b16 %v2493
        %v3629 = vunpack.c.h.b16 %v2493
        %v3630 = vunpack.c.l.b16 %v2494
        %v3631 = vunpack.c.h.b16 %v2494
        %v3632 = vunpack.c.l.b16 %v2495
        %v3633 = vunpack.c.h.b16 %v2495
        %v3634 = vunpack.c.l.b16 %v2496
        %v3635 = vunpack.c.h.b16 %v2496
        %v3636 = vunpack.c.l.b16 %v2497
        %v3637 = vunpack.c.h.b16 %v2497
        %v3638 = vunpack.c.l.b16 %v2498
        %v3639 = vunpack.c.h.b16 %v2498
        %v3640 = vunpack.c.l.b16 %v2499
        %v3641 = vunpack.c.h.b16 %v2499
        %v3642 = vunpack.c.l.b16 %v2500
        %v3643 = vunpack.c.h.b16 %v2500
        %v3644 = vunpack.c.l.b16 %v2501
        %v3645 = vunpack.c.h.b16 %v2501
        %v3646 = vunpack.c.l.b16 %v2502
        %v3647 = vunpack.c.h.b16 %v2502
        %v3648 = vunpack.c.l.b16 %v2503
        %v3649 = vunpack.c.h.b16 %v2503
        %v3650 = vunpack.c.l.b16 %v2504
        %v3651 = vunpack.c.h.b16 %v2504
        %v3652 = vunpack.c.l.b16 %v2505
        %v3653 = vunpack.c.h.b16 %v2505
        %v3654 = vunpack.c.l.b16 %v2506
        %v3655 = vunpack.c.h.b16 %v2506
        %v3656 = vunpack.c.l.b16 %v2507
        %v3657 = vunpack.c.h.b16 %v2507
        %v3658 = vunpack.c.l.b16 %v2508
        %v3659 = vunpack.c.h.b16 %v2508
        %v3660 = vunpack.c.l.b16 %v2509
        %v3661 = vunpack.c.h.b16 %v2509
        %v3662 = vunpack.c.l.b16 %v2510
        %v3663 = vunpack.c.h.b16 %v2510
        %v3664 = vunpack.c.l.b16 %v2511
        %v3665 = vunpack.c.h.b16 %v2511
        %v3666 = vunpack.c.l.b16 %v2512
        %v3667 = vunpack.c.h.b16 %v2512
        %v3668 = vunpack.c.l.b16 %v2513
        %v3669 = vunpack.c.h.b16 %v2513
        %v3670 = vunpack.c.l.b16 %v2514
        %v3671 = vunpack.c.h.b16 %v2514
        %v3672 = vunpack.c.l.b16 %v2515
        %v3673 = vunpack.c.h.b16 %v2515
        %v3674 = vunpack.c.l.b16 %v2516
        %v3675 = vunpack.c.h.b16 %v2516
        %v3676 = vunpack.c.l.b16 %v2517
        %v3677 = vunpack.c.h.b16 %v2517
        %v3678 = vunpack.c.l.b16 %v2518
        %v3679 = vunpack.c.h.b16 %v2518
        %v3680 = vunpack.c.l.b16 %v2519
        %v3681 = vunpack.c.h.b16 %v2519
        %v3682 = vunpack.c.l.b16 %v2520
        %v3683 = vunpack.c.h.b16 %v2520
        %v3684 = vunpack.c.l.b16 %v2521
        %v3685 = vunpack.c.h.b16 %v2521
        %v3686 = vunpack.c.l.b16 %v2522
        %v3687 = vunpack.c.h.b16 %v2522
        %v3688 = vunpack.c.l.b16 %v2523
        %v3689 = vunpack.c.h.b16 %v2523
        %v3690 = vunpack.c.l.b16 %v2524
        %v3691 = vunpack.c.h.b16 %v2524
        %v3692 = vunpack.c.l.b16 %v2525
        %v3693 = vunpack.c.h.b16 %v2525
        %v3694 = vunpack.c.l.b16 %v2526
        %v3695 = vunpack.c.h.b16 %v2526
        %v3696 = vunpack.c.l.b16 %v2527
        %v3697 = vunpack.c.h.b16 %v2527
        %v3698 = vunpack.c.l.b16 %v2528
        %v3699 = vunpack.c.h.b16 %v2528
        %v3700 = vunpack.c.l.b16 %v2529
        %v3701 = vunpack.c.h.b16 %v2529
        %v3702 = vunpack.c.l.b16 %v2530
        %v3703 = vunpack.c.h.b16 %v2530
        %v3704 = vunpack.c.l.b16 %v2531
        %v3705 = vunpack.c.h.b16 %v2531
        %v3706 = vunpack.c.l.b16 %v2532
        %v3707 = vunpack.c.h.b16 %v2532
        %v3708 = vunpack.c.l.b16 %v2533
        %v3709 = vunpack.c.h.b16 %v2533
        %v3710 = vunpack.c.l.b16 %v2534
        %v3711 = vunpack.c.h.b16 %v2534
        %v3712 = vunpack.c.l.b16 %v2535
        %v3713 = vunpack.c.h.b16 %v2535
        %v3714 = vunpack.c.l.b16 %v2536
        %v3715 = vunpack.c.h.b16 %v2536
        %v3716 = vunpack.c.l.b16 %v2537
        %v3717 = vunpack.c.h.b16 %v2537
        %v3718 = vunpack.c.l.b16 %v2538
        %v3719 = vunpack.c.h.b16 %v2538
        %v3720 = vunpack.c.l.b16 %v2539
        %v3721 = vunpack.c.h.b16 %v2539
        %v3722 = vunpack.c.l.b16 %v2540
        %v3723 = vunpack.c.h.b16 %v2540
        %v3724 = vunpack.c.l.b16 %v2541
        %v3725 = vunpack.c.h.b16 %v2541
        %v3726 = vunpack.c.l.b16 %v2542
        %v3727 = vunpack.c.h.b16 %v2542
        %v3728 = vunpack.c.l.b16 %v2543
        %v3729 = vunpack.c.h.b16 %v2543
        %v3730 = vunpack.c.l.b16 %v2544
        %v3731 = vunpack.c.h.b16 %v2544
        %v3732 = vunpack.c.l.b16 %v2545
        %v3733 = vunpack.c.h.b16 %v2545
        %v3734 = vunpack.c.l.b16 %v2546
        %v3735 = vunpack.c.h.b16 %v2546
        %v3736 = vunpack.c.l.b16 %v2547
        %v3737 = vunpack.c.h.b16 %v2547
        %v3738 = vunpack.c.l.b16 %v2548
        %v3739 = vunpack.c.h.b16 %v2548
        %v3740 = vunpack.c.l.b16 %v2549
        %v3741 = vunpack.c.h.b16 %v2549
        %v3742 = vunpack.c.l.b16 %v2550
        %v3743 = vunpack.c.h.b16 %v2550
        %v3744 = vunpack.c.l.b16 %v2551
        %v3745 = vunpack.c.h.b16 %v2551
        %v3746 = vunpack.c.l.b16 %v2552
        %v3747 = vunpack.c.h.b16 %v2552
        %v3748 = vunpack.c.l.b16 %v2553
        %v3749 = vunpack.c.h.b16 %v2553
        %v3750 = vunpack.c.l.b16 %v2554
        %v3751 = vunpack.c.h.b16 %v2554
        %v3752 = vunpack.c.l.b16 %v2555
        %v3753 = vunpack.c.h.b16 %v2555
        %v3754 = vunpack.c.l.b16 %v2556
        %v3755 = vunpack.c.h.b16 %v2556
        %v3756 = vunpack.c.l.b16 %v2557
        %v3757 = vunpack.c.h.b16 %v2557
        %v3758 = vunpack.c.l.b16 %v2558
        %v3759 = vunpack.c.h.b16 %v2558
        %v3760 = vunpack.c.l.b16 %v2559
        %v3761 = vunpack.c.h.b16 %v2559
        %v3762 = vunpack.c.l.b16 %v2560
        %v3763 = vunpack.c.h.b16 %v2560
        %v3764 = vunpack.c.l.b16 %v2561
        %v3765 = vunpack.c.h.b16 %v2561
        %v3766 = vunpack.c.l.b16 %v2562
        %v3767 = vunpack.c.h.b16 %v2562
        %v3768 = vunpack.c.l.b16 %v2563
        %v3769 = vunpack.c.h.b16 %v2563
        %v3770 = vunpack.c.l.b16 %v2564
        %v3771 = vunpack.c.h.b16 %v2564
        %v3772 = vunpack.c.l.b16 %v2565
        %v3773 = vunpack.c.h.b16 %v2565
        %v3774 = vunpack.c.l.b16 %v2566
        %v3775 = vunpack.c.h.b16 %v2566
        %v3776 = vunpack.c.l.b16 %v2567
        %v3777 = vunpack.c.h.b16 %v2567
        %v3778 = vunpack.c.l.b16 %v2568
        %v3779 = vunpack.c.h.b16 %v2568
        %v3780 = vunpack.c.l.b16 %v2569
        %v3781 = vunpack.c.h.b16 %v2569
        %v3782 = vunpack.c.l.b16 %v2570
        %v3783 = vunpack.c.h.b16 %v2570
        %v3784 = vunpack.c.l.b16 %v2571
        %v3785 = vunpack.c.h.b16 %v2571
        %v3786 = vunpack.c.l.b16 %v2572
        %v3787 = vunpack.c.h.b16 %v2572
        %v3788 = vunpack.c.l.b16 %v2573
        %v3789 = vunpack.c.h.b16 %v2573
        %v3790 = vunpack.c.l.b16 %v2574
        %v3791 = vunpack.c.h.b16 %v2574
        %v3792 = vunpack.c.l.b16 %v2575
        %v3793 = vunpack.c.h.b16 %v2575
        %v3794 = vunpack.c.l.b16 %v2576
        %v3795 = vunpack.c.h.b16 %v2576
        %v3796 = vunpack.c.l.b16 %v2577
        %v3797 = vunpack.c.h.b16 %v2577
        %v3798 = vunpack.c.l.b16 %v2578
        %v3799 = vunpack.c.h.b16 %v2578
        %v3800 = vunpack.c.l.b16 %v2579
        %v3801 = vunpack.c.h.b16 %v2579
        %v3802 = vunpack.c.l.b16 %v2580
        %v3803 = vunpack.c.h.b16 %v2580
        %v3804 = vunpack.c.l.b16 %v2581
        %v3805 = vunpack.c.h.b16 %v2581
        %v3806 = vunpack.c.l.b16 %v2582
        %v3807 = vunpack.c.h.b16 %v2582
        %v3808 = vunpack.c.l.b16 %v2583
        %v3809 = vunpack.c.h.b16 %v2583
        %v3810 = vunpack.c.l.b16 %v2584
        %v3811 = vunpack.c.h.b16 %v2584
        %v3812 = vunpack.c.l.b16 %v2585
        %v3813 = vunpack.c.h.b16 %v2585
        %v3814 = vunpack.c.l.b16 %v2586
        %v3815 = vunpack.c.h.b16 %v2586
        %v3816 = vunpack.c.l.b16 %v2587
        %v3817 = vunpack.c.h.b16 %v2587
        %v3818 = vunpack.c.l.b16 %v2588
        %v3819 = vunpack.c.h.b16 %v2588
        %v3820 = vunpack.c.l.b16 %v2589
        %v3821 = vunpack.c.h.b16 %v2589
        %v3822 = vunpack.c.l.b16 %v2590
        %v3823 = vunpack.c.h.b16 %v2590
        %v3824 = vunpack.c.l.b16 %v2591
        %v3825 = vunpack.c.h.b16 %v2591
        %v3826 = vunpack.c.l.b16 %v2592
        %v3827 = vunpack.c.h.b16 %v2592
        %v3828 = vunpack.c.l.b16 %v2593
        %v3829 = vunpack.c.h.b16 %v2593
        %v3830 = vunpack.c.l.b16 %v2594
        %v3831 = vunpack.c.h.b16 %v2594
        %v3832 = vunpack.c.l.b16 %v2595
        %v3833 = vunpack.c.h.b16 %v2595
        %v3834 = vunpack.c.l.b16 %v2596
        %v3835 = vunpack.c.h.b16 %v2596
        %v3836 = vunpack.c.l.b16 %v2597
        %v3837 = vunpack.c.h.b16 %v2597
        %v3838 = vunpack.c.l.b16 %v2598
        %v3839 = vunpack.c.h.b16 %v2598
        %v3840 = vunpack.c.l.b16 %v2599
        %v3841 = vunpack.c.h.b16 %v2599
        %v3842 = vunpack.c.l.b16 %v2600
        %v3843 = vunpack.c.h.b16 %v2600
        %v3844 = vunpack.c.l.b16 %v2601
        %v3845 = vunpack.c.h.b16 %v2601
        %v3846 = vunpack.c.l.b16 %v2602
        %v3847 = vunpack.c.h.b16 %v2602
        %v3848 = vunpack.c.l.b16 %v2603
        %v3849 = vunpack.c.h.b16 %v2603
        %v3850 = vunpack.c.l.b16 %v2604
        %v3851 = vunpack.c.h.b16 %v2604
        %v3852 = vunpack.c.l.b16 %v2605
        %v3853 = vunpack.c.h.b16 %v2605
        %v3854 = vunpack.c.l.b16 %v2606
        %v3855 = vunpack.c.h.b16 %v2606
        %v3856 = vunpack.c.l.b16 %v2607
        %v3857 = vunpack.c.h.b16 %v2607
        %v3858 = vunpack.c.l.b16 %v2608
        %v3859 = vunpack.c.h.b16 %v2608
        %v3860 = vunpack.c.l.b16 %v2609
        %v3861 = vunpack.c.h.b16 %v2609
        %v3862 = vunpack.c.l.b16 %v2610
        %v3863 = vunpack.c.h.b16 %v2610
        %v3864 = vunpack.c.l.b16 %v2611
        %v3865 = vunpack.c.h.b16 %v2611
        %v3866 = vunpack.c.l.b16 %v2612
        %v3867 = vunpack.c.h.b16 %v2612
        %v3868 = vunpack.c.l.b16 %v2613
        %v3869 = vunpack.c.h.b16 %v2613
        %v3870 = vunpack.c.l.b16 %v2614
        %v3871 = vunpack.c.h.b16 %v2614
        %v3872 = vunpack.c.l.b16 %v2615
        %v3873 = vunpack.c.h.b16 %v2615
        %v3874 = vunpack.c.l.b16 %v2616
        %v3875 = vunpack.c.h.b16 %v2616
        %v3876 = vunpack.c.l.b16 %v2617
        %v3877 = vunpack.c.h.b16 %v2617
        %v3878 = vunpack.c.l.b16 %v2618
        %v3879 = vunpack.c.h.b16 %v2618
        %v3880 = vunpack.c.l.b16 %v2619
        %v3881 = vunpack.c.h.b16 %v2619
        %v3882 = vunpack.c.l.b16 %v2620
        %v3883 = vunpack.c.h.b16 %v2620
        %v3884 = vunpack.c.l.b16 %v2621
        %v3885 = vunpack.c.h.b16 %v2621
        %v3886 = vunpack.c.l.b16 %v2622
        %v3887 = vunpack.c.h.b16 %v2622
        %v3888 = vunpack.c.l.b16 %v2623
        %v3889 = vunpack.c.h.b16 %v2623
        %v3890 = vunpack.c.l.b16 %v2624
        %v3891 = vunpack.c.h.b16 %v2624
        %v3892 = vunpack.c.l.b16 %v2625
        %v3893 = vunpack.c.h.b16 %v2625
        %v3894 = vunpack.c.l.b16 %v2626
        %v3895 = vunpack.c.h.b16 %v2626
        %v3896 = vunpack.c.l.b16 %v2627
        %v3897 = vunpack.c.h.b16 %v2627
        %v3898 = vunpack.c.l.b16 %v2628
        %v3899 = vunpack.c.h.b16 %v2628
        %v3900 = vunpack.c.l.b16 %v2629
        %v3901 = vunpack.c.h.b16 %v2629
        %v3902 = vunpack.c.l.b16 %v2630
        %v3903 = vunpack.c.h.b16 %v2630
        %v3904 = vunpack.c.l.b16 %v2631
        %v3905 = vunpack.c.h.b16 %v2631
        %v3906 = vunpack.c.l.b16 %v2632
        %v3907 = vunpack.c.h.b16 %v2632
        %v3908 = vunpack.c.l.b16 %v2633
        %v3909 = vunpack.c.h.b16 %v2633
        %v3910 = vunpack.c.l.b16 %v2634
        %v3911 = vunpack.c.h.b16 %v2634
        %v3912 = vunpack.c.l.b16 %v2635
        %v3913 = vunpack.c.h.b16 %v2635
        %v3914 = vunpack.c.l.b16 %v2636
        %v3915 = vunpack.c.h.b16 %v2636
        %v3916 = vunpack.c.l.b16 %v2637
        %v3917 = vunpack.c.h.b16 %v2637
        %v3918 = vunpack.c.l.b16 %v2638
        %v3919 = vunpack.c.h.b16 %v2638
        %v3920 = vunpack.c.l.b16 %v2639
        %v3921 = vunpack.c.h.b16 %v2639
        %v3922 = vunpack.c.l.b16 %v2640
        %v3923 = vunpack.c.h.b16 %v2640
        %v3924 = vunpack.c.l.b16 %v2641
        %v3925 = vunpack.c.h.b16 %v2641
        %v3926 = vunpack.c.l.b16 %v2642
        %v3927 = vunpack.c.h.b16 %v2642
        %v3928 = vunpack.c.l.b16 %v2643
        %v3929 = vunpack.c.h.b16 %v2643
        %v3930 = vunpack.c.l.b16 %v2644
        %v3931 = vunpack.c.h.b16 %v2644
        %v3932 = vunpack.c.l.b16 %v2645
        %v3933 = vunpack.c.h.b16 %v2645
        %v3934 = vunpack.c.l.b16 %v2646
        %v3935 = vunpack.c.h.b16 %v2646
        %v3936 = vunpack.c.l.b16 %v2647
        %v3937 = vunpack.c.h.b16 %v2647
        %v3938 = vunpack.c.l.b16 %v2648
        %v3939 = vunpack.c.h.b16 %v2648
        %v3940 = vunpack.c.l.b16 %v2649
        %v3941 = vunpack.c.h.b16 %v2649
        %v3942 = vunpack.c.l.b16 %v2650
        %v3943 = vunpack.c.h.b16 %v2650
        %v3944 = vunpack.c.l.b16 %v2651
        %v3945 = vunpack.c.h.b16 %v2651
        %v3946 = vunpack.c.l.b16 %v2652
        %v3947 = vunpack.c.h.b16 %v2652
        %v3948 = vunpack.c.l.b16 %v2653
        %v3949 = vunpack.c.h.b16 %v2653
        %v3950 = vunpack.c.l.b16 %v2654
        %v3951 = vunpack.c.h.b16 %v2654
        %v3952 = vunpack.c.l.b16 %v2655
        %v3953 = vunpack.c.h.b16 %v2655
        %v3954 = vunpack.c.l.b16 %v2656
        %v3955 = vunpack.c.h.b16 %v2656
        %v3956 = vunpack.c.l.b16 %v2657
        %v3957 = vunpack.c.h.b16 %v2657
        %v3958 = vunpack.c.l.b16 %v2658
        %v3959 = vunpack.c.h.b16 %v2658
        %v3960 = vunpack.c.l.b16 %v2659
        %v3961 = vunpack.c.h.b16 %v2659
        %v3962 = vunpack.c.l.b16 %v2660
        %v3963 = vunpack.c.h.b16 %v2660
        %v3964 = vunpack.c.l.b16 %v2661
        %v3965 = vunpack.c.h.b16 %v2661
        %v3966 = vunpack.c.l.b16 %v2662
        %v3967 = vunpack.c.h.b16 %v2662
        %v3968 = vunpack.c.l.b16 %v2663
        %v3969 = vunpack.c.h.b16 %v2663
        %v3970 = vunpack.c.l.b16 %v2664
        %v3971 = vunpack.c.h.b16 %v2664
        %v3972 = vunpack.c.l.b16 %v2665
        %v3973 = vunpack.c.h.b16 %v2665
        %v3974 = vunpack.c.l.b16 %v2666
        %v3975 = vunpack.c.h.b16 %v2666
        %v3976 = vunpack.c.l.b16 %v2667
        %v3977 = vunpack.c.h.b16 %v2667
        %v3978 = vunpack.c.l.b16 %v2668
        %v3979 = vunpack.c.h.b16 %v2668
        %v3980 = vunpack.c.l.b16 %v2669
        %v3981 = vunpack.c.h.b16 %v2669
        %v3982 = vunpack.c.l.b16 %v2670
        %v3983 = vunpack.c.h.b16 %v2670
        %v3984 = vunpack.c.l.b16 %v2671
        %v3985 = vunpack.c.h.b16 %v2671
        %v3986 = vunpack.c.l.b16 %v2672
        %v3987 = vunpack.c.h.b16 %v2672
        %v3988 = vunpack.c.l.b16 %v2673
        %v3989 = vunpack.c.h.b16 %v2673
        %v3990 = vunpack.c.l.b16 %v2674
        %v3991 = vunpack.c.h.b16 %v2674
        %v3992 = vunpack.c.l.b16 %v2675
        %v3993 = vunpack.c.h.b16 %v2675
        %v3994 = vunpack.c.l.b16 %v2676
        %v3995 = vunpack.c.h.b16 %v2676
        %v3996 = vunpack.c.l.b16 %v2677
        %v3997 = vunpack.c.h.b16 %v2677
        %v3998 = vunpack.c.l.b16 %v2678
        %v3999 = vunpack.c.h.b16 %v2678
        %v4000 = vunpack.c.l.b16 %v2679
        %v4001 = vunpack.c.h.b16 %v2679
        %v4002 = vunpack.c.l.b16 %v2680
        %v4003 = vunpack.c.h.b16 %v2680
        %v4004 = vunpack.c.l.b16 %v2681
        %v4005 = vunpack.c.h.b16 %v2681
        %v4006 = vunpack.c.l.b16 %v2682
        %v4007 = vunpack.c.h.b16 %v2682
        %v4008 = vunpack.c.l.b16 %v2683
        %v4009 = vunpack.c.h.b16 %v2683
        %v4010 = vunpack.c.l.b16 %v2684
        %v4011 = vunpack.c.h.b16 %v2684
        %v4012 = vunpack.c.l.b16 %v2685
        %v4013 = vunpack.c.h.b16 %v2685
        %v4014 = vunpack.c.l.b16 %v2686
        %v4015 = vunpack.c.h.b16 %v2686
        %v4016 = vunpack.c.l.b16 %v2687
        %v4017 = vunpack.c.h.b16 %v2687
        %v4018 = vunpack.c.l.b16 %v2688
        %v4019 = vunpack.c.h.b16 %v2688
        %v4020 = vunpack.c.l.b16 %v2689
        %v4021 = vunpack.c.h.b16 %v2689
        %v4022 = vunpack.c.l.b16 %v2690
        %v4023 = vunpack.c.h.b16 %v2690
        %v4024 = vunpack.c.l.b16 %v2691
        %v4025 = vunpack.c.h.b16 %v2691
        %v4026 = vunpack.c.l.b16 %v2692
        %v4027 = vunpack.c.h.b16 %v2692
        %v4028 = vunpack.c.l.b16 %v2693
        %v4029 = vunpack.c.h.b16 %v2693
        %v4030 = vunpack.c.l.b16 %v2694
        %v4031 = vunpack.c.h.b16 %v2694
        %v4032 = vunpack.c.l.b16 %v2695
        %v4033 = vunpack.c.h.b16 %v2695
        %v4034 = vunpack.c.l.b16 %v2696
        %v4035 = vunpack.c.h.b16 %v2696
        %v4036 = vunpack.c.l.b16 %v2697
        %v4037 = vunpack.c.h.b16 %v2697
        %v4038 = vunpack.c.l.b16 %v2698
        %v4039 = vunpack.c.h.b16 %v2698
        %v4040 = vunpack.c.l.b16 %v2699
        %v4041 = vunpack.c.h.b16 %v2699
        %v4042 = vunpack.c.l.b16 %v2700
        %v4043 = vunpack.c.h.b16 %v2700
        %v4044 = vunpack.c.l.b16 %v2701
        %v4045 = vunpack.c.h.b16 %v2701
        %v4046 = vunpack.c.l.b16 %v2702
        %v4047 = vunpack.c.h.b16 %v2702
        %v4048 = vunpack.c.l.b16 %v2703
        %v4049 = vunpack.c.h.b16 %v2703
        %v4050 = vunpack.c.l.b16 %v2704
        %v4051 = vunpack.c.h.b16 %v2704
        %v4052 = vunpack.c.l.b16 %v2705
        %v4053 = vunpack.c.h.b16 %v2705
        %v4054 = vunpack.c.l.b16 %v2706
        %v4055 = vunpack.c.h.b16 %v2706
        %v4056 = vunpack.c.l.b16 %v2707
        %v4057 = vunpack.c.h.b16 %v2707
        %v4058 = vunpack.c.l.b16 %v2708
        %v4059 = vunpack.c.h.b16 %v2708
        %v4060 = vunpack.c.l.b16 %v2709
        %v4061 = vunpack.c.h.b16 %v2709
        %v4062 = vunpack.c.l.b16 %v2710
        %v4063 = vunpack.c.h.b16 %v2710
        %v4064 = vunpack.c.l.b16 %v2711
        %v4065 = vunpack.c.h.b16 %v2711
        %v4066 = vunpack.c.l.b16 %v2712
        %v4067 = vunpack.c.h.b16 %v2712
        %v4068 = vunpack.c.l.b16 %v2713
        %v4069 = vunpack.c.h.b16 %v2713
        %v4070 = vunpack.c.l.b16 %v2714
        %v4071 = vunpack.c.h.b16 %v2714
        %v4072 = vunpack.c.l.b16 %v2715
        %v4073 = vunpack.c.h.b16 %v2715
        %v4074 = vunpack.c.l.b16 %v2716
        %v4075 = vunpack.c.h.b16 %v2716
        %v4076 = vunpack.c.l.b16 %v2717
        %v4077 = vunpack.c.h.b16 %v2717
        %v4078 = vunpack.c.l.b16 %v2718
        %v4079 = vunpack.c.h.b16 %v2718
        %v4080 = vunpack.c.l.b16 %v2719
        %v4081 = vunpack.c.h.b16 %v2719
        %v4082 = vunpack.c.l.b16 %v2720
        %v4083 = vunpack.c.h.b16 %v2720
        %v4084 = vunpack.c.l.b16 %v2721
        %v4085 = vunpack.c.h.b16 %v2721
        %v4086 = vunpack.c.l.b16 %v2722
        %v4087 = vunpack.c.h.b16 %v2722
        %v4088 = vunpack.c.l.b16 %v2723
        %v4089 = vunpack.c.h.b16 %v2723
        %v4090 = vunpack.c.l.b16 %v2724
        %v4091 = vunpack.c.h.b16 %v2724
        %v4092 = vunpack.c.l.b16 %v2725
        %v4093 = vunpack.c.h.b16 %v2725
        %v4094 = vunpack.c.l.b16 %v2726
        %v4095 = vunpack.c.h.b16 %v2726
        %v4096 = vunpack.c.l.b16 %v2727
        %v4097 = vunpack.c.h.b16 %v2727
        %v4098 = vunpack.c.l.b16 %v2728
        %v4099 = vunpack.c.h.b16 %v2728
        %v4100 = vunpack.c.l.b16 %v2729
        %v4101 = vunpack.c.h.b16 %v2729
        %v4102 = vunpack.c.l.b16 %v2730
        %v4103 = vunpack.c.h.b16 %v2730
        %v4104 = vunpack.c.l.b16 %v2731
        %v4105 = vunpack.c.h.b16 %v2731
        %v4106 = vunpack.c.l.b16 %v2732
        %v4107 = vunpack.c.h.b16 %v2732
        %v4108 = vunpack.c.l.b16 %v2733
        %v4109 = vunpack.c.h.b16 %v2733
        %v4110 = vunpack.c.l.b16 %v2734
        %v4111 = vunpack.c.h.b16 %v2734
        %v4112 = vunpack.c.l.b16 %v2735
        %v4113 = vunpack.c.h.b16 %v2735
        %v4114 = vunpack.c.l.b16 %v2736
        %v4115 = vunpack.c.h.b16 %v2736
        %v4116 = vunpack.c.l.b16 %v2737
        %v4117 = vunpack.c.h.b16 %v2737
        %v4118 = vunpack.c.l.b16 %v2738
        %v4119 = vunpack.c.h.b16 %v2738
        %v4120 = vunpack.c.l.b16 %v2739
        %v4121 = vunpack.c.h.b16 %v2739
        %v4122 = vunpack.c.l.b16 %v2740
        %v4123 = vunpack.c.h.b16 %v2740
        %v4124 = vunpack.c.l.b16 %v2741
        %v4125 = vunpack.c.h.b16 %v2741
        %v4126 = vunpack.c.l.b16 %v2742
        %v4127 = vunpack.c.h.b16 %v2742
        %v4128 = vunpack.c.l.b16 %v2743
        %v4129 = vunpack.c.h.b16 %v2743
        %v4130 = vunpack.c.l.b16 %v2744
        %v4131 = vunpack.c.h.b16 %v2744
        %v4132 = vunpack.c.l.b16 %v2745
        %v4133 = vunpack.c.h.b16 %v2745
        %v4134 = vunpack.c.l.b16 %v2746
        %v4135 = vunpack.c.h.b16 %v2746
        %v4136 = vunpack.c.l.b16 %v2747
        %v4137 = vunpack.c.h.b16 %v2747
        %v4138 = vunpack.c.l.b16 %v2748
        %v4139 = vunpack.c.h.b16 %v2748
        %v4140 = vunpack.c.l.b16 %v2749
        %v4141 = vunpack.c.h.b16 %v2749
        %v4142 = vunpack.c.l.b16 %v2750
        %v4143 = vunpack.c.h.b16 %v2750
        %v4144 = vunpack.c.l.b16 %v2751
        %v4145 = vunpack.c.h.b16 %v2751
        %v4146 = vunpack.c.l.b16 %v2752
        %v4147 = vunpack.c.h.b16 %v2752
        %v4148 = vunpack.c.l.b16 %v2753
        %v4149 = vunpack.c.h.b16 %v2753
        %v4150 = vunpack.c.l.b16 %v2754
        %v4151 = vunpack.c.h.b16 %v2754
        %v4152 = vunpack.c.l.b16 %v2755
        %v4153 = vunpack.c.h.b16 %v2755
        %v4154 = vunpack.c.l.b16 %v2756
        %v4155 = vunpack.c.h.b16 %v2756
        %v4156 = vunpack.c.l.b16 %v2757
        %v4157 = vunpack.c.h.b16 %v2757
        %v4158 = vunpack.c.l.b16 %v2758
        %v4159 = vunpack.c.h.b16 %v2758
        %v4160 = vunpack.c.l.b16 %v2759
        %v4161 = vunpack.c.h.b16 %v2759
        %v4162 = vunpack.c.l.b16 %v2760
        %v4163 = vunpack.c.h.b16 %v2760
        %v4164 = vunpack.c.l.b16 %v2761
        %v4165 = vunpack.c.h.b16 %v2761
        %v4166 = vunpack.c.l.b16 %v2762
        %v4167 = vunpack.c.h.b16 %v2762
        %v4168 = vunpack.c.l.b16 %v2763
        %v4169 = vunpack.c.h.b16 %v2763
        %v4170 = vunpack.c.l.b16 %v2764
        %v4171 = vunpack.c.h.b16 %v2764
        %v4172 = vunpack.c.l.b16 %v2765
        %v4173 = vunpack.c.h.b16 %v2765
        %v4174 = vunpack.c.l.b16 %v2766
        %v4175 = vunpack.c.h.b16 %v2766
        %v4176 = vunpack.c.l.b16 %v2767
        %v4177 = vunpack.c.h.b16 %v2767
        %v4178 = vunpack.c.l.b16 %v2768
        %v4179 = vunpack.c.h.b16 %v2768
        %v4180 = vunpack.c.l.b16 %v2769
        %v4181 = vunpack.c.h.b16 %v2769
        %v4182 = vunpack.c.l.b16 %v2770
        %v4183 = vunpack.c.h.b16 %v2770
        %v4184 = vunpack.c.l.b16 %v2771
        %v4185 = vunpack.c.h.b16 %v2771
        %v4186 = vunpack.c.l.b16 %v2772
        %v4187 = vunpack.c.h.b16 %v2772
        %v4188 = vunpack.c.l.b16 %v2773
        %v4189 = vunpack.c.h.b16 %v2773
        %v4190 = vunpack.c.l.b16 %v2774
        %v4191 = vunpack.c.h.b16 %v2774
        %v4192 = vunpack.c.l.b16 %v2775
        %v4193 = vunpack.c.h.b16 %v2775
        %v4194 = vunpack.c.l.b16 %v2776
        %v4195 = vunpack.c.h.b16 %v2776
        %v4196 = vunpack.c.l.b16 %v2777
        %v4197 = vunpack.c.h.b16 %v2777
        %v4198 = vunpack.c.l.b16 %v2778
        %v4199 = vunpack.c.h.b16 %v2778
        %v4200 = vunpack.c.l.b16 %v2779
        %v4201 = vunpack.c.h.b16 %v2779
        %v4202 = vunpack.c.l.b16 %v2780
        %v4203 = vunpack.c.h.b16 %v2780
        %v4204 = vunpack.c.l.b16 %v2781
        %v4205 = vunpack.c.h.b16 %v2781
        %v4206 = vunpack.c.l.b16 %v2782
        %v4207 = vunpack.c.h.b16 %v2782
        %v4208 = vunpack.c.l.b16 %v2783
        %v4209 = vunpack.c.h.b16 %v2783
        %v4210 = vunpack.c.l.b16 %v2784
        %v4211 = vunpack.c.h.b16 %v2784
        %v4212 = vunpack.c.l.b16 %v2785
        %v4213 = vunpack.c.h.b16 %v2785
        %v4214 = vunpack.c.l.b16 %v2786
        %v4215 = vunpack.c.h.b16 %v2786
        %v4216 = vunpack.c.l.b16 %v2787
        %v4217 = vunpack.c.h.b16 %v2787
        %v4218 = vunpack.c.l.b16 %v2788
        %v4219 = vunpack.c.h.b16 %v2788
        %v4220 = vunpack.c.l.b16 %v2789
        %v4221 = vunpack.c.h.b16 %v2789
        %v4222 = vunpack.c.l.b16 %v2790
        %v4223 = vunpack.c.h.b16 %v2790
        %v4224 = vunpack.c.l.b16 %v2791
        %v4225 = vunpack.c.h.b16 %v2791
        %v4226 = vunpack.c.l.b16 %v2792
        %v4227 = vunpack.c.h.b16 %v2792
        %v4228 = vunpack.c.l.b16 %v2793
        %v4229 = vunpack.c.h.b16 %v2793
        %v4230 = vunpack.c.l.b16 %v2794
        %v4231 = vunpack.c.h.b16 %v2794
        %v4232 = vunpack.c.l.b16 %v2795
        %v4233 = vunpack.c.h.b16 %v2795
        %v4234 = vunpack.c.l.b16 %v2796
        %v4235 = vunpack.c.h.b16 %v2796
        %v4236 = vunpack.c.l.b16 %v2797
        %v4237 = vunpack.c.h.b16 %v2797
        %v4238 = vunpack.c.l.b16 %v2798
        %v4239 = vunpack.c.h.b16 %v2798
        %v4240 = vunpack.c.l.b16 %v2799
        %v4241 = vunpack.c.h.b16 %v2799
        %v4242 = vunpack.c.l.b16 %v2800
        %v4243 = vunpack.c.h.b16 %v2800
        %v4244 = vunpack.c.l.b16 %v2801
        %v4245 = vunpack.c.h.b16 %v2801
        %v4246 = vunpack.c.l.b16 %v2802
        %v4247 = vunpack.c.h.b16 %v2802
        %v4248 = vunpack.c.l.b16 %v2803
        %v4249 = vunpack.c.h.b16 %v2803
        %v4250 = vunpack.c.l.b16 %v2804
        %v4251 = vunpack.c.h.b16 %v2804
        %v4252 = vunpack.c.l.b16 %v2805
        %v4253 = vunpack.c.h.b16 %v2805
        %v4254 = vunpack.c.l.b16 %v2806
        %v4255 = vunpack.c.h.b16 %v2806
        %v4256 = vunpack.c.l.b16 %v2807
        %v4257 = vunpack.c.h.b16 %v2807
        %v4258 = vunpack.c.l.b16 %v2808
        %v4259 = vunpack.c.h.b16 %v2808
        %v4260 = vunpack.c.l.b16 %v2809
        %v4261 = vunpack.c.h.b16 %v2809
        %v4262 = vunpack.c.l.b16 %v2810
        %v4263 = vunpack.c.h.b16 %v2810
        %v4264 = vunpack.c.l.b16 %v2811
        %v4265 = vunpack.c.h.b16 %v2811
        %v4266 = vunpack.c.l.b16 %v2812
        %v4267 = vunpack.c.h.b16 %v2812
        %v4268 = vunpack.c.l.b16 %v2813
        %v4269 = vunpack.c.h.b16 %v2813
        %v4270 = vunpack.c.l.b16 %v2814
        %v4271 = vunpack.c.h.b16 %v2814
        %v4272 = vunpack.c.l.b16 %v2815
        %v4273 = vunpack.c.h.b16 %v2815
        %v4274 = vunpack.c.l.b16 %v2816
        %v4275 = vunpack.c.h.b16 %v2816
        %v4276 = vunpack.c.l.b16 %v2817
        %v4277 = vunpack.c.h.b16 %v2817
        %v4278 = vunpack.c.l.b16 %v2818
        %v4279 = vunpack.c.h.b16 %v2818
        %v4280 = vunpack.c.l.b16 %v2819
        %v4281 = vunpack.c.h.b16 %v2819
        %v4282 = vunpack.c.l.b16 %v2820
        %v4283 = vunpack.c.h.b16 %v2820
        %v4284 = vunpack.c.l.b16 %v2821
        %v4285 = vunpack.c.h.b16 %v2821
        %v4286 = vunpack.c.l.b16 %v2822
        %v4287 = vunpack.c.h.b16 %v2822
        %v4288 = vunpack.c.l.b16 %v2823
        %v4289 = vunpack.c.h.b16 %v2823
        %v4290 = vunpack.c.l.b16 %v2824
        %v4291 = vunpack.c.h.b16 %v2824
        %v4292 = vunpack.c.l.b16 %v2825
        %v4293 = vunpack.c.h.b16 %v2825
        %v4294 = vunpack.c.l.b16 %v2826
        %v4295 = vunpack.c.h.b16 %v2826
        %v4296 = vunpack.c.l.b16 %v2827
        %v4297 = vunpack.c.h.b16 %v2827
        %v4298 = vunpack.c.l.b16 %v2828
        %v4299 = vunpack.c.h.b16 %v2828
        %v4300 = vunpack.c.l.b16 %v2829
        %v4301 = vunpack.c.h.b16 %v2829
        %v4302 = vunpack.c.l.b16 %v2830
        %v4303 = vunpack.c.h.b16 %v2830
        %v4304 = vunpack.c.l.b16 %v2831
        %v4305 = vunpack.c.h.b16 %v2831
        %v4306 = vunpack.c.l.b16 %v2832
        %v4307 = vunpack.c.h.b16 %v2832
        %v4308 = vunpack.c.l.b16 %v2833
        %v4309 = vunpack.c.h.b16 %v2833
        %v4310 = vunpack.c.l.b16 %v2834
        %v4311 = vunpack.c.h.b16 %v2834
        %v4312 = vunpack.c.l.b16 %v2835
        %v4313 = vunpack.c.h.b16 %v2835
        %v4314 = vunpack.c.l.b16 %v2836
        %v4315 = vunpack.c.h.b16 %v2836
        %v4316 = vunpack.c.l.b16 %v2837
        %v4317 = vunpack.c.h.b16 %v2837
        %v4318 = vunpack.c.l.b16 %v2838
        %v4319 = vunpack.c.h.b16 %v2838
        %v4320 = vunpack.c.l.b16 %v2839
        %v4321 = vunpack.c.h.b16 %v2839
        %v4322 = vunpack.c.l.b16 %v2840
        %v4323 = vunpack.c.h.b16 %v2840
        %v4324 = vunpack.c.l.b16 %v2841
        %v4325 = vunpack.c.h.b16 %v2841
        %v4326 = vunpack.c.l.b16 %v2842
        %v4327 = vunpack.c.h.b16 %v2842
        %v4328 = vunpack.c.l.b16 %v2843
        %v4329 = vunpack.c.h.b16 %v2843
        %v4330 = vunpack.c.l.b16 %v2844
        %v4331 = vunpack.c.h.b16 %v2844
        %v4332 = vunpack.c.l.b16 %v2845
        %v4333 = vunpack.c.h.b16 %v2845
        %v4334 = vunpack.c.l.b16 %v2846
        %v4335 = vunpack.c.h.b16 %v2846
        %v4336 = vunpack.c.l.b16 %v2847
        %v4337 = vunpack.c.h.b16 %v2847
        %v4338 = vunpack.c.l.b16 %v2848
        %v4339 = vunpack.c.h.b16 %v2848
        %v4340 = vunpack.c.l.b16 %v2849
        %v4341 = vunpack.c.h.b16 %v2849
        %v4342 = vunpack.c.l.b16 %v2850
        %v4343 = vunpack.c.h.b16 %v2850
        %v4344 = vunpack.c.l.b16 %v2851
        %v4345 = vunpack.c.h.b16 %v2851
        %v4346 = vunpack.c.l.b16 %v2852
        %v4347 = vunpack.c.h.b16 %v2852
        %v4348 = vunpack.c.l.b16 %v2853
        %v4349 = vunpack.c.h.b16 %v2853
        %v4350 = vunpack.c.l.b16 %v2854
        %v4351 = vunpack.c.h.b16 %v2854
        %v4352 = vunpack.c.l.b16 %v2855
        %v4353 = vunpack.c.h.b16 %v2855
        %v4354 = vunpack.c.l.b16 %v2856
        %v4355 = vunpack.c.h.b16 %v2856
        %v4356 = vunpack.c.l.b16 %v2857
        %v4357 = vunpack.c.h.b16 %v2857
        %v4358 = vunpack.c.l.b16 %v2858
        %v4359 = vunpack.c.h.b16 %v2858
        %v4360 = vunpack.c.l.b16 %v2859
        %v4361 = vunpack.c.h.b16 %v2859
        %v4362 = vunpack.c.l.b16 %v2860
        %v4363 = vunpack.c.h.b16 %v2860
        %v4364 = vunpack.c.l.b16 %v2861
        %v4365 = vunpack.c.h.b16 %v2861
        %v4366 = vunpack.c.l.b16 %v2862
        %v4367 = vunpack.c.h.b16 %v2862
        %v4368 = vunpack.c.l.b16 %v2863
        %v4369 = vunpack.c.h.b16 %v2863
        %v4370 = vunpack.c.l.b16 %v2864
        %v4371 = vunpack.c.h.b16 %v2864
        %v4372 = vunpack.c.l.b16 %v2865
        %v4373 = vunpack.c.h.b16 %v2865
        %v4374 = vunpack.c.l.b16 %v2866
        %v4375 = vunpack.c.h.b16 %v2866
        %v4376 = vunpack.c.l.b16 %v2867
        %v4377 = vunpack.c.h.b16 %v2867
        %v4378 = vunpack.c.l.b16 %v2868
        %v4379 = vunpack.c.h.b16 %v2868
        %v4380 = vunpack.c.l.b16 %v2869
        %v4381 = vunpack.c.h.b16 %v2869
        %v4382 = vunpack.c.l.b16 %v2870
        %v4383 = vunpack.c.h.b16 %v2870
        %v4384 = vunpack.c.l.b16 %v2871
        %v4385 = vunpack.c.h.b16 %v2871
        %v4386 = vunpack.c.l.b16 %v2872
        %v4387 = vunpack.c.h.b16 %v2872
        %v4388 = vunpack.c.l.b16 %v2873
        %v4389 = vunpack.c.h.b16 %v2873
        %v4390 = vunpack.c.l.b16 %v2874
        %v4391 = vunpack.c.h.b16 %v2874
        %v4392 = vunpack.c.l.b16 %v2875
        %v4393 = vunpack.c.h.b16 %v2875
        %v4394 = vunpack.c.l.b16 %v2876
        %v4395 = vunpack.c.h.b16 %v2876
        %v4396 = vunpack.c.l.b16 %v2877
        %v4397 = vunpack.c.h.b16 %v2877
        %v4398 = vunpack.c.l.b16 %v2878
        %v4399 = vunpack.c.h.b16 %v2878
        %v4400 = vunpack.c.l.b16 %v2879
        %v4401 = vunpack.c.h.b16 %v2879
        %v4402 = vunpack.c.l.b16 %v2880
        %v4403 = vunpack.c.h.b16 %v2880
        %v4404 = vunpack.c.l.b16 %v2881
        %v4405 = vunpack.c.h.b16 %v2881
        %v4406 = vunpack.c.l.b16 %v2882
        %v4407 = vunpack.c.h.b16 %v2882
        %v4408 = vunpack.c.l.b16 %v2883
        %v4409 = vunpack.c.h.b16 %v2883
        %v4410 = vunpack.c.l.b16 %v2884
        %v4411 = vunpack.c.h.b16 %v2884
        %v4412 = vunpack.c.l.b16 %v2885
        %v4413 = vunpack.c.h.b16 %v2885
        %v4414 = vunpack.c.l.b16 %v2886
        %v4415 = vunpack.c.h.b16 %v2886
        %v4416 = vunpack.c.l.b16 %v2887
        %v4417 = vunpack.c.h.b16 %v2887
        %v4418 = vunpack.c.l.b16 %v2888
        %v4419 = vunpack.c.h.b16 %v2888
        %v4420 = vunpack.c.l.b16 %v2889
        %v4421 = vunpack.c.h.b16 %v2889
        %v4422 = vunpack.c.l.b16 %v2890
        %v4423 = vunpack.c.h.b16 %v2890
        %v4424 = vunpack.c.l.b16 %v2891
        %v4425 = vunpack.c.h.b16 %v2891
        %v4426 = vunpack.c.l.b16 %v2892
        %v4427 = vunpack.c.h.b16 %v2892
        %v4428 = vunpack.c.l.b16 %v2893
        %v4429 = vunpack.c.h.b16 %v2893
        %v4430 = vunpack.c.l.b16 %v2894
        %v4431 = vunpack.c.h.b16 %v2894
        %v4432 = vunpack.c.l.b16 %v2895
        %v4433 = vunpack.c.h.b16 %v2895
        %v4434 = vunpack.c.l.b16 %v2896
        %v4435 = vunpack.c.h.b16 %v2896
        %v4436 = vunpack.c.l.b16 %v2897
        %v4437 = vunpack.c.h.b16 %v2897
        %v4438 = vunpack.c.l.b16 %v2898
        %v4439 = vunpack.c.h.b16 %v2898
        %v4440 = vunpack.c.l.b16 %v2899
        %v4441 = vunpack.c.h.b16 %v2899
        %v4442 = vunpack.c.l.b16 %v2900
        %v4443 = vunpack.c.h.b16 %v2900
        %v4444 = vunpack.c.l.b16 %v2901
        %v4445 = vunpack.c.h.b16 %v2901
        %v4446 = vunpack.c.l.b16 %v2902
        %v4447 = vunpack.c.h.b16 %v2902
        %v4448 = vunpack.c.l.b16 %v2903
        %v4449 = vunpack.c.h.b16 %v2903
        %v4450 = vunpack.c.l.b16 %v2904
        %v4451 = vunpack.c.h.b16 %v2904
        %v4452 = vunpack.c.l.b16 %v2905
        %v4453 = vunpack.c.h.b16 %v2905
        %v4454 = vunpack.c.l.b16 %v2906
        %v4455 = vunpack.c.h.b16 %v2906
        %v4456 = vunpack.c.l.b16 %v2907
        %v4457 = vunpack.c.h.b16 %v2907
        %v4458 = vunpack.c.l.b16 %v2908
        %v4459 = vunpack.c.h.b16 %v2908
        %v4460 = vunpack.c.l.b16 %v2909
        %v4461 = vunpack.c.h.b16 %v2909
        %v4462 = vunpack.c.l.b16 %v2910
        %v4463 = vunpack.c.h.b16 %v2910
        %v4464 = vunpack.c.l.b16 %v2911
        %v4465 = vunpack.c.h.b16 %v2911
        %v4466 = vunpack.c.l.b16 %v2912
        %v4467 = vunpack.c.h.b16 %v2912
        %v4468 = vunpack.c.l.b16 %v2913
        %v4469 = vunpack.c.h.b16 %v2913
        %v4470 = vpack.c.b16 %v3454, %v3446
        %v4471 = vpack.c.b16 %v3455, %v3447
        %v4472 = vpack.c.b16 %v3456, %v3448
        %v4473 = vpack.c.b16 %v3457, %v3449
        %v4474 = vpack.c.b16 %v3458, %v3450
        %v4475 = vpack.c.b16 %v3459, %v3451
        %v4476 = vpack.c.b16 %v3460, %v3452
        %v4477 = vpack.c.b16 %v3461, %v3453
        %v4478 = vpack.c.b16 %v3470, %v3462
        %v4479 = vpack.c.b16 %v3471, %v3463
        %v4480 = vpack.c.b16 %v3472, %v3464
        %v4481 = vpack.c.b16 %v3473, %v3465
        %v4482 = vpack.c.b16 %v3474, %v3466
        %v4483 = vpack.c.b16 %v3475, %v3467
        %v4484 = vpack.c.b16 %v3476, %v3468
        %v4485 = vpack.c.b16 %v3477, %v3469
        %v4486 = vpack.c.b16 %v3486, %v3478
        %v4487 = vpack.c.b16 %v3487, %v3479
        %v4488 = vpack.c.b16 %v3488, %v3480
        %v4489 = vpack.c.b16 %v3489, %v3481
        %v4490 = vpack.c.b16 %v3490, %v3482
        %v4491 = vpack.c.b16 %v3491, %v3483
        %v4492 = vpack.c.b16 %v3492, %v3484
        %v4493 = vpack.c.b16 %v3493, %v3485
        %v4494 = vpack.c.b16 %v3502, %v3494
        %v4495 = vpack.c.b16 %v3503, %v3495
        %v4496 = vpack.c.b16 %v3504, %v3496
        %v4497 = vpack.c.b16 %v3505, %v3497
        %v4498 = vpack.c.b16 %v3506, %v3498
        %v4499 = vpack.c.b16 %v3507, %v3499
        %v4500 = vpack.c.b16 %v3508, %v3500
        %v4501 = vpack.c.b16 %v3509, %v3501
        %v4502 = vpack.c.b16 %v3518, %v3510
        %v4503 = vpack.c.b16 %v3519, %v3511
        %v4504 = vpack.c.b16 %v3520, %v3512
        %v4505 = vpack.c.b16 %v3521, %v3513
        %v4506 = vpack.c.b16 %v3522, %v3514
        %v4507 = vpack.c.b16 %v3523, %v3515
        %v4508 = vpack.c.b16 %v3524, %v3516
        %v4509 = vpack.c.b16 %v3525, %v3517
        %v4510 = vpack.c.b16 %v3534, %v3526
        %v4511 = vpack.c.b16 %v3535, %v3527
        %v4512 = vpack.c.b16 %v3536, %v3528
        %v4513 = vpack.c.b16 %v3537, %v3529
        %v4514 = vpack.c.b16 %v3538, %v3530
        %v4515 = vpack.c.b16 %v3539, %v3531
        %v4516 = vpack.c.b16 %v3540, %v3532
        %v4517 = vpack.c.b16 %v3541, %v3533
        %v4518 = vpack.c.b16 %v3550, %v3542
        %v4519 = vpack.c.b16 %v3551, %v3543
        %v4520 = vpack.c.b16 %v3552, %v3544
        %v4521 = vpack.c.b16 %v3553, %v3545
        %v4522 = vpack.c.b16 %v3554, %v3546
        %v4523 = vpack.c.b16 %v3555, %v3547
        %v4524 = vpack.c.b16 %v3556, %v3548
        %v4525 = vpack.c.b16 %v3557, %v3549
        %v4526 = vpack.c.b16 %v3566, %v3558
        %v4527 = vpack.c.b16 %v3567, %v3559
        %v4528 = vpack.c.b16 %v3568, %v3560
        %v4529 = vpack.c.b16 %v3569, %v3561
        %v4530 = vpack.c.b16 %v3570, %v3562
        %v4531 = vpack.c.b16 %v3571, %v3563
        %v4532 = vpack.c.b16 %v3572, %v3564
        %v4533 = vpack.c.b16 %v3573, %v3565
        %v4534 = vpack.c.b16 %v3582, %v3574
        %v4535 = vpack.c.b16 %v3583, %v3575
        %v4536 = vpack.c.b16 %v3584, %v3576
        %v4537 = vpack.c.b16 %v3585, %v3577
        %v4538 = vpack.c.b16 %v3586, %v3578
        %v4539 = vpack.c.b16 %v3587, %v3579
        %v4540 = vpack.c.b16 %v3588, %v3580
        %v4541 = vpack.c.b16 %v3589, %v3581
        %v4542 = vpack.c.b16 %v3598, %v3590
        %v4543 = vpack.c.b16 %v3599, %v3591
        %v4544 = vpack.c.b16 %v3600, %v3592
        %v4545 = vpack.c.b16 %v3601, %v3593
        %v4546 = vpack.c.b16 %v3602, %v3594
        %v4547 = vpack.c.b16 %v3603, %v3595
        %v4548 = vpack.c.b16 %v3604, %v3596
        %v4549 = vpack.c.b16 %v3605, %v3597
        %v4550 = vpack.c.b16 %v3614, %v3606
        %v4551 = vpack.c.b16 %v3615, %v3607
        %v4552 = vpack.c.b16 %v3616, %v3608
        %v4553 = vpack.c.b16 %v3617, %v3609
        %v4554 = vpack.c.b16 %v3618, %v3610
        %v4555 = vpack.c.b16 %v3619, %v3611
        %v4556 = vpack.c.b16 %v3620, %v3612
        %v4557 = vpack.c.b16 %v3621, %v3613
        %v4558 = vpack.c.b16 %v3630, %v3622
        %v4559 = vpack.c.b16 %v3631, %v3623
        %v4560 = vpack.c.b16 %v3632, %v3624
        %v4561 = vpack.c.b16 %v3633, %v3625
        %v4562 = vpack.c.b16 %v3634, %v3626
        %v4563 = vpack.c.b16 %v3635, %v3627
        %v4564 = vpack.c.b16 %v3636, %v3628
        %v4565 = vpack.c.b16 %v3637, %v3629
        %v4566 = vpack.c.b16 %v3646, %v3638
        %v4567 = vpack.c.b16 %v3647, %v3639
        %v4568 = vpack.c.b16 %v3648, %v3640
        %v4569 = vpack.c.b16 %v3649, %v3641
        %v4570 = vpack.c.b16 %v3650, %v3642
        %v4571 = vpack.c.b16 %v3651, %v3643
        %v4572 = vpack.c.b16 %v3652, %v3644
        %v4573 = vpack.c.b16 %v3653, %v3645
        %v4574 = vpack.c.b16 %v3662, %v3654
        %v4575 = vpack.c.b16 %v3663, %v3655
        %v4576 = vpack.c.b16 %v3664, %v3656
        %v4577 = vpack.c.b16 %v3665, %v3657
        %v4578 = vpack.c.b16 %v3666, %v3658
        %v4579 = vpack.c.b16 %v3667, %v3659
        %v4580 = vpack.c.b16 %v3668, %v3660
        %v4581 = vpack.c.b16 %v3669, %v3661
        %v4582 = vpack.c.b16 %v3678, %v3670
        %v4583 = vpack.c.b16 %v3679, %v3671
        %v4584 = vpack.c.b16 %v3680, %v3672
        %v4585 = vpack.c.b16 %v3681, %v3673
        %v4586 = vpack.c.b16 %v3682, %v3674
        %v4587 = vpack.c.b16 %v3683, %v3675
        %v4588 = vpack.c.b16 %v3684, %v3676
        %v4589 = vpack.c.b16 %v3685, %v3677
        %v4590 = vpack.c.b16 %v3694, %v3686
        %v4591 = vpack.c.b16 %v3695, %v3687
        %v4592 = vpack.c.b16 %v3696, %v3688
        %v4593 = vpack.c.b16 %v3697, %v3689
        %v4594 = vpack.c.b16 %v3698, %v3690
        %v4595 = vpack.c.b16 %v3699, %v3691
        %v4596 = vpack.c.b16 %v3700, %v3692
        %v4597 = vpack.c.b16 %v3701, %v3693
        %v4598 = vpack.c.b16 %v3710, %v3702
        %v4599 = vpack.c.b16 %v3711, %v3703
        %v4600 = vpack.c.b16 %v3712, %v3704
        %v4601 = vpack.c.b16 %v3713, %v3705
        %v4602 = vpack.c.b16 %v3714, %v3706
        %v4603 = vpack.c.b16 %v3715, %v3707
        %v4604 = vpack.c.b16 %v3716, %v3708
        %v4605 = vpack.c.b16 %v3717, %v3709
        %v4606 = vpack.c.b16 %v3726, %v3718
        %v4607 = vpack.c.b16 %v3727, %v3719
        %v4608 = vpack.c.b16 %v3728, %v3720
        %v4609 = vpack.c.b16 %v3729, %v3721
        %v4610 = vpack.c.b16 %v3730, %v3722
        %v4611 = vpack.c.b16 %v3731, %v3723
        %v4612 = vpack.c.b16 %v3732, %v3724
        %v4613 = vpack.c.b16 %v3733, %v3725
        %v4614 = vpack.c.b16 %v3742, %v3734
        %v4615 = vpack.c.b16 %v3743, %v3735
        %v4616 = vpack.c.b16 %v3744, %v3736
        %v4617 = vpack.c.b16 %v3745, %v3737
        %v4618 = vpack.c.b16 %v3746, %v3738
        %v4619 = vpack.c.b16 %v3747, %v3739
        %v4620 = vpack.c.b16 %v3748, %v3740
        %v4621 = vpack.c.b16 %v3749, %v3741
        %v4622 = vpack.c.b16 %v3758, %v3750
        %v4623 = vpack.c.b16 %v3759, %v3751
        %v4624 = vpack.c.b16 %v3760, %v3752
        %v4625 = vpack.c.b16 %v3761, %v3753
        %v4626 = vpack.c.b16 %v3762, %v3754
        %v4627 = vpack.c.b16 %v3763, %v3755
        %v4628 = vpack.c.b16 %v3764, %v3756
        %v4629 = vpack.c.b16 %v3765, %v3757
        %v4630 = vpack.c.b16 %v3774, %v3766
        %v4631 = vpack.c.b16 %v3775, %v3767
        %v4632 = vpack.c.b16 %v3776, %v3768
        %v4633 = vpack.c.b16 %v3777, %v3769
        %v4634 = vpack.c.b16 %v3778, %v3770
        %v4635 = vpack.c.b16 %v3779, %v3771
        %v4636 = vpack.c.b16 %v3780, %v3772
        %v4637 = vpack.c.b16 %v3781, %v3773
        %v4638 = vpack.c.b16 %v3790, %v3782
        %v4639 = vpack.c.b16 %v3791, %v3783
        %v4640 = vpack.c.b16 %v3792, %v3784
        %v4641 = vpack.c.b16 %v3793, %v3785
        %v4642 = vpack.c.b16 %v3794, %v3786
        %v4643 = vpack.c.b16 %v3795, %v3787
        %v4644 = vpack.c.b16 %v3796, %v3788
        %v4645 = vpack.c.b16 %v3797, %v3789
        %v4646 = vpack.c.b16 %v3806, %v3798
        %v4647 = vpack.c.b16 %v3807, %v3799
        %v4648 = vpack.c.b16 %v3808, %v3800
        %v4649 = vpack.c.b16 %v3809, %v3801
        %v4650 = vpack.c.b16 %v3810, %v3802
        %v4651 = vpack.c.b16 %v3811, %v3803
        %v4652 = vpack.c.b16 %v3812, %v3804
        %v4653 = vpack.c.b16 %v3813, %v3805
        %v4654 = vpack.c.b16 %v3822, %v3814
        %v4655 = vpack.c.b16 %v3823, %v3815
        %v4656 = vpack.c.b16 %v3824, %v3816
        %v4657 = vpack.c.b16 %v3825, %v3817
        %v4658 = vpack.c.b16 %v3826, %v3818
        %v4659 = vpack.c.b16 %v3827, %v3819
        %v4660 = vpack.c.b16 %v3828, %v3820
        %v4661 = vpack.c.b16 %v3829, %v3821
        %v4662 = vpack.c.b16 %v3838, %v3830
        %v4663 = vpack.c.b16 %v3839, %v3831
        %v4664 = vpack.c.b16 %v3840, %v3832
        %v4665 = vpack.c.b16 %v3841, %v3833
        %v4666 = vpack.c.b16 %v3842, %v3834
        %v4667 = vpack.c.b16 %v3843, %v3835
        %v4668 = vpack.c.b16 %v3844, %v3836
        %v4669 = vpack.c.b16 %v3845, %v3837
        %v4670 = vpack.c.b16 %v3854, %v3846
        %v4671 = vpack.c.b16 %v3855, %v3847
        %v4672 = vpack.c.b16 %v3856, %v3848
        %v4673 = vpack.c.b16 %v3857, %v3849
        %v4674 = vpack.c.b16 %v3858, %v3850
        %v4675 = vpack.c.b16 %v3859, %v3851
        %v4676 = vpack.c.b16 %v3860, %v3852
        %v4677 = vpack.c.b16 %v3861, %v3853
        %v4678 = vpack.c.b16 %v3870, %v3862
        %v4679 = vpack.c.b16 %v3871, %v3863
        %v4680 = vpack.c.b16 %v3872, %v3864
        %v4681 = vpack.c.b16 %v3873, %v3865
        %v4682 = vpack.c.b16 %v3874, %v3866
        %v4683 = vpack.c.b16 %v3875, %v3867
        %v4684 = vpack.c.b16 %v3876, %v3868
        %v4685 = vpack.c.b16 %v3877, %v3869
        %v4686 = vpack.c.b16 %v3886, %v3878
        %v4687 = vpack.c.b16 %v3887, %v3879
        %v4688 = vpack.c.b16 %v3888, %v3880
        %v4689 = vpack.c.b16 %v3889, %v3881
        %v4690 = vpack.c.b16 %v3890, %v3882
        %v4691 = vpack.c.b16 %v3891, %v3883
        %v4692 = vpack.c.b16 %v3892, %v3884
        %v4693 = vpack.c.b16 %v3893, %v3885
        %v4694 = vpack.c.b16 %v3902, %v3894
        %v4695 = vpack.c.b16 %v3903, %v3895
        %v4696 = vpack.c.b16 %v3904, %v3896
        %v4697 = vpack.c.b16 %v3905, %v3897
        %v4698 = vpack.c.b16 %v3906, %v3898
        %v4699 = vpack.c.b16 %v3907, %v3899
        %v4700 = vpack.c.b16 %v3908, %v3900
        %v4701 = vpack.c.b16 %v3909, %v3901
        %v4702 = vpack.c.b16 %v3918, %v3910
        %v4703 = vpack.c.b16 %v3919, %v3911
        %v4704 = vpack.c.b16 %v3920, %v3912
        %v4705 = vpack.c.b16 %v3921, %v3913
        %v4706 = vpack.c.b16 %v3922, %v3914
        %v4707 = vpack.c.b16 %v3923, %v3915
        %v4708 = vpack.c.b16 %v3924, %v3916
        %v4709 = vpack.c.b16 %v3925, %v3917
        %v4710 = vpack.c.b16 %v3934, %v3926
        %v4711 = vpack.c.b16 %v3935, %v3927
        %v4712 = vpack.c.b16 %v3936, %v3928
        %v4713 = vpack.c.b16 %v3937, %v3929
        %v4714 = vpack.c.b16 %v3938, %v3930
        %v4715 = vpack.c.b16 %v3939, %v3931
        %v4716 = vpack.c.b16 %v3940, %v3932
        %v4717 = vpack.c.b16 %v3941, %v3933
        %v4718 = vpack.c.b16 %v3950, %v3942
        %v4719 = vpack.c.b16 %v3951, %v3943
        %v4720 = vpack.c.b16 %v3952, %v3944
        %v4721 = vpack.c.b16 %v3953, %v3945
        %v4722 = vpack.c.b16 %v3954, %v3946
        %v4723 = vpack.c.b16 %v3955, %v3947
        %v4724 = vpack.c.b16 %v3956, %v3948
        %v4725 = vpack.c.b16 %v3957, %v3949
        %v4726 = vpack.c.b16 %v3966, %v3958
        %v4727 = vpack.c.b16 %v3967, %v3959
        %v4728 = vpack.c.b16 %v3968, %v3960
        %v4729 = vpack.c.b16 %v3969, %v3961
        %v4730 = vpack.c.b16 %v3970, %v3962
        %v4731 = vpack.c.b16 %v3971, %v3963
        %v4732 = vpack.c.b16 %v3972, %v3964
        %v4733 = vpack.c.b16 %v3973, %v3965
        %v4734 = vpack.c.b16 %v3982, %v3974
        %v4735 = vpack.c.b16 %v3983, %v3975
        %v4736 = vpack.c.b16 %v3984, %v3976
        %v4737 = vpack.c.b16 %v3985, %v3977
        %v4738 = vpack.c.b16 %v3986, %v3978
        %v4739 = vpack.c.b16 %v3987, %v3979
        %v4740 = vpack.c.b16 %v3988, %v3980
        %v4741 = vpack.c.b16 %v3989, %v3981
        %v4742 = vpack.c.b16 %v3998, %v3990
        %v4743 = vpack.c.b16 %v3999, %v3991
        %v4744 = vpack.c.b16 %v4000, %v3992
        %v4745 = vpack.c.b16 %v4001, %v3993
        %v4746 = vpack.c.b16 %v4002, %v3994
        %v4747 = vpack.c.b16 %v4003, %v3995
        %v4748 = vpack.c.b16 %v4004, %v3996
        %v4749 = vpack.c.b16 %v4005, %v3997
        %v4750 = vpack.c.b16 %v4014, %v4006
        %v4751 = vpack.c.b16 %v4015, %v4007
        %v4752 = vpack.c.b16 %v4016, %v4008
        %v4753 = vpack.c.b16 %v4017, %v4009
        %v4754 = vpack.c.b16 %v4018, %v4010
        %v4755 = vpack.c.b16 %v4019, %v4011
        %v4756 = vpack.c.b16 %v4020, %v4012
        %v4757 = vpack.c.b16 %v4021, %v4013
        %v4758 = vpack.c.b16 %v4030, %v4022
        %v4759 = vpack.c.b16 %v4031, %v4023
        %v4760 = vpack.c.b16 %v4032, %v4024
        %v4761 = vpack.c.b16 %v4033, %v4025
        %v4762 = vpack.c.b16 %v4034, %v4026
        %v4763 = vpack.c.b16 %v4035, %v4027
        %v4764 = vpack.c.b16 %v4036, %v4028
        %v4765 = vpack.c.b16 %v4037, %v4029
        %v4766 = vpack.c.b16 %v4046, %v4038
        %v4767 = vpack.c.b16 %v4047, %v4039
        %v4768 = vpack.c.b16 %v4048, %v4040
        %v4769 = vpack.c.b16 %v4049, %v4041
        %v4770 = vpack.c.b16 %v4050, %v4042
        %v4771 = vpack.c.b16 %v4051, %v4043
        %v4772 = vpack.c.b16 %v4052, %v4044
        %v4773 = vpack.c.b16 %v4053, %v4045
        %v4774 = vpack.c.b16 %v4062, %v4054
        %v4775 = vpack.c.b16 %v4063, %v4055
        %v4776 = vpack.c.b16 %v4064, %v4056
        %v4777 = vpack.c.b16 %v4065, %v4057
        %v4778 = vpack.c.b16 %v4066, %v4058
        %v4779 = vpack.c.b16 %v4067, %v4059
        %v4780 = vpack.c.b16 %v4068, %v4060
        %v4781 = vpack.c.b16 %v4069, %v4061
        %v4782 = vpack.c.b16 %v4078, %v4070
        %v4783 = vpack.c.b16 %v4079, %v4071
        %v4784 = vpack.c.b16 %v4080, %v4072
        %v4785 = vpack.c.b16 %v4081, %v4073
        %v4786 = vpack.c.b16 %v4082, %v4074
        %v4787 = vpack.c.b16 %v4083, %v4075
        %v4788 = vpack.c.b16 %v4084, %v4076
        %v4789 = vpack.c.b16 %v4085, %v4077
        %v4790 = vpack.c.b16 %v4094, %v4086
        %v4791 = vpack.c.b16 %v4095, %v4087
        %v4792 = vpack.c.b16 %v4096, %v4088
        %v4793 = vpack.c.b16 %v4097, %v4089
        %v4794 = vpack.c.b16 %v4098, %v4090
        %v4795 = vpack.c.b16 %v4099, %v4091
        %v4796 = vpack.c.b16 %v4100, %v4092
        %v4797 = vpack.c.b16 %v4101, %v4093
        %v4798 = vpack.c.b16 %v4110, %v4102
        %v4799 = vpack.c.b16 %v4111, %v4103
        %v4800 = vpack.c.b16 %v4112, %v4104
        %v4801 = vpack.c.b16 %v4113, %v4105
        %v4802 = vpack.c.b16 %v4114, %v4106
        %v4803 = vpack.c.b16 %v4115, %v4107
        %v4804 = vpack.c.b16 %v4116, %v4108
        %v4805 = vpack.c.b16 %v4117, %v4109
        %v4806 = vpack.c.b16 %v4126, %v4118
        %v4807 = vpack.c.b16 %v4127, %v4119
        %v4808 = vpack.c.b16 %v4128, %v4120
        %v4809 = vpack.c.b16 %v4129, %v4121
        %v4810 = vpack.c.b16 %v4130, %v4122
        %v4811 = vpack.c.b16 %v4131, %v4123
        %v4812 = vpack.c.b16 %v4132, %v4124
        %v4813 = vpack.c.b16 %v4133, %v4125
        %v4814 = vpack.c.b16 %v4142, %v4134
        %v4815 = vpack.c.b16 %v4143, %v4135
        %v4816 = vpack.c.b16 %v4144, %v4136
        %v4817 = vpack.c.b16 %v4145, %v4137
        %v4818 = vpack.c.b16 %v4146, %v4138
        %v4819 = vpack.c.b16 %v4147, %v4139
        %v4820 = vpack.c.b16 %v4148, %v4140
        %v4821 = vpack.c.b16 %v4149, %v4141
        %v4822 = vpack.c.b16 %v4158, %v4150
        %v4823 = vpack.c.b16 %v4159, %v4151
        %v4824 = vpack.c.b16 %v4160, %v4152
        %v4825 = vpack.c.b16 %v4161, %v4153
        %v4826 = vpack.c.b16 %v4162, %v4154
        %v4827 = vpack.c.b16 %v4163, %v4155
        %v4828 = vpack.c.b16 %v4164, %v4156
        %v4829 = vpack.c.b16 %v4165, %v4157
        %v4830 = vpack.c.b16 %v4174, %v4166
        %v4831 = vpack.c.b16 %v4175, %v4167
        %v4832 = vpack.c.b16 %v4176, %v4168
        %v4833 = vpack.c.b16 %v4177, %v4169
        %v4834 = vpack.c.b16 %v4178, %v4170
        %v4835 = vpack.c.b16 %v4179, %v4171
        %v4836 = vpack.c.b16 %v4180, %v4172
        %v4837 = vpack.c.b16 %v4181, %v4173
        %v4838 = vpack.c.b16 %v4190, %v4182
        %v4839 = vpack.c.b16 %v4191, %v4183
        %v4840 = vpack.c.b16 %v4192, %v4184
        %v4841 = vpack.c.b16 %v4193, %v4185
        %v4842 = vpack.c.b16 %v4194, %v4186
        %v4843 = vpack.c.b16 %v4195, %v4187
        %v4844 = vpack.c.b16 %v4196, %v4188
        %v4845 = vpack.c.b16 %v4197, %v4189
        %v4846 = vpack.c.b16 %v4206, %v4198
        %v4847 = vpack.c.b16 %v4207, %v4199
        %v4848 = vpack.c.b16 %v4208, %v4200
        %v4849 = vpack.c.b16 %v4209, %v4201
        %v4850 = vpack.c.b16 %v4210, %v4202
        %v4851 = vpack.c.b16 %v4211, %v4203
        %v4852 = vpack.c.b16 %v4212, %v4204
        %v4853 = vpack.c.b16 %v4213, %v4205
        %v4854 = vpack.c.b16 %v4222, %v4214
        %v4855 = vpack.c.b16 %v4223, %v4215
        %v4856 = vpack.c.b16 %v4224, %v4216
        %v4857 = vpack.c.b16 %v4225, %v4217
        %v4858 = vpack.c.b16 %v4226, %v4218
        %v4859 = vpack.c.b16 %v4227, %v4219
        %v4860 = vpack.c.b16 %v4228, %v4220
        %v4861 = vpack.c.b16 %v4229, %v4221
        %v4862 = vpack.c.b16 %v4238, %v4230
        %v4863 = vpack.c.b16 %v4239, %v4231
        %v4864 = vpack.c.b16 %v4240, %v4232
        %v4865 = vpack.c.b16 %v4241, %v4233
        %v4866 = vpack.c.b16 %v4242, %v4234
        %v4867 = vpack.c.b16 %v4243, %v4235
        %v4868 = vpack.c.b16 %v4244, %v4236
        %v4869 = vpack.c.b16 %v4245, %v4237
        %v4870 = vpack.c.b16 %v4254, %v4246
        %v4871 = vpack.c.b16 %v4255, %v4247
        %v4872 = vpack.c.b16 %v4256, %v4248
        %v4873 = vpack.c.b16 %v4257, %v4249
        %v4874 = vpack.c.b16 %v4258, %v4250
        %v4875 = vpack.c.b16 %v4259, %v4251
        %v4876 = vpack.c.b16 %v4260, %v4252
        %v4877 = vpack.c.b16 %v4261, %v4253
        %v4878 = vpack.c.b16 %v4270, %v4262
        %v4879 = vpack.c.b16 %v4271, %v4263
        %v4880 = vpack.c.b16 %v4272, %v4264
        %v4881 = vpack.c.b16 %v4273, %v4265
        %v4882 = vpack.c.b16 %v4274, %v4266
        %v4883 = vpack.c.b16 %v4275, %v4267
        %v4884 = vpack.c.b16 %v4276, %v4268
        %v4885 = vpack.c.b16 %v4277, %v4269
        %v4886 = vpack.c.b16 %v4286, %v4278
        %v4887 = vpack.c.b16 %v4287, %v4279
        %v4888 = vpack.c.b16 %v4288, %v4280
        %v4889 = vpack.c.b16 %v4289, %v4281
        %v4890 = vpack.c.b16 %v4290, %v4282
        %v4891 = vpack.c.b16 %v4291, %v4283
        %v4892 = vpack.c.b16 %v4292, %v4284
        %v4893 = vpack.c.b16 %v4293, %v4285
        %v4894 = vpack.c.b16 %v4302, %v4294
        %v4895 = vpack.c.b16 %v4303, %v4295
        %v4896 = vpack.c.b16 %v4304, %v4296
        %v4897 = vpack.c.b16 %v4305, %v4297
        %v4898 = vpack.c.b16 %v4306, %v4298
        %v4899 = vpack.c.b16 %v4307, %v4299
        %v4900 = vpack.c.b16 %v4308, %v4300
        %v4901 = vpack.c.b16 %v4309, %v4301
        %v4902 = vpack.c.b16 %v4318, %v4310
        %v4903 = vpack.c.b16 %v4319, %v4311
        %v4904 = vpack.c.b16 %v4320, %v4312
        %v4905 = vpack.c.b16 %v4321, %v4313
        %v4906 = vpack.c.b16 %v4322, %v4314
        %v4907 = vpack.c.b16 %v4323, %v4315
        %v4908 = vpack.c.b16 %v4324, %v4316
        %v4909 = vpack.c.b16 %v4325, %v4317
        %v4910 = vpack.c.b16 %v4334, %v4326
        %v4911 = vpack.c.b16 %v4335, %v4327
        %v4912 = vpack.c.b16 %v4336, %v4328
        %v4913 = vpack.c.b16 %v4337, %v4329
        %v4914 = vpack.c.b16 %v4338, %v4330
        %v4915 = vpack.c.b16 %v4339, %v4331
        %v4916 = vpack.c.b16 %v4340, %v4332
        %v4917 = vpack.c.b16 %v4341, %v4333
        %v4918 = vpack.c.b16 %v4350, %v4342
        %v4919 = vpack.c.b16 %v4351, %v4343
        %v4920 = vpack.c.b16 %v4352, %v4344
        %v4921 = vpack.c.b16 %v4353, %v4345
        %v4922 = vpack.c.b16 %v4354, %v4346
        %v4923 = vpack.c.b16 %v4355, %v4347
        %v4924 = vpack.c.b16 %v4356, %v4348
        %v4925 = vpack.c.b16 %v4357, %v4349
        %v4926 = vpack.c.b16 %v4366, %v4358
        %v4927 = vpack.c.b16 %v4367, %v4359
        %v4928 = vpack.c.b16 %v4368, %v4360
        %v4929 = vpack.c.b16 %v4369, %v4361
        %v4930 = vpack.c.b16 %v4370, %v4362
        %v4931 = vpack.c.b16 %v4371, %v4363
        %v4932 = vpack.c.b16 %v4372, %v4364
        %v4933 = vpack.c.b16 %v4373, %v4365
        %v4934 = vpack.c.b16 %v4382, %v4374
        %v4935 = vpack.c.b16 %v4383, %v4375
        %v4936 = vpack.c.b16 %v4384, %v4376
        %v4937 = vpack.c.b16 %v4385, %v4377
        %v4938 = vpack.c.b16 %v4386, %v4378
        %v4939 = vpack.c.b16 %v4387, %v4379
        %v4940 = vpack.c.b16 %v4388, %v4380
        %v4941 = vpack.c.b16 %v4389, %v4381
        %v4942 = vpack.c.b16 %v4398, %v4390
        %v4943 = vpack.c.b16 %v4399, %v4391
        %v4944 = vpack.c.b16 %v4400, %v4392
        %v4945 = vpack.c.b16 %v4401, %v4393
        %v4946 = vpack.c.b16 %v4402, %v4394
        %v4947 = vpack.c.b16 %v4403, %v4395
        %v4948 = vpack.c.b16 %v4404, %v4396
        %v4949 = vpack.c.b16 %v4405, %v4397
        %v4950 = vpack.c.b16 %v4414, %v4406
        %v4951 = vpack.c.b16 %v4415, %v4407
        %v4952 = vpack.c.b16 %v4416, %v4408
        %v4953 = vpack.c.b16 %v4417, %v4409
        %v4954 = vpack.c.b16 %v4418, %v4410
        %v4955 = vpack.c.b16 %v4419, %v4411
        %v4956 = vpack.c.b16 %v4420, %v4412
        %v4957 = vpack.c.b16 %v4421, %v4413
        %v4958 = vpack.c.b16 %v4430, %v4422
        %v4959 = vpack.c.b16 %v4431, %v4423
        %v4960 = vpack.c.b16 %v4432, %v4424
        %v4961 = vpack.c.b16 %v4433, %v4425
        %v4962 = vpack.c.b16 %v4434, %v4426
        %v4963 = vpack.c.b16 %v4435, %v4427
        %v4964 = vpack.c.b16 %v4436, %v4428
        %v4965 = vpack.c.b16 %v4437, %v4429
        %v4966 = vpack.c.b16 %v4446, %v4438
        %v4967 = vpack.c.b16 %v4447, %v4439
        %v4968 = vpack.c.b16 %v4448, %v4440
        %v4969 = vpack.c.b16 %v4449, %v4441
        %v4970 = vpack.c.b16 %v4450, %v4442
        %v4971 = vpack.c.b16 %v4451, %v4443
        %v4972 = vpack.c.b16 %v4452, %v4444
        %v4973 = vpack.c.b16 %v4453, %v4445
        %v4974 = vpack.c.b16 %v4462, %v4454
        %v4975 = vpack.c.b16 %v4463, %v4455
        %v4976 = vpack.c.b16 %v4464, %v4456
        %v4977 = vpack.c.b16 %v4465, %v4457
        %v4978 = vpack.c.b16 %v4466, %v4458
        %v4979 = vpack.c.b16 %v4467, %v4459
        %v4980 = vpack.c.b16 %v4468, %v4460
        %v4981 = vpack.c.b16 %v4469, %v4461
        %5494 = vmatpush.bf16.msra.mxu0 %v4526
        %5495 = vmatpush.bf16.msra.mxu0 %v4518
        %5496 = vmatpush.bf16.msra.mxu0 %v4510
        %5497 = vmatpush.bf16.msra.mxu0 %v4502
        %5498 = vmatpush.bf16.msra.mxu0 %v4494
        %5499 = vmatpush.bf16.msra.mxu0 %v4486
        %5500 = vmatpush.bf16.msra.mxu0 %v4478
        %5501 = vmatpush.bf16.msra.mxu0 %v4470
        %5502 = vmatmul.bf16.gmra.mxu0 %v2394
        %v5503 = vpop.f32.mrf.mxu0
        %v5504 = vadd.f32 %v2918, %v5503
        %v5505 = vpop.f32.mrf.mxu0
        %5506 = vdwg.mxu0
        %5507 = vmatpush.bf16.msra.mxu0 %v4590
        %5508 = vmatpush.bf16.msra.mxu0 %v4582
        %5509 = vmatpush.bf16.msra.mxu0 %v4574
        %5510 = vmatpush.bf16.msra.mxu0 %v4566
        %5511 = vmatpush.bf16.msra.mxu0 %v4558
        %5512 = vmatpush.bf16.msra.mxu0 %v4550
        %5513 = vmatpush.bf16.msra.mxu0 %v4542
        %5514 = vmatpush.bf16.msra.mxu0 %v4534
        %5515 = vmatmul.bf16.gmra.mxu0 %v2395
        %v5516 = vpop.f32.mrf.mxu0
        %v5517 = vadd.f32 %v5504, %v5516
        %v5518 = vpop.f32.mrf.mxu0
        %5519 = vdwg.mxu0
        %5520 = vmatpush.bf16.msra.mxu0 %v4654
        %5521 = vmatpush.bf16.msra.mxu0 %v4646
        %5522 = vmatpush.bf16.msra.mxu0 %v4638
        %5523 = vmatpush.bf16.msra.mxu0 %v4630
        %5524 = vmatpush.bf16.msra.mxu0 %v4622
        %5525 = vmatpush.bf16.msra.mxu0 %v4614
        %5526 = vmatpush.bf16.msra.mxu0 %v4606
        %5527 = vmatpush.bf16.msra.mxu0 %v4598
        %5528 = vmatmul.bf16.gmra.mxu0 %v2396
        %v5529 = vpop.f32.mrf.mxu0
        %v5530 = vadd.f32 %v5517, %v5529
        %v5531 = vpop.f32.mrf.mxu0
        %5532 = vdwg.mxu0
        %5533 = vmatpush.bf16.msra.mxu0 %v4718
        %5534 = vmatpush.bf16.msra.mxu0 %v4710
        %5535 = vmatpush.bf16.msra.mxu0 %v4702
        %5536 = vmatpush.bf16.msra.mxu0 %v4694
        %5537 = vmatpush.bf16.msra.mxu0 %v4686
        %5538 = vmatpush.bf16.msra.mxu0 %v4678
        %5539 = vmatpush.bf16.msra.mxu0 %v4670
        %5540 = vmatpush.bf16.msra.mxu0 %v4662
        %5541 = vmatmul.bf16.gmra.mxu0 %v2397
        %v5542 = vpop.f32.mrf.mxu0
        %v5543 = vadd.f32 %v5530, %v5542
        %v5544 = vpop.f32.mrf.mxu0
        %5545 = vdwg.mxu0
        %5546 = vmatpush.bf16.msra.mxu0 %v4782
        %5547 = vmatpush.bf16.msra.mxu0 %v4774
        %5548 = vmatpush.bf16.msra.mxu0 %v4766
        %5549 = vmatpush.bf16.msra.mxu0 %v4758
        %5550 = vmatpush.bf16.msra.mxu0 %v4750
        %5551 = vmatpush.bf16.msra.mxu0 %v4742
        %5552 = vmatpush.bf16.msra.mxu0 %v4734
        %5553 = vmatpush.bf16.msra.mxu0 %v4726
        %5554 = vmatmul.bf16.gmra.mxu0 %v2398
        %v5555 = vpop.f32.mrf.mxu0
        %v5556 = vadd.f32 %v5543, %v5555
        %v5557 = vpop.f32.mrf.mxu0
        %5558 = vdwg.mxu0
        %5559 = vmatpush.bf16.msra.mxu0 %v4846
        %5560 = vmatpush.bf16.msra.mxu0 %v4838
        %5561 = vmatpush.bf16.msra.mxu0 %v4830
        %5562 = vmatpush.bf16.msra.mxu0 %v4822
        %5563 = vmatpush.bf16.msra.mxu0 %v4814
        %5564 = vmatpush.bf16.msra.mxu0 %v4806
        %5565 = vmatpush.bf16.msra.mxu0 %v4798
        %5566 = vmatpush.bf16.msra.mxu0 %v4790
        %5567 = vmatmul.bf16.gmra.mxu0 %v2399
        %v5568 = vpop.f32.mrf.mxu0
        %v5569 = vadd.f32 %v5556, %v5568
        %v5570 = vpop.f32.mrf.mxu0
        %5571 = vdwg.mxu0
        %5572 = vmatpush.bf16.msra.mxu0 %v4910
        %5573 = vmatpush.bf16.msra.mxu0 %v4902
        %5574 = vmatpush.bf16.msra.mxu0 %v4894
        %5575 = vmatpush.bf16.msra.mxu0 %v4886
        %5576 = vmatpush.bf16.msra.mxu0 %v4878
        %5577 = vmatpush.bf16.msra.mxu0 %v4870
        %5578 = vmatpush.bf16.msra.mxu0 %v4862
        %5579 = vmatpush.bf16.msra.mxu0 %v4854
        %5580 = vmatmul.bf16.gmra.mxu0 %v2400
        %v5581 = vpop.f32.mrf.mxu0
        %v5582 = vadd.f32 %v5569, %v5581
        %v5583 = vpop.f32.mrf.mxu0
        %5584 = vdwg.mxu0
        %5585 = vmatpush.bf16.msra.mxu0 %v4974
        %5586 = vmatpush.bf16.msra.mxu0 %v4966
        %5587 = vmatpush.bf16.msra.mxu0 %v4958
        %5588 = vmatpush.bf16.msra.mxu0 %v4950
        %5589 = vmatpush.bf16.msra.mxu0 %v4942
        %5590 = vmatpush.bf16.msra.mxu0 %v4934
        %5591 = vmatpush.bf16.msra.mxu0 %v4926
        %5592 = vmatpush.bf16.msra.mxu0 %v4918
        %5593 = vmatmul.bf16.gmra.mxu0 %v2401
        %v5594 = vpop.f32.mrf.mxu0
        %v5595 = vadd.f32 %v5582, %v5594
        %v5596 = vpop.f32.mrf.mxu0
        %5597 = vdwg.mxu0
        %5598 = vmatpush.bf16.msra.mxu0 %v4527
        %5599 = vmatpush.bf16.msra.mxu0 %v4519
        %5600 = vmatpush.bf16.msra.mxu0 %v4511
        %5601 = vmatpush.bf16.msra.mxu0 %v4503
        %5602 = vmatpush.bf16.msra.mxu0 %v4495
        %5603 = vmatpush.bf16.msra.mxu0 %v4487
        %5604 = vmatpush.bf16.msra.mxu0 %v4479
        %5605 = vmatpush.bf16.msra.mxu0 %v4471
        %5606 = vmatmul.bf16.gmra.mxu0 %v2394
        %v5607 = vpop.f32.mrf.mxu0
        %v5608 = vadd.f32 %v2919, %v5607
        %v5609 = vpop.f32.mrf.mxu0
        %5610 = vdwg.mxu0
        %5611 = vmatpush.bf16.msra.mxu0 %v4591
        %5612 = vmatpush.bf16.msra.mxu0 %v4583
        %5613 = vmatpush.bf16.msra.mxu0 %v4575
        %5614 = vmatpush.bf16.msra.mxu0 %v4567
        %5615 = vmatpush.bf16.msra.mxu0 %v4559
        %5616 = vmatpush.bf16.msra.mxu0 %v4551
        %5617 = vmatpush.bf16.msra.mxu0 %v4543
        %5618 = vmatpush.bf16.msra.mxu0 %v4535
        %5619 = vmatmul.bf16.gmra.mxu0 %v2395
        %v5620 = vpop.f32.mrf.mxu0
        %v5621 = vadd.f32 %v5608, %v5620
        %v5622 = vpop.f32.mrf.mxu0
        %5623 = vdwg.mxu0
        %5624 = vmatpush.bf16.msra.mxu0 %v4655
        %5625 = vmatpush.bf16.msra.mxu0 %v4647
        %5626 = vmatpush.bf16.msra.mxu0 %v4639
        %5627 = vmatpush.bf16.msra.mxu0 %v4631
        %5628 = vmatpush.bf16.msra.mxu0 %v4623
        %5629 = vmatpush.bf16.msra.mxu0 %v4615
        %5630 = vmatpush.bf16.msra.mxu0 %v4607
        %5631 = vmatpush.bf16.msra.mxu0 %v4599
        %5632 = vmatmul.bf16.gmra.mxu0 %v2396
        %v5633 = vpop.f32.mrf.mxu0
        %v5634 = vadd.f32 %v5621, %v5633
        %v5635 = vpop.f32.mrf.mxu0
        %5636 = vdwg.mxu0
        %5637 = vmatpush.bf16.msra.mxu0 %v4719
        %5638 = vmatpush.bf16.msra.mxu0 %v4711
        %5639 = vmatpush.bf16.msra.mxu0 %v4703
        %5640 = vmatpush.bf16.msra.mxu0 %v4695
        %5641 = vmatpush.bf16.msra.mxu0 %v4687
        %5642 = vmatpush.bf16.msra.mxu0 %v4679
        %5643 = vmatpush.bf16.msra.mxu0 %v4671
        %5644 = vmatpush.bf16.msra.mxu0 %v4663
        %5645 = vmatmul.bf16.gmra.mxu0 %v2397
        %v5646 = vpop.f32.mrf.mxu0
        %v5647 = vadd.f32 %v5634, %v5646
        %v5648 = vpop.f32.mrf.mxu0
        %5649 = vdwg.mxu0
        %5650 = vmatpush.bf16.msra.mxu0 %v4783
        %5651 = vmatpush.bf16.msra.mxu0 %v4775
        %5652 = vmatpush.bf16.msra.mxu0 %v4767
        %5653 = vmatpush.bf16.msra.mxu0 %v4759
        %5654 = vmatpush.bf16.msra.mxu0 %v4751
        %5655 = vmatpush.bf16.msra.mxu0 %v4743
        %5656 = vmatpush.bf16.msra.mxu0 %v4735
        %5657 = vmatpush.bf16.msra.mxu0 %v4727
        %5658 = vmatmul.bf16.gmra.mxu0 %v2398
        %v5659 = vpop.f32.mrf.mxu0
        %v5660 = vadd.f32 %v5647, %v5659
        %v5661 = vpop.f32.mrf.mxu0
        %5662 = vdwg.mxu0
        %5663 = vmatpush.bf16.msra.mxu0 %v4847
        %5664 = vmatpush.bf16.msra.mxu0 %v4839
        %5665 = vmatpush.bf16.msra.mxu0 %v4831
        %5666 = vmatpush.bf16.msra.mxu0 %v4823
        %5667 = vmatpush.bf16.msra.mxu0 %v4815
        %5668 = vmatpush.bf16.msra.mxu0 %v4807
        %5669 = vmatpush.bf16.msra.mxu0 %v4799
        %5670 = vmatpush.bf16.msra.mxu0 %v4791
        %5671 = vmatmul.bf16.gmra.mxu0 %v2399
        %v5672 = vpop.f32.mrf.mxu0
        %v5673 = vadd.f32 %v5660, %v5672
        %v5674 = vpop.f32.mrf.mxu0
        %5675 = vdwg.mxu0
        %5676 = vmatpush.bf16.msra.mxu0 %v4911
        %5677 = vmatpush.bf16.msra.mxu0 %v4903
        %5678 = vmatpush.bf16.msra.mxu0 %v4895
        %5679 = vmatpush.bf16.msra.mxu0 %v4887
        %5680 = vmatpush.bf16.msra.mxu0 %v4879
        %5681 = vmatpush.bf16.msra.mxu0 %v4871
        %5682 = vmatpush.bf16.msra.mxu0 %v4863
        %5683 = vmatpush.bf16.msra.mxu0 %v4855
        %5684 = vmatmul.bf16.gmra.mxu0 %v2400
        %v5685 = vpop.f32.mrf.mxu0
        %v5686 = vadd.f32 %v5673, %v5685
        %v5687 = vpop.f32.mrf.mxu0
        %5688 = vdwg.mxu0
        %5689 = vmatpush.bf16.msra.mxu0 %v4975
        %5690 = vmatpush.bf16.msra.mxu0 %v4967
        %5691 = vmatpush.bf16.msra.mxu0 %v4959
        %5692 = vmatpush.bf16.msra.mxu0 %v4951
        %5693 = vmatpush.bf16.msra.mxu0 %v4943
        %5694 = vmatpush.bf16.msra.mxu0 %v4935
        %5695 = vmatpush.bf16.msra.mxu0 %v4927
        %5696 = vmatpush.bf16.msra.mxu0 %v4919
        %5697 = vmatmul.bf16.gmra.mxu0 %v2401
        %v5698 = vpop.f32.mrf.mxu0
        %v5699 = vadd.f32 %v5686, %v5698
        %v5700 = vpop.f32.mrf.mxu0
        %5701 = vdwg.mxu0
        %5702 = vmatpush.bf16.msra.mxu0 %v4528
        %5703 = vmatpush.bf16.msra.mxu0 %v4520
        %5704 = vmatpush.bf16.msra.mxu0 %v4512
        %5705 = vmatpush.bf16.msra.mxu0 %v4504
        %5706 = vmatpush.bf16.msra.mxu0 %v4496
        %5707 = vmatpush.bf16.msra.mxu0 %v4488
        %5708 = vmatpush.bf16.msra.mxu0 %v4480
        %5709 = vmatpush.bf16.msra.mxu0 %v4472
        %5710 = vmatmul.bf16.gmra.mxu0 %v2394
        %v5711 = vpop.f32.mrf.mxu0
        %v5712 = vadd.f32 %v2920, %v5711
        %v5713 = vpop.f32.mrf.mxu0
        %5714 = vdwg.mxu0
        %5715 = vmatpush.bf16.msra.mxu0 %v4592
        %5716 = vmatpush.bf16.msra.mxu0 %v4584
        %5717 = vmatpush.bf16.msra.mxu0 %v4576
        %5718 = vmatpush.bf16.msra.mxu0 %v4568
        %5719 = vmatpush.bf16.msra.mxu0 %v4560
        %5720 = vmatpush.bf16.msra.mxu0 %v4552
        %5721 = vmatpush.bf16.msra.mxu0 %v4544
        %5722 = vmatpush.bf16.msra.mxu0 %v4536
        %5723 = vmatmul.bf16.gmra.mxu0 %v2395
        %v5724 = vpop.f32.mrf.mxu0
        %v5725 = vadd.f32 %v5712, %v5724
        %v5726 = vpop.f32.mrf.mxu0
        %5727 = vdwg.mxu0
        %5728 = vmatpush.bf16.msra.mxu0 %v4656
        %5729 = vmatpush.bf16.msra.mxu0 %v4648
        %5730 = vmatpush.bf16.msra.mxu0 %v4640
        %5731 = vmatpush.bf16.msra.mxu0 %v4632
        %5732 = vmatpush.bf16.msra.mxu0 %v4624
        %5733 = vmatpush.bf16.msra.mxu0 %v4616
        %5734 = vmatpush.bf16.msra.mxu0 %v4608
        %5735 = vmatpush.bf16.msra.mxu0 %v4600
        %5736 = vmatmul.bf16.gmra.mxu0 %v2396
        %v5737 = vpop.f32.mrf.mxu0
        %v5738 = vadd.f32 %v5725, %v5737
        %v5739 = vpop.f32.mrf.mxu0
        %5740 = vdwg.mxu0
        %5741 = vmatpush.bf16.msra.mxu0 %v4720
        %5742 = vmatpush.bf16.msra.mxu0 %v4712
        %5743 = vmatpush.bf16.msra.mxu0 %v4704
        %5744 = vmatpush.bf16.msra.mxu0 %v4696
        %5745 = vmatpush.bf16.msra.mxu0 %v4688
        %5746 = vmatpush.bf16.msra.mxu0 %v4680
        %5747 = vmatpush.bf16.msra.mxu0 %v4672
        %5748 = vmatpush.bf16.msra.mxu0 %v4664
        %5749 = vmatmul.bf16.gmra.mxu0 %v2397
        %v5750 = vpop.f32.mrf.mxu0
        %v5751 = vadd.f32 %v5738, %v5750
        %v5752 = vpop.f32.mrf.mxu0
        %5753 = vdwg.mxu0
        %5754 = vmatpush.bf16.msra.mxu0 %v4784
        %5755 = vmatpush.bf16.msra.mxu0 %v4776
        %5756 = vmatpush.bf16.msra.mxu0 %v4768
        %5757 = vmatpush.bf16.msra.mxu0 %v4760
        %5758 = vmatpush.bf16.msra.mxu0 %v4752
        %5759 = vmatpush.bf16.msra.mxu0 %v4744
        %5760 = vmatpush.bf16.msra.mxu0 %v4736
        %5761 = vmatpush.bf16.msra.mxu0 %v4728
        %5762 = vmatmul.bf16.gmra.mxu0 %v2398
        %v5763 = vpop.f32.mrf.mxu0
        %v5764 = vadd.f32 %v5751, %v5763
        %v5765 = vpop.f32.mrf.mxu0
        %5766 = vdwg.mxu0
        %5767 = vmatpush.bf16.msra.mxu0 %v4848
        %5768 = vmatpush.bf16.msra.mxu0 %v4840
        %5769 = vmatpush.bf16.msra.mxu0 %v4832
        %5770 = vmatpush.bf16.msra.mxu0 %v4824
        %5771 = vmatpush.bf16.msra.mxu0 %v4816
        %5772 = vmatpush.bf16.msra.mxu0 %v4808
        %5773 = vmatpush.bf16.msra.mxu0 %v4800
        %5774 = vmatpush.bf16.msra.mxu0 %v4792
        %5775 = vmatmul.bf16.gmra.mxu0 %v2399
        %v5776 = vpop.f32.mrf.mxu0
        %v5777 = vadd.f32 %v5764, %v5776
        %v5778 = vpop.f32.mrf.mxu0
        %5779 = vdwg.mxu0
        %5780 = vmatpush.bf16.msra.mxu0 %v4912
        %5781 = vmatpush.bf16.msra.mxu0 %v4904
        %5782 = vmatpush.bf16.msra.mxu0 %v4896
        %5783 = vmatpush.bf16.msra.mxu0 %v4888
        %5784 = vmatpush.bf16.msra.mxu0 %v4880
        %5785 = vmatpush.bf16.msra.mxu0 %v4872
        %5786 = vmatpush.bf16.msra.mxu0 %v4864
        %5787 = vmatpush.bf16.msra.mxu0 %v4856
        %5788 = vmatmul.bf16.gmra.mxu0 %v2400
        %v5789 = vpop.f32.mrf.mxu0
        %v5790 = vadd.f32 %v5777, %v5789
        %v5791 = vpop.f32.mrf.mxu0
        %5792 = vdwg.mxu0
        %5793 = vmatpush.bf16.msra.mxu0 %v4976
        %5794 = vmatpush.bf16.msra.mxu0 %v4968
        %5795 = vmatpush.bf16.msra.mxu0 %v4960
        %5796 = vmatpush.bf16.msra.mxu0 %v4952
        %5797 = vmatpush.bf16.msra.mxu0 %v4944
        %5798 = vmatpush.bf16.msra.mxu0 %v4936
        %5799 = vmatpush.bf16.msra.mxu0 %v4928
        %5800 = vmatpush.bf16.msra.mxu0 %v4920
        %5801 = vmatmul.bf16.gmra.mxu0 %v2401
        %v5802 = vpop.f32.mrf.mxu0
        %v5803 = vadd.f32 %v5790, %v5802
        %v5804 = vpop.f32.mrf.mxu0
        %5805 = vdwg.mxu0
        %5806 = vmatpush.bf16.msra.mxu0 %v4529
        %5807 = vmatpush.bf16.msra.mxu0 %v4521
        %5808 = vmatpush.bf16.msra.mxu0 %v4513
        %5809 = vmatpush.bf16.msra.mxu0 %v4505
        %5810 = vmatpush.bf16.msra.mxu0 %v4497
        %5811 = vmatpush.bf16.msra.mxu0 %v4489
        %5812 = vmatpush.bf16.msra.mxu0 %v4481
        %5813 = vmatpush.bf16.msra.mxu0 %v4473
        %5814 = vmatmul.bf16.gmra.mxu0 %v2394
        %v5815 = vpop.f32.mrf.mxu0
        %v5816 = vadd.f32 %v2921, %v5815
        %v5817 = vpop.f32.mrf.mxu0
        %5818 = vdwg.mxu0
        %5819 = vmatpush.bf16.msra.mxu0 %v4593
        %5820 = vmatpush.bf16.msra.mxu0 %v4585
        %5821 = vmatpush.bf16.msra.mxu0 %v4577
        %5822 = vmatpush.bf16.msra.mxu0 %v4569
        %5823 = vmatpush.bf16.msra.mxu0 %v4561
        %5824 = vmatpush.bf16.msra.mxu0 %v4553
        %5825 = vmatpush.bf16.msra.mxu0 %v4545
        %5826 = vmatpush.bf16.msra.mxu0 %v4537
        %5827 = vmatmul.bf16.gmra.mxu0 %v2395
        %v5828 = vpop.f32.mrf.mxu0
        %v5829 = vadd.f32 %v5816, %v5828
        %v5830 = vpop.f32.mrf.mxu0
        %5831 = vdwg.mxu0
        %5832 = vmatpush.bf16.msra.mxu0 %v4657
        %5833 = vmatpush.bf16.msra.mxu0 %v4649
        %5834 = vmatpush.bf16.msra.mxu0 %v4641
        %5835 = vmatpush.bf16.msra.mxu0 %v4633
        %5836 = vmatpush.bf16.msra.mxu0 %v4625
        %5837 = vmatpush.bf16.msra.mxu0 %v4617
        %5838 = vmatpush.bf16.msra.mxu0 %v4609
        %5839 = vmatpush.bf16.msra.mxu0 %v4601
        %5840 = vmatmul.bf16.gmra.mxu0 %v2396
        %v5841 = vpop.f32.mrf.mxu0
        %v5842 = vadd.f32 %v5829, %v5841
        %v5843 = vpop.f32.mrf.mxu0
        %5844 = vdwg.mxu0
        %5845 = vmatpush.bf16.msra.mxu0 %v4721
        %5846 = vmatpush.bf16.msra.mxu0 %v4713
        %5847 = vmatpush.bf16.msra.mxu0 %v4705
        %5848 = vmatpush.bf16.msra.mxu0 %v4697
        %5849 = vmatpush.bf16.msra.mxu0 %v4689
        %5850 = vmatpush.bf16.msra.mxu0 %v4681
        %5851 = vmatpush.bf16.msra.mxu0 %v4673
        %5852 = vmatpush.bf16.msra.mxu0 %v4665
        %5853 = vmatmul.bf16.gmra.mxu0 %v2397
        %v5854 = vpop.f32.mrf.mxu0
        %v5855 = vadd.f32 %v5842, %v5854
        %v5856 = vpop.f32.mrf.mxu0
        %5857 = vdwg.mxu0
        %5858 = vmatpush.bf16.msra.mxu0 %v4785
        %5859 = vmatpush.bf16.msra.mxu0 %v4777
        %5860 = vmatpush.bf16.msra.mxu0 %v4769
        %5861 = vmatpush.bf16.msra.mxu0 %v4761
        %5862 = vmatpush.bf16.msra.mxu0 %v4753
        %5863 = vmatpush.bf16.msra.mxu0 %v4745
        %5864 = vmatpush.bf16.msra.mxu0 %v4737
        %5865 = vmatpush.bf16.msra.mxu0 %v4729
        %5866 = vmatmul.bf16.gmra.mxu0 %v2398
        %v5867 = vpop.f32.mrf.mxu0
        %v5868 = vadd.f32 %v5855, %v5867
        %v5869 = vpop.f32.mrf.mxu0
        %5870 = vdwg.mxu0
        %5871 = vmatpush.bf16.msra.mxu0 %v4849
        %5872 = vmatpush.bf16.msra.mxu0 %v4841
        %5873 = vmatpush.bf16.msra.mxu0 %v4833
        %5874 = vmatpush.bf16.msra.mxu0 %v4825
        %5875 = vmatpush.bf16.msra.mxu0 %v4817
        %5876 = vmatpush.bf16.msra.mxu0 %v4809
        %5877 = vmatpush.bf16.msra.mxu0 %v4801
        %5878 = vmatpush.bf16.msra.mxu0 %v4793
        %5879 = vmatmul.bf16.gmra.mxu0 %v2399
        %v5880 = vpop.f32.mrf.mxu0
        %v5881 = vadd.f32 %v5868, %v5880
        %v5882 = vpop.f32.mrf.mxu0
        %5883 = vdwg.mxu0
        %5884 = vmatpush.bf16.msra.mxu0 %v4913
        %5885 = vmatpush.bf16.msra.mxu0 %v4905
        %5886 = vmatpush.bf16.msra.mxu0 %v4897
        %5887 = vmatpush.bf16.msra.mxu0 %v4889
        %5888 = vmatpush.bf16.msra.mxu0 %v4881
        %5889 = vmatpush.bf16.msra.mxu0 %v4873
        %5890 = vmatpush.bf16.msra.mxu0 %v4865
        %5891 = vmatpush.bf16.msra.mxu0 %v4857
        %5892 = vmatmul.bf16.gmra.mxu0 %v2400
        %v5893 = vpop.f32.mrf.mxu0
        %v5894 = vadd.f32 %v5881, %v5893
        %v5895 = vpop.f32.mrf.mxu0
        %5896 = vdwg.mxu0
        %5897 = vmatpush.bf16.msra.mxu0 %v4977
        %5898 = vmatpush.bf16.msra.mxu0 %v4969
        %5899 = vmatpush.bf16.msra.mxu0 %v4961
        %5900 = vmatpush.bf16.msra.mxu0 %v4953
        %5901 = vmatpush.bf16.msra.mxu0 %v4945
        %5902 = vmatpush.bf16.msra.mxu0 %v4937
        %5903 = vmatpush.bf16.msra.mxu0 %v4929
        %5904 = vmatpush.bf16.msra.mxu0 %v4921
        %5905 = vmatmul.bf16.gmra.mxu0 %v2401
        %v5906 = vpop.f32.mrf.mxu0
        %v5907 = vadd.f32 %v5894, %v5906
        %v5908 = vpop.f32.mrf.mxu0
        %5909 = vdwg.mxu0
        %5910 = vmatpush.bf16.msra.mxu0 %v4530
        %5911 = vmatpush.bf16.msra.mxu0 %v4522
        %5912 = vmatpush.bf16.msra.mxu0 %v4514
        %5913 = vmatpush.bf16.msra.mxu0 %v4506
        %5914 = vmatpush.bf16.msra.mxu0 %v4498
        %5915 = vmatpush.bf16.msra.mxu0 %v4490
        %5916 = vmatpush.bf16.msra.mxu0 %v4482
        %5917 = vmatpush.bf16.msra.mxu0 %v4474
        %5918 = vmatmul.bf16.gmra.mxu0 %v2394
        %v5919 = vpop.f32.mrf.mxu0
        %v5920 = vadd.f32 %v2922, %v5919
        %v5921 = vpop.f32.mrf.mxu0
        %5922 = vdwg.mxu0
        %5923 = vmatpush.bf16.msra.mxu0 %v4594
        %5924 = vmatpush.bf16.msra.mxu0 %v4586
        %5925 = vmatpush.bf16.msra.mxu0 %v4578
        %5926 = vmatpush.bf16.msra.mxu0 %v4570
        %5927 = vmatpush.bf16.msra.mxu0 %v4562
        %5928 = vmatpush.bf16.msra.mxu0 %v4554
        %5929 = vmatpush.bf16.msra.mxu0 %v4546
        %5930 = vmatpush.bf16.msra.mxu0 %v4538
        %5931 = vmatmul.bf16.gmra.mxu0 %v2395
        %v5932 = vpop.f32.mrf.mxu0
        %v5933 = vadd.f32 %v5920, %v5932
        %v5934 = vpop.f32.mrf.mxu0
        %5935 = vdwg.mxu0
        %5936 = vmatpush.bf16.msra.mxu0 %v4658
        %5937 = vmatpush.bf16.msra.mxu0 %v4650
        %5938 = vmatpush.bf16.msra.mxu0 %v4642
        %5939 = vmatpush.bf16.msra.mxu0 %v4634
        %5940 = vmatpush.bf16.msra.mxu0 %v4626
        %5941 = vmatpush.bf16.msra.mxu0 %v4618
        %5942 = vmatpush.bf16.msra.mxu0 %v4610
        %5943 = vmatpush.bf16.msra.mxu0 %v4602
        %5944 = vmatmul.bf16.gmra.mxu0 %v2396
        %v5945 = vpop.f32.mrf.mxu0
        %v5946 = vadd.f32 %v5933, %v5945
        %v5947 = vpop.f32.mrf.mxu0
        %5948 = vdwg.mxu0
        %5949 = vmatpush.bf16.msra.mxu0 %v4722
        %5950 = vmatpush.bf16.msra.mxu0 %v4714
        %5951 = vmatpush.bf16.msra.mxu0 %v4706
        %5952 = vmatpush.bf16.msra.mxu0 %v4698
        %5953 = vmatpush.bf16.msra.mxu0 %v4690
        %5954 = vmatpush.bf16.msra.mxu0 %v4682
        %5955 = vmatpush.bf16.msra.mxu0 %v4674
        %5956 = vmatpush.bf16.msra.mxu0 %v4666
        %5957 = vmatmul.bf16.gmra.mxu0 %v2397
        %v5958 = vpop.f32.mrf.mxu0
        %v5959 = vadd.f32 %v5946, %v5958
        %v5960 = vpop.f32.mrf.mxu0
        %5961 = vdwg.mxu0
        %5962 = vmatpush.bf16.msra.mxu0 %v4786
        %5963 = vmatpush.bf16.msra.mxu0 %v4778
        %5964 = vmatpush.bf16.msra.mxu0 %v4770
        %5965 = vmatpush.bf16.msra.mxu0 %v4762
        %5966 = vmatpush.bf16.msra.mxu0 %v4754
        %5967 = vmatpush.bf16.msra.mxu0 %v4746
        %5968 = vmatpush.bf16.msra.mxu0 %v4738
        %5969 = vmatpush.bf16.msra.mxu0 %v4730
        %5970 = vmatmul.bf16.gmra.mxu0 %v2398
        %v5971 = vpop.f32.mrf.mxu0
        %v5972 = vadd.f32 %v5959, %v5971
        %v5973 = vpop.f32.mrf.mxu0
        %5974 = vdwg.mxu0
        %5975 = vmatpush.bf16.msra.mxu0 %v4850
        %5976 = vmatpush.bf16.msra.mxu0 %v4842
        %5977 = vmatpush.bf16.msra.mxu0 %v4834
        %5978 = vmatpush.bf16.msra.mxu0 %v4826
        %5979 = vmatpush.bf16.msra.mxu0 %v4818
        %5980 = vmatpush.bf16.msra.mxu0 %v4810
        %5981 = vmatpush.bf16.msra.mxu0 %v4802
        %5982 = vmatpush.bf16.msra.mxu0 %v4794
        %5983 = vmatmul.bf16.gmra.mxu0 %v2399
        %v5984 = vpop.f32.mrf.mxu0
        %v5985 = vadd.f32 %v5972, %v5984
        %v5986 = vpop.f32.mrf.mxu0
        %5987 = vdwg.mxu0
        %5988 = vmatpush.bf16.msra.mxu0 %v4914
        %5989 = vmatpush.bf16.msra.mxu0 %v4906
        %5990 = vmatpush.bf16.msra.mxu0 %v4898
        %5991 = vmatpush.bf16.msra.mxu0 %v4890
        %5992 = vmatpush.bf16.msra.mxu0 %v4882
        %5993 = vmatpush.bf16.msra.mxu0 %v4874
        %5994 = vmatpush.bf16.msra.mxu0 %v4866
        %5995 = vmatpush.bf16.msra.mxu0 %v4858
        %5996 = vmatmul.bf16.gmra.mxu0 %v2400
        %v5997 = vpop.f32.mrf.mxu0
        %v5998 = vadd.f32 %v5985, %v5997
        %v5999 = vpop.f32.mrf.mxu0
        %6000 = vdwg.mxu0
        %6001 = vmatpush.bf16.msra.mxu0 %v4978
        %6002 = vmatpush.bf16.msra.mxu0 %v4970
        %6003 = vmatpush.bf16.msra.mxu0 %v4962
        %6004 = vmatpush.bf16.msra.mxu0 %v4954
        %6005 = vmatpush.bf16.msra.mxu0 %v4946
        %6006 = vmatpush.bf16.msra.mxu0 %v4938
        %6007 = vmatpush.bf16.msra.mxu0 %v4930
        %6008 = vmatpush.bf16.msra.mxu0 %v4922
        %6009 = vmatmul.bf16.gmra.mxu0 %v2401
        %v6010 = vpop.f32.mrf.mxu0
        %v6011 = vadd.f32 %v5998, %v6010
        %v6012 = vpop.f32.mrf.mxu0
        %6013 = vdwg.mxu0
        %6014 = vmatpush.bf16.msra.mxu0 %v4531
        %6015 = vmatpush.bf16.msra.mxu0 %v4523
        %6016 = vmatpush.bf16.msra.mxu0 %v4515
        %6017 = vmatpush.bf16.msra.mxu0 %v4507
        %6018 = vmatpush.bf16.msra.mxu0 %v4499
        %6019 = vmatpush.bf16.msra.mxu0 %v4491
        %6020 = vmatpush.bf16.msra.mxu0 %v4483
        %6021 = vmatpush.bf16.msra.mxu0 %v4475
        %6022 = vmatmul.bf16.gmra.mxu0 %v2394
        %v6023 = vpop.f32.mrf.mxu0
        %v6024 = vadd.f32 %v2923, %v6023
        %v6025 = vpop.f32.mrf.mxu0
        %6026 = vdwg.mxu0
        %6027 = vmatpush.bf16.msra.mxu0 %v4595
        %6028 = vmatpush.bf16.msra.mxu0 %v4587
        %6029 = vmatpush.bf16.msra.mxu0 %v4579
        %6030 = vmatpush.bf16.msra.mxu0 %v4571
        %6031 = vmatpush.bf16.msra.mxu0 %v4563
        %6032 = vmatpush.bf16.msra.mxu0 %v4555
        %6033 = vmatpush.bf16.msra.mxu0 %v4547
        %6034 = vmatpush.bf16.msra.mxu0 %v4539
        %6035 = vmatmul.bf16.gmra.mxu0 %v2395
        %v6036 = vpop.f32.mrf.mxu0
        %v6037 = vadd.f32 %v6024, %v6036
        %v6038 = vpop.f32.mrf.mxu0
        %6039 = vdwg.mxu0
        %6040 = vmatpush.bf16.msra.mxu0 %v4659
        %6041 = vmatpush.bf16.msra.mxu0 %v4651
        %6042 = vmatpush.bf16.msra.mxu0 %v4643
        %6043 = vmatpush.bf16.msra.mxu0 %v4635
        %6044 = vmatpush.bf16.msra.mxu0 %v4627
        %6045 = vmatpush.bf16.msra.mxu0 %v4619
        %6046 = vmatpush.bf16.msra.mxu0 %v4611
        %6047 = vmatpush.bf16.msra.mxu0 %v4603
        %6048 = vmatmul.bf16.gmra.mxu0 %v2396
        %v6049 = vpop.f32.mrf.mxu0
        %v6050 = vadd.f32 %v6037, %v6049
        %v6051 = vpop.f32.mrf.mxu0
        %6052 = vdwg.mxu0
        %6053 = vmatpush.bf16.msra.mxu0 %v4723
        %6054 = vmatpush.bf16.msra.mxu0 %v4715
        %6055 = vmatpush.bf16.msra.mxu0 %v4707
        %6056 = vmatpush.bf16.msra.mxu0 %v4699
        %6057 = vmatpush.bf16.msra.mxu0 %v4691
        %6058 = vmatpush.bf16.msra.mxu0 %v4683
        %6059 = vmatpush.bf16.msra.mxu0 %v4675
        %6060 = vmatpush.bf16.msra.mxu0 %v4667
        %6061 = vmatmul.bf16.gmra.mxu0 %v2397
        %v6062 = vpop.f32.mrf.mxu0
        %v6063 = vadd.f32 %v6050, %v6062
        %v6064 = vpop.f32.mrf.mxu0
        %6065 = vdwg.mxu0
        %6066 = vmatpush.bf16.msra.mxu0 %v4787
        %6067 = vmatpush.bf16.msra.mxu0 %v4779
        %6068 = vmatpush.bf16.msra.mxu0 %v4771
        %6069 = vmatpush.bf16.msra.mxu0 %v4763
        %6070 = vmatpush.bf16.msra.mxu0 %v4755
        %6071 = vmatpush.bf16.msra.mxu0 %v4747
        %6072 = vmatpush.bf16.msra.mxu0 %v4739
        %6073 = vmatpush.bf16.msra.mxu0 %v4731
        %6074 = vmatmul.bf16.gmra.mxu0 %v2398
        %v6075 = vpop.f32.mrf.mxu0
        %v6076 = vadd.f32 %v6063, %v6075
        %v6077 = vpop.f32.mrf.mxu0
        %6078 = vdwg.mxu0
        %6079 = vmatpush.bf16.msra.mxu0 %v4851
        %6080 = vmatpush.bf16.msra.mxu0 %v4843
        %6081 = vmatpush.bf16.msra.mxu0 %v4835
        %6082 = vmatpush.bf16.msra.mxu0 %v4827
        %6083 = vmatpush.bf16.msra.mxu0 %v4819
        %6084 = vmatpush.bf16.msra.mxu0 %v4811
        %6085 = vmatpush.bf16.msra.mxu0 %v4803
        %6086 = vmatpush.bf16.msra.mxu0 %v4795
        %6087 = vmatmul.bf16.gmra.mxu0 %v2399
        %v6088 = vpop.f32.mrf.mxu0
        %v6089 = vadd.f32 %v6076, %v6088
        %v6090 = vpop.f32.mrf.mxu0
        %6091 = vdwg.mxu0
        %6092 = vmatpush.bf16.msra.mxu0 %v4915
        %6093 = vmatpush.bf16.msra.mxu0 %v4907
        %6094 = vmatpush.bf16.msra.mxu0 %v4899
        %6095 = vmatpush.bf16.msra.mxu0 %v4891
        %6096 = vmatpush.bf16.msra.mxu0 %v4883
        %6097 = vmatpush.bf16.msra.mxu0 %v4875
        %6098 = vmatpush.bf16.msra.mxu0 %v4867
        %6099 = vmatpush.bf16.msra.mxu0 %v4859
        %6100 = vmatmul.bf16.gmra.mxu0 %v2400
        %v6101 = vpop.f32.mrf.mxu0
        %v6102 = vadd.f32 %v6089, %v6101
        %v6103 = vpop.f32.mrf.mxu0
        %6104 = vdwg.mxu0
        %6105 = vmatpush.bf16.msra.mxu0 %v4979
        %6106 = vmatpush.bf16.msra.mxu0 %v4971
        %6107 = vmatpush.bf16.msra.mxu0 %v4963
        %6108 = vmatpush.bf16.msra.mxu0 %v4955
        %6109 = vmatpush.bf16.msra.mxu0 %v4947
        %6110 = vmatpush.bf16.msra.mxu0 %v4939
        %6111 = vmatpush.bf16.msra.mxu0 %v4931
        %6112 = vmatpush.bf16.msra.mxu0 %v4923
        %6113 = vmatmul.bf16.gmra.mxu0 %v2401
        %v6114 = vpop.f32.mrf.mxu0
        %v6115 = vadd.f32 %v6102, %v6114
        %v6116 = vpop.f32.mrf.mxu0
        %6117 = vdwg.mxu0
        %6118 = vmatpush.bf16.msra.mxu0 %v4532
        %6119 = vmatpush.bf16.msra.mxu0 %v4524
        %6120 = vmatpush.bf16.msra.mxu0 %v4516
        %6121 = vmatpush.bf16.msra.mxu0 %v4508
        %6122 = vmatpush.bf16.msra.mxu0 %v4500
        %6123 = vmatpush.bf16.msra.mxu0 %v4492
        %6124 = vmatpush.bf16.msra.mxu0 %v4484
        %6125 = vmatpush.bf16.msra.mxu0 %v4476
        %6126 = vmatmul.bf16.gmra.mxu0 %v2394
        %v6127 = vpop.f32.mrf.mxu0
        %v6128 = vadd.f32 %v2924, %v6127
        %v6129 = vpop.f32.mrf.mxu0
        %6130 = vdwg.mxu0
        %6131 = vmatpush.bf16.msra.mxu0 %v4596
        %6132 = vmatpush.bf16.msra.mxu0 %v4588
        %6133 = vmatpush.bf16.msra.mxu0 %v4580
        %6134 = vmatpush.bf16.msra.mxu0 %v4572
        %6135 = vmatpush.bf16.msra.mxu0 %v4564
        %6136 = vmatpush.bf16.msra.mxu0 %v4556
        %6137 = vmatpush.bf16.msra.mxu0 %v4548
        %6138 = vmatpush.bf16.msra.mxu0 %v4540
        %6139 = vmatmul.bf16.gmra.mxu0 %v2395
        %v6140 = vpop.f32.mrf.mxu0
        %v6141 = vadd.f32 %v6128, %v6140
        %v6142 = vpop.f32.mrf.mxu0
        %6143 = vdwg.mxu0
        %6144 = vmatpush.bf16.msra.mxu0 %v4660
        %6145 = vmatpush.bf16.msra.mxu0 %v4652
        %6146 = vmatpush.bf16.msra.mxu0 %v4644
        %6147 = vmatpush.bf16.msra.mxu0 %v4636
        %6148 = vmatpush.bf16.msra.mxu0 %v4628
        %6149 = vmatpush.bf16.msra.mxu0 %v4620
        %6150 = vmatpush.bf16.msra.mxu0 %v4612
        %6151 = vmatpush.bf16.msra.mxu0 %v4604
        %6152 = vmatmul.bf16.gmra.mxu0 %v2396
        %v6153 = vpop.f32.mrf.mxu0
        %v6154 = vadd.f32 %v6141, %v6153
        %v6155 = vpop.f32.mrf.mxu0
        %6156 = vdwg.mxu0
        %6157 = vmatpush.bf16.msra.mxu0 %v4724
        %6158 = vmatpush.bf16.msra.mxu0 %v4716
        %6159 = vmatpush.bf16.msra.mxu0 %v4708
        %6160 = vmatpush.bf16.msra.mxu0 %v4700
        %6161 = vmatpush.bf16.msra.mxu0 %v4692
        %6162 = vmatpush.bf16.msra.mxu0 %v4684
        %6163 = vmatpush.bf16.msra.mxu0 %v4676
        %6164 = vmatpush.bf16.msra.mxu0 %v4668
        %6165 = vmatmul.bf16.gmra.mxu0 %v2397
        %v6166 = vpop.f32.mrf.mxu0
        %v6167 = vadd.f32 %v6154, %v6166
        %v6168 = vpop.f32.mrf.mxu0
        %6169 = vdwg.mxu0
        %6170 = vmatpush.bf16.msra.mxu0 %v4788
        %6171 = vmatpush.bf16.msra.mxu0 %v4780
        %6172 = vmatpush.bf16.msra.mxu0 %v4772
        %6173 = vmatpush.bf16.msra.mxu0 %v4764
        %6174 = vmatpush.bf16.msra.mxu0 %v4756
        %6175 = vmatpush.bf16.msra.mxu0 %v4748
        %6176 = vmatpush.bf16.msra.mxu0 %v4740
        %6177 = vmatpush.bf16.msra.mxu0 %v4732
        %6178 = vmatmul.bf16.gmra.mxu0 %v2398
        %v6179 = vpop.f32.mrf.mxu0
        %v6180 = vadd.f32 %v6167, %v6179
        %v6181 = vpop.f32.mrf.mxu0
        %6182 = vdwg.mxu0
        %6183 = vmatpush.bf16.msra.mxu0 %v4852
        %6184 = vmatpush.bf16.msra.mxu0 %v4844
        %6185 = vmatpush.bf16.msra.mxu0 %v4836
        %6186 = vmatpush.bf16.msra.mxu0 %v4828
        %6187 = vmatpush.bf16.msra.mxu0 %v4820
        %6188 = vmatpush.bf16.msra.mxu0 %v4812
        %6189 = vmatpush.bf16.msra.mxu0 %v4804
        %6190 = vmatpush.bf16.msra.mxu0 %v4796
        %6191 = vmatmul.bf16.gmra.mxu0 %v2399
        %v6192 = vpop.f32.mrf.mxu0
        %v6193 = vadd.f32 %v6180, %v6192
        %v6194 = vpop.f32.mrf.mxu0
        %6195 = vdwg.mxu0
        %6196 = vmatpush.bf16.msra.mxu0 %v4916
        %6197 = vmatpush.bf16.msra.mxu0 %v4908
        %6198 = vmatpush.bf16.msra.mxu0 %v4900
        %6199 = vmatpush.bf16.msra.mxu0 %v4892
        %6200 = vmatpush.bf16.msra.mxu0 %v4884
        %6201 = vmatpush.bf16.msra.mxu0 %v4876
        %6202 = vmatpush.bf16.msra.mxu0 %v4868
        %6203 = vmatpush.bf16.msra.mxu0 %v4860
        %6204 = vmatmul.bf16.gmra.mxu0 %v2400
        %v6205 = vpop.f32.mrf.mxu0
        %v6206 = vadd.f32 %v6193, %v6205
        %v6207 = vpop.f32.mrf.mxu0
        %6208 = vdwg.mxu0
        %6209 = vmatpush.bf16.msra.mxu0 %v4980
        %6210 = vmatpush.bf16.msra.mxu0 %v4972
        %6211 = vmatpush.bf16.msra.mxu0 %v4964
        %6212 = vmatpush.bf16.msra.mxu0 %v4956
        %6213 = vmatpush.bf16.msra.mxu0 %v4948
        %6214 = vmatpush.bf16.msra.mxu0 %v4940
        %6215 = vmatpush.bf16.msra.mxu0 %v4932
        %6216 = vmatpush.bf16.msra.mxu0 %v4924
        %6217 = vmatmul.bf16.gmra.mxu0 %v2401
        %v6218 = vpop.f32.mrf.mxu0
        %v6219 = vadd.f32 %v6206, %v6218
        %v6220 = vpop.f32.mrf.mxu0
        %6221 = vdwg.mxu0
        %6222 = vmatpush.bf16.msra.mxu0 %v4533
        %6223 = vmatpush.bf16.msra.mxu0 %v4525
        %6224 = vmatpush.bf16.msra.mxu0 %v4517
        %6225 = vmatpush.bf16.msra.mxu0 %v4509
        %6226 = vmatpush.bf16.msra.mxu0 %v4501
        %6227 = vmatpush.bf16.msra.mxu0 %v4493
        %6228 = vmatpush.bf16.msra.mxu0 %v4485
        %6229 = vmatpush.bf16.msra.mxu0 %v4477
        %6230 = vmatmul.bf16.gmra.mxu0 %v2394
        %v6231 = vpop.f32.mrf.mxu0
        %v6232 = vadd.f32 %v2925, %v6231
        %v6233 = vpop.f32.mrf.mxu0
        %6234 = vdwg.mxu0
        %6235 = vmatpush.bf16.msra.mxu0 %v4597
        %6236 = vmatpush.bf16.msra.mxu0 %v4589
        %6237 = vmatpush.bf16.msra.mxu0 %v4581
        %6238 = vmatpush.bf16.msra.mxu0 %v4573
        %6239 = vmatpush.bf16.msra.mxu0 %v4565
        %6240 = vmatpush.bf16.msra.mxu0 %v4557
        %6241 = vmatpush.bf16.msra.mxu0 %v4549
        %6242 = vmatpush.bf16.msra.mxu0 %v4541
        %6243 = vmatmul.bf16.gmra.mxu0 %v2395
        %v6244 = vpop.f32.mrf.mxu0
        %v6245 = vadd.f32 %v6232, %v6244
        %v6246 = vpop.f32.mrf.mxu0
        %6247 = vdwg.mxu0
        %6248 = vmatpush.bf16.msra.mxu0 %v4661
        %6249 = vmatpush.bf16.msra.mxu0 %v4653
        %6250 = vmatpush.bf16.msra.mxu0 %v4645
        %6251 = vmatpush.bf16.msra.mxu0 %v4637
        %6252 = vmatpush.bf16.msra.mxu0 %v4629
        %6253 = vmatpush.bf16.msra.mxu0 %v4621
        %6254 = vmatpush.bf16.msra.mxu0 %v4613
        %6255 = vmatpush.bf16.msra.mxu0 %v4605
        %6256 = vmatmul.bf16.gmra.mxu0 %v2396
        %v6257 = vpop.f32.mrf.mxu0
        %v6258 = vadd.f32 %v6245, %v6257
        %v6259 = vpop.f32.mrf.mxu0
        %6260 = vdwg.mxu0
        %6261 = vmatpush.bf16.msra.mxu0 %v4725
        %6262 = vmatpush.bf16.msra.mxu0 %v4717
        %6263 = vmatpush.bf16.msra.mxu0 %v4709
        %6264 = vmatpush.bf16.msra.mxu0 %v4701
        %6265 = vmatpush.bf16.msra.mxu0 %v4693
        %6266 = vmatpush.bf16.msra.mxu0 %v4685
        %6267 = vmatpush.bf16.msra.mxu0 %v4677
        %6268 = vmatpush.bf16.msra.mxu0 %v4669
        %6269 = vmatmul.bf16.gmra.mxu0 %v2397
        %v6270 = vpop.f32.mrf.mxu0
        %v6271 = vadd.f32 %v6258, %v6270
        %v6272 = vpop.f32.mrf.mxu0
        %6273 = vdwg.mxu0
        %6274 = vmatpush.bf16.msra.mxu0 %v4789
        %6275 = vmatpush.bf16.msra.mxu0 %v4781
        %6276 = vmatpush.bf16.msra.mxu0 %v4773
        %6277 = vmatpush.bf16.msra.mxu0 %v4765
        %6278 = vmatpush.bf16.msra.mxu0 %v4757
        %6279 = vmatpush.bf16.msra.mxu0 %v4749
        %6280 = vmatpush.bf16.msra.mxu0 %v4741
        %6281 = vmatpush.bf16.msra.mxu0 %v4733
        %6282 = vmatmul.bf16.gmra.mxu0 %v2398
        %v6283 = vpop.f32.mrf.mxu0
        %v6284 = vadd.f32 %v6271, %v6283
        %v6285 = vpop.f32.mrf.mxu0
        %6286 = vdwg.mxu0
        %6287 = vmatpush.bf16.msra.mxu0 %v4853
        %6288 = vmatpush.bf16.msra.mxu0 %v4845
        %6289 = vmatpush.bf16.msra.mxu0 %v4837
        %6290 = vmatpush.bf16.msra.mxu0 %v4829
        %6291 = vmatpush.bf16.msra.mxu0 %v4821
        %6292 = vmatpush.bf16.msra.mxu0 %v4813
        %6293 = vmatpush.bf16.msra.mxu0 %v4805
        %6294 = vmatpush.bf16.msra.mxu0 %v4797
        %6295 = vmatmul.bf16.gmra.mxu0 %v2399
        %v6296 = vpop.f32.mrf.mxu0
        %v6297 = vadd.f32 %v6284, %v6296
        %v6298 = vpop.f32.mrf.mxu0
        %6299 = vdwg.mxu0
        %6300 = vmatpush.bf16.msra.mxu0 %v4917
        %6301 = vmatpush.bf16.msra.mxu0 %v4909
        %6302 = vmatpush.bf16.msra.mxu0 %v4901
        %6303 = vmatpush.bf16.msra.mxu0 %v4893
        %6304 = vmatpush.bf16.msra.mxu0 %v4885
        %6305 = vmatpush.bf16.msra.mxu0 %v4877
        %6306 = vmatpush.bf16.msra.mxu0 %v4869
        %6307 = vmatpush.bf16.msra.mxu0 %v4861
        %6308 = vmatmul.bf16.gmra.mxu0 %v2400
        %v6309 = vpop.f32.mrf.mxu0
        %v6310 = vadd.f32 %v6297, %v6309
        %v6311 = vpop.f32.mrf.mxu0
        %6312 = vdwg.mxu0
        %6313 = vmatpush.bf16.msra.mxu0 %v4981
        %6314 = vmatpush.bf16.msra.mxu0 %v4973
        %6315 = vmatpush.bf16.msra.mxu0 %v4965
        %6316 = vmatpush.bf16.msra.mxu0 %v4957
        %6317 = vmatpush.bf16.msra.mxu0 %v4949
        %6318 = vmatpush.bf16.msra.mxu0 %v4941
        %6319 = vmatpush.bf16.msra.mxu0 %v4933
        %6320 = vmatpush.bf16.msra.mxu0 %v4925
        %6321 = vmatmul.bf16.gmra.mxu0 %v2401
        %v6322 = vpop.f32.mrf.mxu0
        %v6323 = vadd.f32 %v6310, %v6322
        %v6324 = vpop.f32.mrf.mxu0
        %6325 = vdwg.mxu0
        %v6326 = vmax.f32 %v5595, 0.0
        %v6327 = vmax.f32 %v5699, 0.0
        %v6328 = vmax.f32 %v5803, 0.0
        %v6329 = vmax.f32 %v5907, 0.0
        %v6330 = vmax.f32 %v6011, 0.0
        %v6331 = vmax.f32 %v6115, 0.0
        %v6332 = vmax.f32 %v6219, 0.0
        %v6333 = vmax.f32 %v6323, 0.0
        %6334 = vst [vmem:[#allocation2] sm:$0xff] %v6326
        %6335 = vst [vmem:[#allocation2 + $0x8] sm:$0xff] %v6327
        %6336 = vst [vmem:[#allocation2 + $0x10] sm:$0xff] %v6328
        %6337 = vst [vmem:[#allocation2 + $0x18] sm:$0xff] %v6329
        %6338 = vst [vmem:[#allocation2 + $0x20] sm:$0xff] %v6330
        %6339 = vst [vmem:[#allocation2 + $0x28] sm:$0xff] %v6331
        %6340 = vst [vmem:[#allocation2 + $0x30] sm:$0xff] %v6332
        %6341 = vst [vmem:[#allocation2 + $0x38] sm:$0xff] %v6333
        %p6342 = scmp.eq.s32.totalorder %s25, 3
        // Predicated region
        $region81: #{tpu_custom_call.1} parent=47 // pred_check
          %p6343 = pneg %p6342
        $region82: #{tpu_custom_call.1} parent=47 // pred_check_branch
          %6345 = sbr.rel (%p6343) target = $region84
        $region83: #{tpu_custom_call.1} parent=47 // pred_region
          %v6346 = vld [vmem:[#allocation2] sm:$0xff]
          %v6347 = vld [vmem:[#allocation2 + $0x8] sm:$0xff]
          %v6348 = vld [vmem:[#allocation2 + $0x10] sm:$0xff]
          %v6349 = vld [vmem:[#allocation2 + $0x18] sm:$0xff]
          %v6350 = vld [vmem:[#allocation2 + $0x20] sm:$0xff]
          %v6351 = vld [vmem:[#allocation2 + $0x28] sm:$0xff]
          %v6352 = vld [vmem:[#allocation2 + $0x30] sm:$0xff]
          %v6353 = vld [vmem:[#allocation2 + $0x38] sm:$0xff]
          %v6354 = vpack.c.bf16 %v6346, %v6346
          %v6355 = vpack.c.bf16 %v6347, %v6347
          %v6356 = vpack.c.bf16 %v6348, %v6348
          %v6357 = vpack.c.bf16 %v6349, %v6349
          %v6358 = vpack.c.bf16 %v6350, %v6350
          %v6359 = vpack.c.bf16 %v6351, %v6351
          %v6360 = vpack.c.bf16 %v6352, %v6352
          %v6361 = vpack.c.bf16 %v6353, %v6353
          %v6362 = vld [vmem:[#allocation12] sm:$0xf]
          %v6363 = vld [vmem:[#allocation12 + $0x4] sm:$0xf]
          %v6364 = vld [vmem:[#allocation12 + $0x8] sm:$0xf]
          %v6365 = vld [vmem:[#allocation12 + $0xc] sm:$0xf]
          %v6366 = vld [vmem:[#allocation12 + $0x10] sm:$0xf]
          %v6367 = vld [vmem:[#allocation12 + $0x14] sm:$0xf]
          %v6368 = vld [vmem:[#allocation12 + $0x18] sm:$0xf]
          %v6369 = vld [vmem:[#allocation12 + $0x1c] sm:$0xf]
          %v6370 = vld [vmem:[#allocation12 + $0x20] sm:$0xf]
          %v6371 = vld [vmem:[#allocation12 + $0x24] sm:$0xf]
          %v6372 = vld [vmem:[#allocation12 + $0x28] sm:$0xf]
          %v6373 = vld [vmem:[#allocation12 + $0x2c] sm:$0xf]
          %v6374 = vld [vmem:[#allocation12 + $0x30] sm:$0xf]
          %v6375 = vld [vmem:[#allocation12 + $0x34] sm:$0xf]
          %v6376 = vld [vmem:[#allocation12 + $0x38] sm:$0xf]
          %v6377 = vld [vmem:[#allocation12 + $0x3c] sm:$0xf]
          %v6378 = vld [vmem:[#allocation12 + $0x40] sm:$0xf]
          %v6379 = vld [vmem:[#allocation12 + $0x44] sm:$0xf]
          %v6380 = vld [vmem:[#allocation12 + $0x48] sm:$0xf]
          %v6381 = vld [vmem:[#allocation12 + $0x4c] sm:$0xf]
          %v6382 = vld [vmem:[#allocation12 + $0x50] sm:$0xf]
          %v6383 = vld [vmem:[#allocation12 + $0x54] sm:$0xf]
          %v6384 = vld [vmem:[#allocation12 + $0x58] sm:$0xf]
          %v6385 = vld [vmem:[#allocation12 + $0x5c] sm:$0xf]
          %v6386 = vld [vmem:[#allocation12 + $0x60] sm:$0xf]
          %v6387 = vld [vmem:[#allocation12 + $0x64] sm:$0xf]
          %v6388 = vld [vmem:[#allocation12 + $0x68] sm:$0xf]
          %v6389 = vld [vmem:[#allocation12 + $0x6c] sm:$0xf]
          %v6390 = vld [vmem:[#allocation12 + $0x70] sm:$0xf]
          %v6391 = vld [vmem:[#allocation12 + $0x74] sm:$0xf]
          %v6392 = vld [vmem:[#allocation12 + $0x78] sm:$0xf]
          %v6393 = vld [vmem:[#allocation12 + $0x7c] sm:$0xf]
          %v6394 = vld [vmem:[#allocation12 + $0x80] sm:$0xf]
          %v6395 = vld [vmem:[#allocation12 + $0x84] sm:$0xf]
          %v6396 = vld [vmem:[#allocation12 + $0x88] sm:$0xf]
          %v6397 = vld [vmem:[#allocation12 + $0x8c] sm:$0xf]
          %v6398 = vld [vmem:[#allocation12 + $0x90] sm:$0xf]
          %v6399 = vld [vmem:[#allocation12 + $0x94] sm:$0xf]
          %v6400 = vld [vmem:[#allocation12 + $0x98] sm:$0xf]
          %v6401 = vld [vmem:[#allocation12 + $0x9c] sm:$0xf]
          %v6402 = vld [vmem:[#allocation12 + $0xa0] sm:$0xf]
          %v6403 = vld [vmem:[#allocation12 + $0xa4] sm:$0xf]
          %v6404 = vld [vmem:[#allocation12 + $0xa8] sm:$0xf]
          %v6405 = vld [vmem:[#allocation12 + $0xac] sm:$0xf]
          %v6406 = vld [vmem:[#allocation12 + $0xb0] sm:$0xf]
          %v6407 = vld [vmem:[#allocation12 + $0xb4] sm:$0xf]
          %v6408 = vld [vmem:[#allocation12 + $0xb8] sm:$0xf]
          %v6409 = vld [vmem:[#allocation12 + $0xbc] sm:$0xf]
          %v6410 = vld [vmem:[#allocation12 + $0xc0] sm:$0xf]
          %v6411 = vld [vmem:[#allocation12 + $0xc4] sm:$0xf]
          %v6412 = vld [vmem:[#allocation12 + $0xc8] sm:$0xf]
          %v6413 = vld [vmem:[#allocation12 + $0xcc] sm:$0xf]
          %v6414 = vld [vmem:[#allocation12 + $0xd0] sm:$0xf]
          %v6415 = vld [vmem:[#allocation12 + $0xd4] sm:$0xf]
          %v6416 = vld [vmem:[#allocation12 + $0xd8] sm:$0xf]
          %v6417 = vld [vmem:[#allocation12 + $0xdc] sm:$0xf]
          %v6418 = vld [vmem:[#allocation12 + $0xe0] sm:$0xf]
          %v6419 = vld [vmem:[#allocation12 + $0xe4] sm:$0xf]
          %v6420 = vld [vmem:[#allocation12 + $0xe8] sm:$0xf]
          %v6421 = vld [vmem:[#allocation12 + $0xec] sm:$0xf]
          %v6422 = vld [vmem:[#allocation12 + $0xf0] sm:$0xf]
          %v6423 = vld [vmem:[#allocation12 + $0xf4] sm:$0xf]
          %v6424 = vld [vmem:[#allocation12 + $0xf8] sm:$0xf]
          %v6425 = vld [vmem:[#allocation12 + $0xfc] sm:$0xf]
          %v6426 = vld [vmem:[#allocation12 + $0x100] sm:$0xf]
          %v6427 = vld [vmem:[#allocation12 + $0x104] sm:$0xf]
          %v6428 = vld [vmem:[#allocation12 + $0x108] sm:$0xf]
          %v6429 = vld [vmem:[#allocation12 + $0x10c] sm:$0xf]
          %v6430 = vld [vmem:[#allocation12 + $0x110] sm:$0xf]
          %v6431 = vld [vmem:[#allocation12 + $0x114] sm:$0xf]
          %v6432 = vld [vmem:[#allocation12 + $0x118] sm:$0xf]
          %v6433 = vld [vmem:[#allocation12 + $0x11c] sm:$0xf]
          %v6434 = vld [vmem:[#allocation12 + $0x120] sm:$0xf]
          %v6435 = vld [vmem:[#allocation12 + $0x124] sm:$0xf]
          %v6436 = vld [vmem:[#allocation12 + $0x128] sm:$0xf]
          %v6437 = vld [vmem:[#allocation12 + $0x12c] sm:$0xf]
          %v6438 = vld [vmem:[#allocation12 + $0x130] sm:$0xf]
          %v6439 = vld [vmem:[#allocation12 + $0x134] sm:$0xf]
          %v6440 = vld [vmem:[#allocation12 + $0x138] sm:$0xf]
          %v6441 = vld [vmem:[#allocation12 + $0x13c] sm:$0xf]
          %v6442 = vld [vmem:[#allocation12 + $0x140] sm:$0xf]
          %v6443 = vld [vmem:[#allocation12 + $0x144] sm:$0xf]
          %v6444 = vld [vmem:[#allocation12 + $0x148] sm:$0xf]
          %v6445 = vld [vmem:[#allocation12 + $0x14c] sm:$0xf]
          %v6446 = vld [vmem:[#allocation12 + $0x150] sm:$0xf]
          %v6447 = vld [vmem:[#allocation12 + $0x154] sm:$0xf]
          %v6448 = vld [vmem:[#allocation12 + $0x158] sm:$0xf]
          %v6449 = vld [vmem:[#allocation12 + $0x15c] sm:$0xf]
          %v6450 = vld [vmem:[#allocation12 + $0x160] sm:$0xf]
          %v6451 = vld [vmem:[#allocation12 + $0x164] sm:$0xf]
          %v6452 = vld [vmem:[#allocation12 + $0x168] sm:$0xf]
          %v6453 = vld [vmem:[#allocation12 + $0x16c] sm:$0xf]
          %v6454 = vld [vmem:[#allocation12 + $0x170] sm:$0xf]
          %v6455 = vld [vmem:[#allocation12 + $0x174] sm:$0xf]
          %v6456 = vld [vmem:[#allocation12 + $0x178] sm:$0xf]
          %v6457 = vld [vmem:[#allocation12 + $0x17c] sm:$0xf]
          %v6458 = vld [vmem:[#allocation12 + $0x180] sm:$0xf]
          %v6459 = vld [vmem:[#allocation12 + $0x184] sm:$0xf]
          %v6460 = vld [vmem:[#allocation12 + $0x188] sm:$0xf]
          %v6461 = vld [vmem:[#allocation12 + $0x18c] sm:$0xf]
          %v6462 = vld [vmem:[#allocation12 + $0x190] sm:$0xf]
          %v6463 = vld [vmem:[#allocation12 + $0x194] sm:$0xf]
          %v6464 = vld [vmem:[#allocation12 + $0x198] sm:$0xf]
          %v6465 = vld [vmem:[#allocation12 + $0x19c] sm:$0xf]
          %v6466 = vld [vmem:[#allocation12 + $0x1a0] sm:$0xf]
          %v6467 = vld [vmem:[#allocation12 + $0x1a4] sm:$0xf]
          %v6468 = vld [vmem:[#allocation12 + $0x1a8] sm:$0xf]
          %v6469 = vld [vmem:[#allocation12 + $0x1ac] sm:$0xf]
          %v6470 = vld [vmem:[#allocation12 + $0x1b0] sm:$0xf]
          %v6471 = vld [vmem:[#allocation12 + $0x1b4] sm:$0xf]
          %v6472 = vld [vmem:[#allocation12 + $0x1b8] sm:$0xf]
          %v6473 = vld [vmem:[#allocation12 + $0x1bc] sm:$0xf]
          %v6474 = vld [vmem:[#allocation12 + $0x1c0] sm:$0xf]
          %v6475 = vld [vmem:[#allocation12 + $0x1c4] sm:$0xf]
          %v6476 = vld [vmem:[#allocation12 + $0x1c8] sm:$0xf]
          %v6477 = vld [vmem:[#allocation12 + $0x1cc] sm:$0xf]
          %v6478 = vld [vmem:[#allocation12 + $0x1d0] sm:$0xf]
          %v6479 = vld [vmem:[#allocation12 + $0x1d4] sm:$0xf]
          %v6480 = vld [vmem:[#allocation12 + $0x1d8] sm:$0xf]
          %v6481 = vld [vmem:[#allocation12 + $0x1dc] sm:$0xf]
          %v6482 = vld [vmem:[#allocation12 + $0x1e0] sm:$0xf]
          %v6483 = vld [vmem:[#allocation12 + $0x1e4] sm:$0xf]
          %v6484 = vld [vmem:[#allocation12 + $0x1e8] sm:$0xf]
          %v6485 = vld [vmem:[#allocation12 + $0x1ec] sm:$0xf]
          %v6486 = vld [vmem:[#allocation12 + $0x1f0] sm:$0xf]
          %v6487 = vld [vmem:[#allocation12 + $0x1f4] sm:$0xf]
          %v6488 = vld [vmem:[#allocation12 + $0x1f8] sm:$0xf]
          %v6489 = vld [vmem:[#allocation12 + $0x1fc] sm:$0xf]
          %v6490 = vld [vmem:[#allocation14] sm:$0x1]
          %v6492 = vperm.slane %v6490, 0
          %v6622 = vunpack.c.l.b16 %v6362
          %v6623 = vunpack.c.l.b16 %v6363
          %v6624 = vunpack.c.l.b16 %v6364
          %v6625 = vunpack.c.l.b16 %v6365
          %v6626 = vunpack.c.l.b16 %v6366
          %v6627 = vunpack.c.l.b16 %v6367
          %v6628 = vunpack.c.l.b16 %v6368
          %v6629 = vunpack.c.l.b16 %v6369
          %v6630 = vunpack.c.l.b16 %v6370
          %v6631 = vunpack.c.l.b16 %v6371
          %v6632 = vunpack.c.l.b16 %v6372
          %v6633 = vunpack.c.l.b16 %v6373
          %v6634 = vunpack.c.l.b16 %v6374
          %v6635 = vunpack.c.l.b16 %v6375
          %v6636 = vunpack.c.l.b16 %v6376
          %v6637 = vunpack.c.l.b16 %v6377
          %v6638 = vunpack.c.l.b16 %v6378
          %v6639 = vunpack.c.l.b16 %v6379
          %v6640 = vunpack.c.l.b16 %v6380
          %v6641 = vunpack.c.l.b16 %v6381
          %v6642 = vunpack.c.l.b16 %v6382
          %v6643 = vunpack.c.l.b16 %v6383
          %v6644 = vunpack.c.l.b16 %v6384
          %v6645 = vunpack.c.l.b16 %v6385
          %v6646 = vunpack.c.l.b16 %v6386
          %v6647 = vunpack.c.l.b16 %v6387
          %v6648 = vunpack.c.l.b16 %v6388
          %v6649 = vunpack.c.l.b16 %v6389
          %v6650 = vunpack.c.l.b16 %v6390
          %v6651 = vunpack.c.l.b16 %v6391
          %v6652 = vunpack.c.l.b16 %v6392
          %v6653 = vunpack.c.l.b16 %v6393
          %v6654 = vunpack.c.l.b16 %v6394
          %v6655 = vunpack.c.l.b16 %v6395
          %v6656 = vunpack.c.l.b16 %v6396
          %v6657 = vunpack.c.l.b16 %v6397
          %v6658 = vunpack.c.l.b16 %v6398
          %v6659 = vunpack.c.l.b16 %v6399
          %v6660 = vunpack.c.l.b16 %v6400
          %v6661 = vunpack.c.l.b16 %v6401
          %v6662 = vunpack.c.l.b16 %v6402
          %v6663 = vunpack.c.l.b16 %v6403
          %v6664 = vunpack.c.l.b16 %v6404
          %v6665 = vunpack.c.l.b16 %v6405
          %v6666 = vunpack.c.l.b16 %v6406
          %v6667 = vunpack.c.l.b16 %v6407
          %v6668 = vunpack.c.l.b16 %v6408
          %v6669 = vunpack.c.l.b16 %v6409
          %v6670 = vunpack.c.l.b16 %v6410
          %v6671 = vunpack.c.l.b16 %v6411
          %v6672 = vunpack.c.l.b16 %v6412
          %v6673 = vunpack.c.l.b16 %v6413
          %v6674 = vunpack.c.l.b16 %v6414
          %v6675 = vunpack.c.l.b16 %v6415
          %v6676 = vunpack.c.l.b16 %v6416
          %v6677 = vunpack.c.l.b16 %v6417
          %v6678 = vunpack.c.l.b16 %v6418
          %v6679 = vunpack.c.l.b16 %v6419
          %v6680 = vunpack.c.l.b16 %v6420
          %v6681 = vunpack.c.l.b16 %v6421
          %v6682 = vunpack.c.l.b16 %v6422
          %v6683 = vunpack.c.l.b16 %v6423
          %v6684 = vunpack.c.l.b16 %v6424
          %v6685 = vunpack.c.l.b16 %v6425
          %v6686 = vunpack.c.l.b16 %v6426
          %v6687 = vunpack.c.l.b16 %v6427
          %v6688 = vunpack.c.l.b16 %v6428
          %v6689 = vunpack.c.l.b16 %v6429
          %v6690 = vunpack.c.l.b16 %v6430
          %v6691 = vunpack.c.l.b16 %v6431
          %v6692 = vunpack.c.l.b16 %v6432
          %v6693 = vunpack.c.l.b16 %v6433
          %v6694 = vunpack.c.l.b16 %v6434
          %v6695 = vunpack.c.l.b16 %v6435
          %v6696 = vunpack.c.l.b16 %v6436
          %v6697 = vunpack.c.l.b16 %v6437
          %v6698 = vunpack.c.l.b16 %v6438
          %v6699 = vunpack.c.l.b16 %v6439
          %v6700 = vunpack.c.l.b16 %v6440
          %v6701 = vunpack.c.l.b16 %v6441
          %v6702 = vunpack.c.l.b16 %v6442
          %v6703 = vunpack.c.l.b16 %v6443
          %v6704 = vunpack.c.l.b16 %v6444
          %v6705 = vunpack.c.l.b16 %v6445
          %v6706 = vunpack.c.l.b16 %v6446
          %v6707 = vunpack.c.l.b16 %v6447
          %v6708 = vunpack.c.l.b16 %v6448
          %v6709 = vunpack.c.l.b16 %v6449
          %v6710 = vunpack.c.l.b16 %v6450
          %v6711 = vunpack.c.l.b16 %v6451
          %v6712 = vunpack.c.l.b16 %v6452
          %v6713 = vunpack.c.l.b16 %v6453
          %v6714 = vunpack.c.l.b16 %v6454
          %v6715 = vunpack.c.l.b16 %v6455
          %v6716 = vunpack.c.l.b16 %v6456
          %v6717 = vunpack.c.l.b16 %v6457
          %v6718 = vunpack.c.l.b16 %v6458
          %v6719 = vunpack.c.l.b16 %v6459
          %v6720 = vunpack.c.l.b16 %v6460
          %v6721 = vunpack.c.l.b16 %v6461
          %v6722 = vunpack.c.l.b16 %v6462
          %v6723 = vunpack.c.l.b16 %v6463
          %v6724 = vunpack.c.l.b16 %v6464
          %v6725 = vunpack.c.l.b16 %v6465
          %v6726 = vunpack.c.l.b16 %v6466
          %v6727 = vunpack.c.l.b16 %v6467
          %v6728 = vunpack.c.l.b16 %v6468
          %v6729 = vunpack.c.l.b16 %v6469
          %v6730 = vunpack.c.l.b16 %v6470
          %v6731 = vunpack.c.l.b16 %v6471
          %v6732 = vunpack.c.l.b16 %v6472
          %v6733 = vunpack.c.l.b16 %v6473
          %v6734 = vunpack.c.l.b16 %v6474
          %v6735 = vunpack.c.l.b16 %v6475
          %v6736 = vunpack.c.l.b16 %v6476
          %v6737 = vunpack.c.l.b16 %v6477
          %v6738 = vunpack.c.l.b16 %v6478
          %v6739 = vunpack.c.l.b16 %v6479
          %v6740 = vunpack.c.l.b16 %v6480
          %v6741 = vunpack.c.l.b16 %v6481
          %v6742 = vunpack.c.l.b16 %v6482
          %v6743 = vunpack.c.l.b16 %v6483
          %v6744 = vunpack.c.l.b16 %v6484
          %v6745 = vunpack.c.l.b16 %v6485
          %v6746 = vunpack.c.l.b16 %v6486
          %v6747 = vunpack.c.l.b16 %v6487
          %v6748 = vunpack.c.l.b16 %v6488
          %v6749 = vunpack.c.l.b16 %v6489
          %v6750 = vpack.c.b16 %v6623, %v6622
          %v6751 = vpack.c.b16 %v6625, %v6624
          %v6752 = vpack.c.b16 %v6627, %v6626
          %v6753 = vpack.c.b16 %v6629, %v6628
          %v6754 = vpack.c.b16 %v6631, %v6630
          %v6755 = vpack.c.b16 %v6633, %v6632
          %v6756 = vpack.c.b16 %v6635, %v6634
          %v6757 = vpack.c.b16 %v6637, %v6636
          %v6758 = vpack.c.b16 %v6639, %v6638
          %v6759 = vpack.c.b16 %v6641, %v6640
          %v6760 = vpack.c.b16 %v6643, %v6642
          %v6761 = vpack.c.b16 %v6645, %v6644
          %v6762 = vpack.c.b16 %v6647, %v6646
          %v6763 = vpack.c.b16 %v6649, %v6648
          %v6764 = vpack.c.b16 %v6651, %v6650
          %v6765 = vpack.c.b16 %v6653, %v6652
          %v6766 = vpack.c.b16 %v6655, %v6654
          %v6767 = vpack.c.b16 %v6657, %v6656
          %v6768 = vpack.c.b16 %v6659, %v6658
          %v6769 = vpack.c.b16 %v6661, %v6660
          %v6770 = vpack.c.b16 %v6663, %v6662
          %v6771 = vpack.c.b16 %v6665, %v6664
          %v6772 = vpack.c.b16 %v6667, %v6666
          %v6773 = vpack.c.b16 %v6669, %v6668
          %v6774 = vpack.c.b16 %v6671, %v6670
          %v6775 = vpack.c.b16 %v6673, %v6672
          %v6776 = vpack.c.b16 %v6675, %v6674
          %v6777 = vpack.c.b16 %v6677, %v6676
          %v6778 = vpack.c.b16 %v6679, %v6678
          %v6779 = vpack.c.b16 %v6681, %v6680
          %v6780 = vpack.c.b16 %v6683, %v6682
          %v6781 = vpack.c.b16 %v6685, %v6684
          %v6782 = vpack.c.b16 %v6687, %v6686
          %v6783 = vpack.c.b16 %v6689, %v6688
          %v6784 = vpack.c.b16 %v6691, %v6690
          %v6785 = vpack.c.b16 %v6693, %v6692
          %v6786 = vpack.c.b16 %v6695, %v6694
          %v6787 = vpack.c.b16 %v6697, %v6696
          %v6788 = vpack.c.b16 %v6699, %v6698
          %v6789 = vpack.c.b16 %v6701, %v6700
          %v6790 = vpack.c.b16 %v6703, %v6702
          %v6791 = vpack.c.b16 %v6705, %v6704
          %v6792 = vpack.c.b16 %v6707, %v6706
          %v6793 = vpack.c.b16 %v6709, %v6708
          %v6794 = vpack.c.b16 %v6711, %v6710
          %v6795 = vpack.c.b16 %v6713, %v6712
          %v6796 = vpack.c.b16 %v6715, %v6714
          %v6797 = vpack.c.b16 %v6717, %v6716
          %v6798 = vpack.c.b16 %v6719, %v6718
          %v6799 = vpack.c.b16 %v6721, %v6720
          %v6800 = vpack.c.b16 %v6723, %v6722
          %v6801 = vpack.c.b16 %v6725, %v6724
          %v6802 = vpack.c.b16 %v6727, %v6726
          %v6803 = vpack.c.b16 %v6729, %v6728
          %v6804 = vpack.c.b16 %v6731, %v6730
          %v6805 = vpack.c.b16 %v6733, %v6732
          %v6806 = vpack.c.b16 %v6735, %v6734
          %v6807 = vpack.c.b16 %v6737, %v6736
          %v6808 = vpack.c.b16 %v6739, %v6738
          %v6809 = vpack.c.b16 %v6741, %v6740
          %v6810 = vpack.c.b16 %v6743, %v6742
          %v6811 = vpack.c.b16 %v6745, %v6744
          %v6812 = vpack.c.b16 %v6747, %v6746
          %v6813 = vpack.c.b16 %v6749, %v6748
          %6878 = vmatpush.bf16.msra.mxu0 %v6757
          %6879 = vmatpush.bf16.msra.mxu0 %v6756
          %6880 = vmatpush.bf16.msra.mxu0 %v6755
          %6881 = vmatpush.bf16.msra.mxu0 %v6754
          %6882 = vmatpush.bf16.msra.mxu0 %v6753
          %6883 = vmatpush.bf16.msra.mxu0 %v6752
          %6884 = vmatpush.bf16.msra.mxu0 %v6751
          %6885 = vmatpush.bf16.msra.mxu0 %v6750
          %6886 = vmatmul.bf16.gmra.mxu0 %v6354
          %v6887 = vpop.f32.mrf.mxu0
          %v6888 = vadd.f32 %v6492, %v6887
          %v6889 = vpop.f32.mrf.mxu0
          %6890 = vdwg.mxu0
          %6891 = vmatpush.bf16.msra.mxu0 %v6765
          %6892 = vmatpush.bf16.msra.mxu0 %v6764
          %6893 = vmatpush.bf16.msra.mxu0 %v6763
          %6894 = vmatpush.bf16.msra.mxu0 %v6762
          %6895 = vmatpush.bf16.msra.mxu0 %v6761
          %6896 = vmatpush.bf16.msra.mxu0 %v6760
          %6897 = vmatpush.bf16.msra.mxu0 %v6759
          %6898 = vmatpush.bf16.msra.mxu0 %v6758
          %6899 = vmatmul.bf16.gmra.mxu0 %v6355
          %v6900 = vpop.f32.mrf.mxu0
          %v6901 = vadd.f32 %v6888, %v6900
          %v6902 = vpop.f32.mrf.mxu0
          %6903 = vdwg.mxu0
          %6904 = vmatpush.bf16.msra.mxu0 %v6773
          %6905 = vmatpush.bf16.msra.mxu0 %v6772
          %6906 = vmatpush.bf16.msra.mxu0 %v6771
          %6907 = vmatpush.bf16.msra.mxu0 %v6770
          %6908 = vmatpush.bf16.msra.mxu0 %v6769
          %6909 = vmatpush.bf16.msra.mxu0 %v6768
          %6910 = vmatpush.bf16.msra.mxu0 %v6767
          %6911 = vmatpush.bf16.msra.mxu0 %v6766
          %6912 = vmatmul.bf16.gmra.mxu0 %v6356
          %v6913 = vpop.f32.mrf.mxu0
          %v6914 = vadd.f32 %v6901, %v6913
          %v6915 = vpop.f32.mrf.mxu0
          %6916 = vdwg.mxu0
          %6917 = vmatpush.bf16.msra.mxu0 %v6781
          %6918 = vmatpush.bf16.msra.mxu0 %v6780
          %6919 = vmatpush.bf16.msra.mxu0 %v6779
          %6920 = vmatpush.bf16.msra.mxu0 %v6778
          %6921 = vmatpush.bf16.msra.mxu0 %v6777
          %6922 = vmatpush.bf16.msra.mxu0 %v6776
          %6923 = vmatpush.bf16.msra.mxu0 %v6775
          %6924 = vmatpush.bf16.msra.mxu0 %v6774
          %6925 = vmatmul.bf16.gmra.mxu0 %v6357
          %v6926 = vpop.f32.mrf.mxu0
          %v6927 = vadd.f32 %v6914, %v6926
          %v6928 = vpop.f32.mrf.mxu0
          %6929 = vdwg.mxu0
          %6930 = vmatpush.bf16.msra.mxu0 %v6789
          %6931 = vmatpush.bf16.msra.mxu0 %v6788
          %6932 = vmatpush.bf16.msra.mxu0 %v6787
          %6933 = vmatpush.bf16.msra.mxu0 %v6786
          %6934 = vmatpush.bf16.msra.mxu0 %v6785
          %6935 = vmatpush.bf16.msra.mxu0 %v6784
          %6936 = vmatpush.bf16.msra.mxu0 %v6783
          %6937 = vmatpush.bf16.msra.mxu0 %v6782
          %6938 = vmatmul.bf16.gmra.mxu0 %v6358
          %v6939 = vpop.f32.mrf.mxu0
          %v6940 = vadd.f32 %v6927, %v6939
          %v6941 = vpop.f32.mrf.mxu0
          %6942 = vdwg.mxu0
          %6943 = vmatpush.bf16.msra.mxu0 %v6797
          %6944 = vmatpush.bf16.msra.mxu0 %v6796
          %6945 = vmatpush.bf16.msra.mxu0 %v6795
          %6946 = vmatpush.bf16.msra.mxu0 %v6794
          %6947 = vmatpush.bf16.msra.mxu0 %v6793
          %6948 = vmatpush.bf16.msra.mxu0 %v6792
          %6949 = vmatpush.bf16.msra.mxu0 %v6791
          %6950 = vmatpush.bf16.msra.mxu0 %v6790
          %6951 = vmatmul.bf16.gmra.mxu0 %v6359
          %v6952 = vpop.f32.mrf.mxu0
          %v6953 = vadd.f32 %v6940, %v6952
          %v6954 = vpop.f32.mrf.mxu0
          %6955 = vdwg.mxu0
          %6956 = vmatpush.bf16.msra.mxu0 %v6805
          %6957 = vmatpush.bf16.msra.mxu0 %v6804
          %6958 = vmatpush.bf16.msra.mxu0 %v6803
          %6959 = vmatpush.bf16.msra.mxu0 %v6802
          %6960 = vmatpush.bf16.msra.mxu0 %v6801
          %6961 = vmatpush.bf16.msra.mxu0 %v6800
          %6962 = vmatpush.bf16.msra.mxu0 %v6799
          %6963 = vmatpush.bf16.msra.mxu0 %v6798
          %6964 = vmatmul.bf16.gmra.mxu0 %v6360
          %v6965 = vpop.f32.mrf.mxu0
          %v6966 = vadd.f32 %v6953, %v6965
          %v6967 = vpop.f32.mrf.mxu0
          %6968 = vdwg.mxu0
          %6969 = vmatpush.bf16.msra.mxu0 %v6813
          %6970 = vmatpush.bf16.msra.mxu0 %v6812
          %6971 = vmatpush.bf16.msra.mxu0 %v6811
          %6972 = vmatpush.bf16.msra.mxu0 %v6810
          %6973 = vmatpush.bf16.msra.mxu0 %v6809
          %6974 = vmatpush.bf16.msra.mxu0 %v6808
          %6975 = vmatpush.bf16.msra.mxu0 %v6807
          %6976 = vmatpush.bf16.msra.mxu0 %v6806
          %6977 = vmatmul.bf16.gmra.mxu0 %v6361
          %v6978 = vpop.f32.mrf.mxu0
          %v6979 = vadd.f32 %v6966, %v6978
          %v6980 = vpop.f32.mrf.mxu0
          %6981 = vdwg.mxu0
          %6982 = vst [vmem:[#allocation15] sm:$0xff] %v6979
        $region84: #{tpu_custom_call.1} parent=47 // pred_fallthru
          _
        // Predicated region
        $region85: #{tpu_custom_call.1} parent=47 // pred_check
          %p6983 = pneg %p190
        $region86: #{tpu_custom_call.1} parent=47 // pred_check_branch
          %6985 = sbr.rel (%p6983) target = $region88
        $region87: #{tpu_custom_call.1} parent=47 // pred_region
          %6987 = vsyncadd [#allocation5], 0
          %s6989 = sshll.u32 [#allocation15], 4
          %s6990 = int_to_ptr.vmem [resolvable:$true] %s6989
          %s6991 = sshll.u32 %s7, 4
          %s6992 = int_to_ptr.hbm [resolvable:$true] %s6991
          %6994 = dma.vmem_to_hbm [thread:$0]  %s6990, 128, %s6992, [#allocation5]
        $region88: #{tpu_custom_call.1} parent=47 // pred_fallthru
          _
        // Predicated region
        $region89: #{tpu_custom_call.1} parent=47 // pred_check
          %p6995 = pneg %p190
        $region90: #{tpu_custom_call.1} parent=47 // pred_check_branch
          %6997 = sbr.rel (%p6995) target = $region92
        $region91: #{tpu_custom_call.1} parent=47 // pred_region
          %6999 = dma.done [#allocation5], 128
        $region92: #{tpu_custom_call.1} parent=47 // pred_fallthru
          _
      $region48: #{tpu_custom_call.1} parent=5 // pred_fallthru
        _
      %p7000 = scmp.le.s32.totalorder 2, %s20
      // Predicated region
      $region93: #{tpu_custom_call.1} parent=5 // pred_check
        %p7001 = pneg %p7000
      $region94: #{tpu_custom_call.1} parent=5 // pred_check_branch
        %7003 = sbr.rel (%p7001) target = $region96
      $region95: #{tpu_custom_call.1} parent=5 // pred_region
        %s7004 = ssub.s32 %s20, 2
      $region96: #{tpu_custom_call.1} parent=5 // pred_fallthru
        _
    $region6: #{tpu_custom_call.1} parent=1 // loop_footer
      %s24 = sadd.s32 1, %s20
    $region7: #{tpu_custom_call.1} parent=1 // loop_footer_branch
      %19 = sbr.rel target = $region3
    $region8: #{tpu_custom_call.1} parent=1 // loop_exit
      _
    %7005 = vsyncpa [#allocation4], 1
    %s7006 = scalar_lea.sflag [#allocation4], 1
    %7007 = vsyncpa %s7006, 1
    %7008 = vsyncpa [#allocation7], 1
    %7009 = vsyncpa [#allocation10], 1
    %s7010 = scalar_lea.sflag [#allocation10], 1
    %7011 = vsyncpa %s7010, 1
    %7012 = vsyncpa [#allocation13], 1
    %7013 = vsyncpa [#allocation5], 1
    %s7014 = scalar_lea.sflag [#allocation5], 1
    %7015 = vsyncpa %s7014, 1

</llo_original>
